<compile_context>
chip_gen: v6e
topology: v6e:2x2x1
jax: 0.10.0
libtpu: 0.0.40
codegen_flags: <defaults>
</compile_context>

<pallas_src>
import math
import jax
import jax.numpy as jnp
from jax import lax
from jax.experimental import pallas as pl
from jax.experimental.pallas import tpu as pltpu  # noqa: F401  (TPU backend assumed)

# ----------------------- small GPT-2 config -----------------------
VOCAB = 128
N_POS = 64
N_EMBD = 32
N_LAYER = 2
N_HEAD = 4
HEAD_DIM = N_EMBD // N_HEAD
LN_EPS = 1e-5
INIT_RANGE = 0.02
NEG_FILL = -10000.0
GELU_C = 0.7978845608028654


# ----------------------- in-kernel helpers -----------------------
def _layernorm(x, w, b, eps=LN_EPS):
    mean = jnp.mean(x, axis=-1, keepdims=True)
    xc = x - mean
    var = jnp.mean(xc * xc, axis=-1, keepdims=True)
    return xc * lax.rsqrt(var + eps) * w + b


def _gelu(x):
    return 0.5 * x * (1.0 + jnp.tanh(GELU_C * (x + 0.044715 * x * x * x)))


def _conv1d(x, w, b):
    # GPT-2 Conv1D forward: y = x @ W + b with W[in, out]; rows = flattened B*S.
    # bf16 MXU operands, f32 accumulation.
    return jnp.dot(x.astype(jnp.bfloat16), w.astype(jnp.bfloat16),
                   preferred_element_type=jnp.float32) + b


# ----------------------- fused forward kernel -----------------------
def make_gpt2_kernel(B, S):
    BS = B * S
    D = N_EMBD
    H = N_HEAD
    hd = HEAD_DIM
    inv_sqrt_hd = 1.0 / math.sqrt(hd)

    def kernel(x_ref,
               ln1_w_ref, ln1_b_ref, attn_w_ref, attn_b_ref,
               proj_w_ref, proj_b_ref, ln2_w_ref, ln2_b_ref,
               fc_w_ref, fc_b_ref, fcp_w_ref, fcp_b_ref,
               lnf_w_ref, lnf_b_ref, wte_t_ref,
               logits_ref, k_ref, v_ref):
        x = x_ref[...]                                       # (B*S, D) f32

        # Causal mask built in-kernel: query row >= key col.
        row = lax.broadcasted_iota(jnp.int32, (S, S), 0)
        col = lax.broadcasted_iota(jnp.int32, (S, S), 1)
        causal = (row >= col)[None]                          # (1, S, S) -> bcast over B*H

        def split_heads(t):
            # (B*S, D) -> (B*H, S, hd): heads moved from lane slices to a batch dim.
            t = t.reshape(B, S, D)
            heads = [t[:, :, h * hd:(h + 1) * hd] for h in range(H)]
            return jnp.stack(heads, axis=1).reshape(B * H, S, hd)

        for l in range(N_LAYER):
            # --- attention -------------------------------------------------
            h1 = _layernorm(x, ln1_w_ref[l], ln1_b_ref[l])
            qkv = _conv1d(h1, attn_w_ref[l], attn_b_ref[l])  # (B*S, 3D)
            q = qkv[:, 0 * D:1 * D]
            k = qkv[:, 1 * D:2 * D]
            v = qkv[:, 2 * D:3 * D]

            # Lane-dense present outputs (all heads contiguous, one store each);
            # wrapper reshapes to (B, n_head, S, head_dim).
            k_ref[l] = k
            v_ref[l] = v

            qh = split_heads(q)                              # (B*H, S, hd)
            kh = split_heads(k)
            vh = split_heads(v)

            scores = jnp.einsum('bqd,bkd->bqk',
                                qh.astype(jnp.bfloat16), kh.astype(jnp.bfloat16),
                                preferred_element_type=jnp.float32) * inv_sqrt_hd
            scores = jnp.where(causal, scores, NEG_FILL)
            scores = scores - jnp.max(scores, axis=-1, keepdims=True)
            p = jnp.exp(scores)
            p = p * pl.reciprocal(jnp.sum(p, axis=-1, keepdims=True), approx=True)
            ctx = jnp.einsum('bqk,bkd->bqd',
                             p.astype(jnp.bfloat16), vh.astype(jnp.bfloat16),
                             preferred_element_type=jnp.float32)   # (B*H, S, hd)

            # merge_heads -> (B*S, D)
            ctx = ctx.reshape(B, H, S, hd)
            a = jnp.concatenate([ctx[:, h] for h in range(H)], axis=-1).reshape(BS, D)

            a = _conv1d(a, proj_w_ref[l], proj_b_ref[l])
            x = x + a

            # --- MLP --------------------------------------------------------
            h2 = _layernorm(x, ln2_w_ref[l], ln2_b_ref[l])
            ff = _gelu(_conv1d(h2, fc_w_ref[l], fc_b_ref[l]))
            x = x + _conv1d(ff, fcp_w_ref[l], fcp_b_ref[l])

        # --- final LN + LM head (wte pre-transposed to (D, V); V=128 lane-dense)
        hf = _layernorm(x, lnf_w_ref[...], lnf_b_ref[...])
        logits_ref[...] = jnp.dot(hf.astype(jnp.bfloat16),
                                  wte_t_ref[...].astype(jnp.bfloat16),
                                  preferred_element_type=jnp.float32)

    return kernel


# ----------------------- model forward (glue) -----------------------
def gpt2_simple_lm(input_ids, params):
    B, S = input_ids.shape
    D = N_EMBD
    BS = B * S

    # Embedding gathers stay in plain JAX (glue); batch*seq folded into rows.
    position_ids = jnp.arange(S, dtype=jnp.int32)
    x = (params["wte"][input_ids] + params["wpe"][position_ids][None, :, :]).reshape(BS, D)

    kernel = make_gpt2_kernel(B, S)
    out_shapes = (
        jax.ShapeDtypeStruct((BS, VOCAB), jnp.float32),          # logits (lane-dense, V=128)
        jax.ShapeDtypeStruct((N_LAYER, BS, D), jnp.float32),     # keys   (lane-dense)
        jax.ShapeDtypeStruct((N_LAYER, BS, D), jnp.float32),     # values (lane-dense)
    )
    logits, k_all, v_all = pl.pallas_call(
        kernel,
        out_shape=out_shapes,
        # No grid: single invocation, whole (tiny) model resident in VMEM.
    )(x,
      params["ln1_w"], params["ln1_b"], params["attn_w"], params["attn_b"],
      params["proj_w"], params["proj_b"], params["ln2_w"], params["ln2_b"],
      params["fc_w"], params["fc_b"], params["fc_proj_w"], params["fc_proj_b"],
      params["ln_f_w"], params["ln_f_b"], params["wte"].T)

    logits = logits.reshape(B, S, VOCAB)
    presents = []
    for l in range(N_LAYER):
        k = k_all[l].reshape(B, S, N_HEAD, HEAD_DIM).transpose(0, 2, 1, 3)
        v = v_all[l].reshape(B, S, N_HEAD, HEAD_DIM).transpose(0, 2, 1, 3)
        # present = stack((key.transpose(-2,-1), value)) -> (2, B, n_head, S, head_dim)
        presents.append(jnp.stack([k, v], axis=0))
    return logits, presents


# ----------------------- parameter init (deterministic) -----------------------
def init_params(key):
    n_keys = 2 + N_LAYER * 4
    keys = iter(jax.random.split(key, n_keys))

    def normal(shape):
        return (INIT_RANGE * jax.random.normal(next(keys), shape)).astype(jnp.float32)

    D, L = N_EMBD, N_LAYER
    wte = normal((VOCAB, D))
    wpe = normal((N_POS, D))
    attn_w, proj_w, fc_w, fc_proj_w = [], [], [], []
    for _ in range(L):
        attn_w.append(normal((D, 3 * D)))
        proj_w.append(normal((D, D)))
        fc_w.append(normal((D, 4 * D)))
        fc_proj_w.append(normal((4 * D, D)))

    return {
        "wte": wte,
        "wpe": wpe,
        "ln_f_w": jnp.ones((1, D), jnp.float32),
        "ln_f_b": jnp.zeros((1, D), jnp.float32),
        # Per-layer params stacked along a leading layer axis (indexed statically
        # inside the fused kernel).
        "ln1_w": jnp.ones((L, 1, D), jnp.float32),
        "ln1_b": jnp.zeros((L, 1, D), jnp.float32),
        "attn_w": jnp.stack(attn_w),
        "attn_b": jnp.zeros((L, 1, 3 * D), jnp.float32),
        "proj_w": jnp.stack(proj_w),
        "proj_b": jnp.zeros((L, 1, D), jnp.float32),
        "ln2_w": jnp.ones((L, 1, D), jnp.float32),
        "ln2_b": jnp.zeros((L, 1, D), jnp.float32),
        "fc_w": jnp.stack(fc_w),
        "fc_b": jnp.zeros((L, 1, 4 * D), jnp.float32),
        "fc_proj_w": jnp.stack(fc_proj_w),
        "fc_proj_b": jnp.zeros((L, 1, D), jnp.float32),
    }


if __name__ == "__main__":
    key = jax.random.PRNGKey(0)
    pkey, ikey = jax.random.split(key)
    params = init_params(pkey)

    B, S = 2, 8
    input_ids = jax.random.randint(ikey, (B, S), 0, VOCAB, dtype=jnp.int32)

    logits, presents = gpt2_simple_lm(input_ids, params)
    jax.block_until_ready(logits)
    for p in presents:
        jax.block_until_ready(p)

    assert logits.shape == (B, S, VOCAB)
    assert all(p.shape == (2, B, N_HEAD, S, HEAD_DIM) for p in presents)
    print("KERNEL_OK")
</pallas_src>

<mosaic_0001>
module attributes {stable_mosaic.version = 11 : i64} {
  func.func @kernel(%arg0: memref<16x32xf32, #tpu.memory_space<vmem>>, %arg1: memref<2x1x32xf32, #tpu.memory_space<vmem>>, %arg2: memref<2x1x32xf32, #tpu.memory_space<vmem>>, %arg3: memref<2x32x96xf32, #tpu.memory_space<vmem>>, %arg4: memref<2x1x96xf32, #tpu.memory_space<vmem>>, %arg5: memref<2x32x32xf32, #tpu.memory_space<vmem>>, %arg6: memref<2x1x32xf32, #tpu.memory_space<vmem>>, %arg7: memref<2x1x32xf32, #tpu.memory_space<vmem>>, %arg8: memref<2x1x32xf32, #tpu.memory_space<vmem>>, %arg9: memref<2x32x128xf32, #tpu.memory_space<vmem>>, %arg10: memref<2x1x128xf32, #tpu.memory_space<vmem>>, %arg11: memref<2x128x32xf32, #tpu.memory_space<vmem>>, %arg12: memref<2x1x32xf32, #tpu.memory_space<vmem>>, %arg13: memref<1x32xf32, #tpu.memory_space<vmem>>, %arg14: memref<1x32xf32, #tpu.memory_space<vmem>>, %arg15: memref<32x128xf32, #tpu.memory_space<vmem>>, %arg16: memref<16x128xf32, #tpu.memory_space<vmem>>, %arg17: memref<2x16x32xf32, #tpu.memory_space<vmem>>, %arg18: memref<2x16x32xf32, #tpu.memory_space<vmem>>) attributes {dimension_semantics = [], scalar_prefetch = 0 : i64, scratch_operands = 0 : i64, tpu.core_type = #tpu.core_type<tc>} {
    %c0 = arith.constant 0 : index
    %c0_0 = arith.constant 0 : index
    %0 = vector.load %arg0[%c0, %c0_0] : memref<16x32xf32, #tpu.memory_space<vmem>>, vector<16x32xf32>
    %1 = tpu.iota {dimensions = array<i32: 0>} : vector<8x8xi32>
    %2 = tpu.iota {dimensions = array<i32: 1>} : vector<8x8xi32>
    %3 = arith.cmpi sge, %1, %2 : vector<8x8xi32>
    %4 = vector.shape_cast %3 : vector<8x8xi1> to vector<1x8x8xi1>
    %c0_1 = arith.constant 0 : index
    %c0_2 = arith.constant 0 : index
    %c0_3 = arith.constant 0 : index
    %5 = vector.load %arg1[%c0_1, %c0_2, %c0_3] : memref<2x1x32xf32, #tpu.memory_space<vmem>>, vector<1x1x32xf32>
    %6 = vector.shape_cast %5 : vector<1x1x32xf32> to vector<1x32xf32>
    %c0_4 = arith.constant 0 : index
    %c0_5 = arith.constant 0 : index
    %c0_6 = arith.constant 0 : index
    %7 = vector.load %arg2[%c0_4, %c0_5, %c0_6] : memref<2x1x32xf32, #tpu.memory_space<vmem>>, vector<1x1x32xf32>
    %8 = vector.shape_cast %7 : vector<1x1x32xf32> to vector<1x32xf32>
    %cst = arith.constant dense<0.000000e+00> : vector<16xf32>
    %9 = vector.multi_reduction <add>, %0, %cst [1] : vector<16x32xf32> to vector<16xf32>
    %10 = vector.shape_cast %9 : vector<16xf32> to vector<16x1xf32>
    %cst_7 = arith.constant 3.200000e+01 : f32
    %11 = vector.broadcast %cst_7 : f32 to vector<16x1xf32>
    %12 = arith.divf %10, %11 : vector<16x1xf32>
    %13 = vector.broadcast %12 : vector<16x1xf32> to vector<16x32xf32>
    %14 = arith.subf %0, %13 : vector<16x32xf32>
    %15 = arith.mulf %14, %14 : vector<16x32xf32>
    %cst_8 = arith.constant dense<0.000000e+00> : vector<16xf32>
    %16 = vector.multi_reduction <add>, %15, %cst_8 [1] : vector<16x32xf32> to vector<16xf32>
    %17 = vector.shape_cast %16 : vector<16xf32> to vector<16x1xf32>
    %cst_9 = arith.constant 3.200000e+01 : f32
    %18 = vector.broadcast %cst_9 : f32 to vector<16x1xf32>
    %19 = arith.divf %17, %18 : vector<16x1xf32>
    %cst_10 = arith.constant 9.99999974E-6 : f32
    %20 = vector.broadcast %cst_10 : f32 to vector<16x1xf32>
    %21 = arith.addf %19, %20 : vector<16x1xf32>
    %22 = math.rsqrt %21 : vector<16x1xf32>
    %23 = vector.broadcast %22 : vector<16x1xf32> to vector<16x32xf32>
    %24 = arith.mulf %14, %23 : vector<16x32xf32>
    %25 = vector.broadcast %6 : vector<1x32xf32> to vector<16x32xf32>
    %26 = arith.mulf %24, %25 : vector<16x32xf32>
    %27 = vector.broadcast %8 : vector<1x32xf32> to vector<16x32xf32>
    %28 = arith.addf %26, %27 : vector<16x32xf32>
    %c0_11 = arith.constant 0 : index
    %c0_12 = arith.constant 0 : index
    %c0_13 = arith.constant 0 : index
    %29 = vector.load %arg3[%c0_11, %c0_12, %c0_13] : memref<2x32x96xf32, #tpu.memory_space<vmem>>, vector<1x32x96xf32>
    %30 = vector.shape_cast %29 : vector<1x32x96xf32> to vector<32x96xf32>
    %c0_14 = arith.constant 0 : index
    %c0_15 = arith.constant 0 : index
    %c0_16 = arith.constant 0 : index
    %31 = vector.load %arg4[%c0_14, %c0_15, %c0_16] : memref<2x1x96xf32, #tpu.memory_space<vmem>>, vector<1x1x96xf32>
    %32 = vector.shape_cast %31 : vector<1x1x96xf32> to vector<1x96xf32>
    %33 = arith.truncf %28 : vector<16x32xf32> to vector<16x32xbf16>
    %34 = arith.truncf %30 : vector<32x96xf32> to vector<32x96xbf16>
    %cst_17 = arith.constant dense<0.000000e+00> : vector<16x96xf32>
    %35 = tpu.matmul %33, %34, %cst_17 {dimension_numbers = #tpu.dot_dimension_numbers<[1], [0], [0], [1], [0, 0, 1, 1], [], []>} : vector<16x32xbf16>, vector<32x96xbf16>, vector<16x96xf32> -> vector<16x96xf32>
    %36 = vector.broadcast %32 : vector<1x96xf32> to vector<16x96xf32>
    %37 = arith.addf %35, %36 : vector<16x96xf32>
    %38 = vector.extract_strided_slice %37 {offsets = [0, 0], sizes = [16, 32], strides = [1, 1]} : vector<16x96xf32> to vector<16x32xf32>
    %39 = vector.extract_strided_slice %37 {offsets = [0, 32], sizes = [16, 32], strides = [1, 1]} : vector<16x96xf32> to vector<16x32xf32>
    %40 = vector.extract_strided_slice %37 {offsets = [0, 64], sizes = [16, 32], strides = [1, 1]} : vector<16x96xf32> to vector<16x32xf32>
    %c0_18 = arith.constant 0 : index
    %c0_19 = arith.constant 0 : index
    %c0_20 = arith.constant 0 : index
    %41 = vector.load %arg17[%c0_18, %c0_19, %c0_20] : memref<2x16x32xf32, #tpu.memory_space<vmem>>, vector<1x16x32xf32>
    %42 = vector.shape_cast %41 : vector<1x16x32xf32> to vector<16x32xf32>
    %43 = vector.shape_cast %39 : vector<16x32xf32> to vector<1x16x32xf32>
    tpu.vector_store %arg17[%c0_18, %c0_19, %c0_20], %43 {strides = array<i32>} : memref<2x16x32xf32, #tpu.memory_space<vmem>>, vector<1x16x32xf32>,
    %c0_21 = arith.constant 0 : index
    %c0_22 = arith.constant 0 : index
    %c0_23 = arith.constant 0 : index
    %44 = vector.load %arg18[%c0_21, %c0_22, %c0_23] : memref<2x16x32xf32, #tpu.memory_space<vmem>>, vector<1x16x32xf32>
    %45 = vector.shape_cast %44 : vector<1x16x32xf32> to vector<16x32xf32>
    %46 = vector.shape_cast %40 : vector<16x32xf32> to vector<1x16x32xf32>
    tpu.vector_store %arg18[%c0_21, %c0_22, %c0_23], %46 {strides = array<i32>} : memref<2x16x32xf32, #tpu.memory_space<vmem>>, vector<1x16x32xf32>,
    %47 = vector.shape_cast %38 : vector<16x32xf32> to vector<2x8x32xf32>
    %48 = vector.extract_strided_slice %47 {offsets = [0, 0, 0], sizes = [2, 8, 8], strides = [1, 1, 1]} : vector<2x8x32xf32> to vector<2x8x8xf32>
    %49 = vector.extract_strided_slice %47 {offsets = [0, 0, 8], sizes = [2, 8, 8], strides = [1, 1, 1]} : vector<2x8x32xf32> to vector<2x8x8xf32>
    %50 = vector.extract_strided_slice %47 {offsets = [0, 0, 16], sizes = [2, 8, 8], strides = [1, 1, 1]} : vector<2x8x32xf32> to vector<2x8x8xf32>
    %51 = vector.extract_strided_slice %47 {offsets = [0, 0, 24], sizes = [2, 8, 8], strides = [1, 1, 1]} : vector<2x8x32xf32> to vector<2x8x8xf32>
    %52 = vector.shape_cast %48 : vector<2x8x8xf32> to vector<2x1x8x8xf32>
    %53 = vector.shape_cast %49 : vector<2x8x8xf32> to vector<2x1x8x8xf32>
    %54 = vector.shape_cast %50 : vector<2x8x8xf32> to vector<2x1x8x8xf32>
    %55 = vector.shape_cast %51 : vector<2x8x8xf32> to vector<2x1x8x8xf32>
    %56 = tpu.concatenate %52, %53, %54, %55 in 1 : vector<2x1x8x8xf32>, vector<2x1x8x8xf32>, vector<2x1x8x8xf32>, vector<2x1x8x8xf32> -> vector<2x4x8x8xf32>
    %57 = vector.shape_cast %56 : vector<2x4x8x8xf32> to vector<8x8x8xf32>
    %58 = vector.shape_cast %39 : vector<16x32xf32> to vector<2x8x32xf32>
    %59 = vector.extract_strided_slice %58 {offsets = [0, 0, 0], sizes = [2, 8, 8], strides = [1, 1, 1]} : vector<2x8x32xf32> to vector<2x8x8xf32>
    %60 = vector.extract_strided_slice %58 {offsets = [0, 0, 8], sizes = [2, 8, 8], strides = [1, 1, 1]} : vector<2x8x32xf32> to vector<2x8x8xf32>
    %61 = vector.extract_strided_slice %58 {offsets = [0, 0, 16], sizes = [2, 8, 8], strides = [1, 1, 1]} : vector<2x8x32xf32> to vector<2x8x8xf32>
    %62 = vector.extract_strided_slice %58 {offsets = [0, 0, 24], sizes = [2, 8, 8], strides = [1, 1, 1]} : vector<2x8x32xf32> to vector<2x8x8xf32>
    %63 = vector.shape_cast %59 : vector<2x8x8xf32> to vector<2x1x8x8xf32>
    %64 = vector.shape_cast %60 : vector<2x8x8xf32> to vector<2x1x8x8xf32>
    %65 = vector.shape_cast %61 : vector<2x8x8xf32> to vector<2x1x8x8xf32>
    %66 = vector.shape_cast %62 : vector<2x8x8xf32> to vector<2x1x8x8xf32>
    %67 = tpu.concatenate %63, %64, %65, %66 in 1 : vector<2x1x8x8xf32>, vector<2x1x8x8xf32>, vector<2x1x8x8xf32>, vector<2x1x8x8xf32> -> vector<2x4x8x8xf32>
    %68 = vector.shape_cast %67 : vector<2x4x8x8xf32> to vector<8x8x8xf32>
    %69 = vector.shape_cast %40 : vector<16x32xf32> to vector<2x8x32xf32>
    %70 = vector.extract_strided_slice %69 {offsets = [0, 0, 0], sizes = [2, 8, 8], strides = [1, 1, 1]} : vector<2x8x32xf32> to vector<2x8x8xf32>
    %71 = vector.extract_strided_slice %69 {offsets = [0, 0, 8], sizes = [2, 8, 8], strides = [1, 1, 1]} : vector<2x8x32xf32> to vector<2x8x8xf32>
    %72 = vector.extract_strided_slice %69 {offsets = [0, 0, 16], sizes = [2, 8, 8], strides = [1, 1, 1]} : vector<2x8x32xf32> to vector<2x8x8xf32>
    %73 = vector.extract_strided_slice %69 {offsets = [0, 0, 24], sizes = [2, 8, 8], strides = [1, 1, 1]} : vector<2x8x32xf32> to vector<2x8x8xf32>
    %74 = vector.shape_cast %70 : vector<2x8x8xf32> to vector<2x1x8x8xf32>
    %75 = vector.shape_cast %71 : vector<2x8x8xf32> to vector<2x1x8x8xf32>
    %76 = vector.shape_cast %72 : vector<2x8x8xf32> to vector<2x1x8x8xf32>
    %77 = vector.shape_cast %73 : vector<2x8x8xf32> to vector<2x1x8x8xf32>
    %78 = tpu.concatenate %74, %75, %76, %77 in 1 : vector<2x1x8x8xf32>, vector<2x1x8x8xf32>, vector<2x1x8x8xf32>, vector<2x1x8x8xf32> -> vector<2x4x8x8xf32>
    %79 = vector.shape_cast %78 : vector<2x4x8x8xf32> to vector<8x8x8xf32>
    %80 = arith.truncf %57 : vector<8x8x8xf32> to vector<8x8x8xbf16>
    %81 = arith.truncf %68 : vector<8x8x8xf32> to vector<8x8x8xbf16>
    "tpu.trace_start"() <{level = 10 : i32, message = "bqd,bkd->bqk"}> : () -> ()
    %cst_24 = arith.constant dense<0.000000e+00> : vector<8x8x8xf32>
    %82 = tpu.matmul %80, %81, %cst_24 {dimension_numbers = #tpu.dot_dimension_numbers<[2], [2], [1], [1], [0, 0, 0, 1, 1, 1], [0], [0]>} : vector<8x8x8xbf16>, vector<8x8x8xbf16>, vector<8x8x8xf32> -> vector<8x8x8xf32>
    "tpu.trace_stop"() : () -> ()
    %cst_25 = arith.constant 0.353553385 : f32
    %83 = vector.broadcast %cst_25 : f32 to vector<8x8x8xf32>
    %84 = arith.mulf %82, %83 : vector<8x8x8xf32>
    %cst_26 = arith.constant -1.000000e+04 : f32
    %85 = vector.shape_cast %4 : vector<1x8x8xi1> to vector<1x8x8xi1>
    %86 = vector.broadcast %85 : vector<1x8x8xi1> to vector<8x8x8xi1>
    %87 = vector.broadcast %cst_26 : f32 to vector<8x8x8xf32>
    %88 = arith.select %86, %84, %87 : vector<8x8x8xi1>, vector<8x8x8xf32>
    %cst_27 = arith.constant dense<0xFF800000> : vector<8x8xf32>
    %89 = vector.multi_reduction <maximumf>, %88, %cst_27 [2] : vector<8x8x8xf32> to vector<8x8xf32>
    %90 = vector.shape_cast %89 : vector<8x8xf32> to vector<8x8x1xf32>
    %91 = vector.broadcast %90 : vector<8x8x1xf32> to vector<8x8x8xf32>
    %92 = arith.subf %88, %91 : vector<8x8x8xf32>
    %93 = math.exp %92 : vector<8x8x8xf32>
    %cst_28 = arith.constant dense<0.000000e+00> : vector<8x8xf32>
    %94 = vector.multi_reduction <add>, %93, %cst_28 [2] : vector<8x8x8xf32> to vector<8x8xf32>
    %95 = vector.shape_cast %94 : vector<8x8xf32> to vector<8x8x1xf32>
    %96 = tpu.reciprocal %95 {approx = true} : vector<8x8x1xf32> -> vector<8x8x1xf32>
    %97 = vector.broadcast %96 : vector<8x8x1xf32> to vector<8x8x8xf32>
    %98 = arith.mulf %93, %97 : vector<8x8x8xf32>
    %99 = arith.truncf %98 : vector<8x8x8xf32> to vector<8x8x8xbf16>
    %100 = arith.truncf %79 : vector<8x8x8xf32> to vector<8x8x8xbf16>
    "tpu.trace_start"() <{level = 10 : i32, message = "bqk,bkd->bqd"}> : () -> ()
    %cst_29 = arith.constant dense<0.000000e+00> : vector<8x8x8xf32>
    %101 = tpu.matmul %99, %100, %cst_29 {dimension_numbers = #tpu.dot_dimension_numbers<[2], [1], [1], [2], [0, 0, 0, 1, 1, 2], [0], [0]>} : vector<8x8x8xbf16>, vector<8x8x8xbf16>, vector<8x8x8xf32> -> vector<8x8x8xf32>
    "tpu.trace_stop"() : () -> ()
    %102 = vector.shape_cast %101 : vector<8x8x8xf32> to vector<2x4x8x8xf32>
    %103 = vector.extract_strided_slice %102 {offsets = [0, 0, 0, 0], sizes = [2, 1, 8, 8], strides = [1, 1, 1, 1]} : vector<2x4x8x8xf32> to vector<2x1x8x8xf32>
    %104 = vector.shape_cast %103 : vector<2x1x8x8xf32> to vector<2x8x8xf32>
    %105 = vector.extract_strided_slice %102 {offsets = [0, 1, 0, 0], sizes = [2, 1, 8, 8], strides = [1, 1, 1, 1]} : vector<2x4x8x8xf32> to vector<2x1x8x8xf32>
    %106 = vector.shape_cast %105 : vector<2x1x8x8xf32> to vector<2x8x8xf32>
    %107 = vector.extract_strided_slice %102 {offsets = [0, 2, 0, 0], sizes = [2, 1, 8, 8], strides = [1, 1, 1, 1]} : vector<2x4x8x8xf32> to vector<2x1x8x8xf32>
    %108 = vector.shape_cast %107 : vector<2x1x8x8xf32> to vector<2x8x8xf32>
    %109 = vector.extract_strided_slice %102 {offsets = [0, 3, 0, 0], sizes = [2, 1, 8, 8], strides = [1, 1, 1, 1]} : vector<2x4x8x8xf32> to vector<2x1x8x8xf32>
    %110 = vector.shape_cast %109 : vector<2x1x8x8xf32> to vector<2x8x8xf32>
    %111 = tpu.concatenate %104, %106, %108, %110 in 2 : vector<2x8x8xf32>, vector<2x8x8xf32>, vector<2x8x8xf32>, vector<2x8x8xf32> -> vector<2x8x32xf32>
    %112 = vector.shape_cast %111 : vector<2x8x32xf32> to vector<16x32xf32>
    %c0_30 = arith.constant 0 : index
    %c0_31 = arith.constant 0 : index
    %c0_32 = arith.constant 0 : index
    %113 = vector.load %arg5[%c0_30, %c0_31, %c0_32] : memref<2x32x32xf32, #tpu.memory_space<vmem>>, vector<1x32x32xf32>
    %114 = vector.shape_cast %113 : vector<1x32x32xf32> to vector<32x32xf32>
    %c0_33 = arith.constant 0 : index
    %c0_34 = arith.constant 0 : index
    %c0_35 = arith.constant 0 : index
    %115 = vector.load %arg6[%c0_33, %c0_34, %c0_35] : memref<2x1x32xf32, #tpu.memory_space<vmem>>, vector<1x1x32xf32>
    %116 = vector.shape_cast %115 : vector<1x1x32xf32> to vector<1x32xf32>
    %117 = arith.truncf %112 : vector<16x32xf32> to vector<16x32xbf16>
    %118 = arith.truncf %114 : vector<32x32xf32> to vector<32x32xbf16>
    %cst_36 = arith.constant dense<0.000000e+00> : vector<16x32xf32>
    %119 = tpu.matmul %117, %118, %cst_36 {dimension_numbers = #tpu.dot_dimension_numbers<[1], [0], [0], [1], [0, 0, 1, 1], [], []>} : vector<16x32xbf16>, vector<32x32xbf16>, vector<16x32xf32> -> vector<16x32xf32>
    %120 = vector.broadcast %116 : vector<1x32xf32> to vector<16x32xf32>
    %121 = arith.addf %119, %120 : vector<16x32xf32>
    %122 = arith.addf %0, %121 : vector<16x32xf32>
    %c0_37 = arith.constant 0 : index
    %c0_38 = arith.constant 0 : index
    %c0_39 = arith.constant 0 : index
    %123 = vector.load %arg7[%c0_37, %c0_38, %c0_39] : memref<2x1x32xf32, #tpu.memory_space<vmem>>, vector<1x1x32xf32>
    %124 = vector.shape_cast %123 : vector<1x1x32xf32> to vector<1x32xf32>
    %c0_40 = arith.constant 0 : index
    %c0_41 = arith.constant 0 : index
    %c0_42 = arith.constant 0 : index
    %125 = vector.load %arg8[%c0_40, %c0_41, %c0_42] : memref<2x1x32xf32, #tpu.memory_space<vmem>>, vector<1x1x32xf32>
    %126 = vector.shape_cast %125 : vector<1x1x32xf32> to vector<1x32xf32>
    %cst_43 = arith.constant dense<0.000000e+00> : vector<16xf32>
    %127 = vector.multi_reduction <add>, %122, %cst_43 [1] : vector<16x32xf32> to vector<16xf32>
    %128 = vector.shape_cast %127 : vector<16xf32> to vector<16x1xf32>
    %cst_44 = arith.constant 3.200000e+01 : f32
    %129 = vector.broadcast %cst_44 : f32 to vector<16x1xf32>
    %130 = arith.divf %128, %129 : vector<16x1xf32>
    %131 = vector.broadcast %130 : vector<16x1xf32> to vector<16x32xf32>
    %132 = arith.subf %122, %131 : vector<16x32xf32>
    %133 = arith.mulf %132, %132 : vector<16x32xf32>
    %cst_45 = arith.constant dense<0.000000e+00> : vector<16xf32>
    %134 = vector.multi_reduction <add>, %133, %cst_45 [1] : vector<16x32xf32> to vector<16xf32>
    %135 = vector.shape_cast %134 : vector<16xf32> to vector<16x1xf32>
    %cst_46 = arith.constant 3.200000e+01 : f32
    %136 = vector.broadcast %cst_46 : f32 to vector<16x1xf32>
    %137 = arith.divf %135, %136 : vector<16x1xf32>
    %cst_47 = arith.constant 9.99999974E-6 : f32
    %138 = vector.broadcast %cst_47 : f32 to vector<16x1xf32>
    %139 = arith.addf %137, %138 : vector<16x1xf32>
    %140 = math.rsqrt %139 : vector<16x1xf32>
    %141 = vector.broadcast %140 : vector<16x1xf32> to vector<16x32xf32>
    %142 = arith.mulf %132, %141 : vector<16x32xf32>
    %143 = vector.broadcast %124 : vector<1x32xf32> to vector<16x32xf32>
    %144 = arith.mulf %142, %143 : vector<16x32xf32>
    %145 = vector.broadcast %126 : vector<1x32xf32> to vector<16x32xf32>
    %146 = arith.addf %144, %145 : vector<16x32xf32>
    %c0_48 = arith.constant 0 : index
    %c0_49 = arith.constant 0 : index
    %c0_50 = arith.constant 0 : index
    %147 = vector.load %arg9[%c0_48, %c0_49, %c0_50] : memref<2x32x128xf32, #tpu.memory_space<vmem>>, vector<1x32x128xf32>
    %148 = vector.shape_cast %147 : vector<1x32x128xf32> to vector<32x128xf32>
    %c0_51 = arith.constant 0 : index
    %c0_52 = arith.constant 0 : index
    %c0_53 = arith.constant 0 : index
    %149 = vector.load %arg10[%c0_51, %c0_52, %c0_53] : memref<2x1x128xf32, #tpu.memory_space<vmem>>, vector<1x1x128xf32>
    %150 = vector.shape_cast %149 : vector<1x1x128xf32> to vector<1x128xf32>
    %151 = arith.truncf %146 : vector<16x32xf32> to vector<16x32xbf16>
    %152 = arith.truncf %148 : vector<32x128xf32> to vector<32x128xbf16>
    %cst_54 = arith.constant dense<0.000000e+00> : vector<16x128xf32>
    %153 = tpu.matmul %151, %152, %cst_54 {dimension_numbers = #tpu.dot_dimension_numbers<[1], [0], [0], [1], [0, 0, 1, 1], [], []>} : vector<16x32xbf16>, vector<32x128xbf16>, vector<16x128xf32> -> vector<16x128xf32>
    %154 = vector.broadcast %150 : vector<1x128xf32> to vector<16x128xf32>
    %155 = arith.addf %153, %154 : vector<16x128xf32>
    %cst_55 = arith.constant 5.000000e-01 : f32
    %156 = vector.broadcast %cst_55 : f32 to vector<16x128xf32>
    %157 = arith.mulf %156, %155 : vector<16x128xf32>
    %cst_56 = arith.constant 4.471500e-02 : f32
    %158 = vector.broadcast %cst_56 : f32 to vector<16x128xf32>
    %159 = arith.mulf %158, %155 : vector<16x128xf32>
    %160 = arith.mulf %159, %155 : vector<16x128xf32>
    %161 = arith.mulf %160, %155 : vector<16x128xf32>
    %162 = arith.addf %155, %161 : vector<16x128xf32>
    %cst_57 = arith.constant 0.797884583 : f32
    %163 = vector.broadcast %cst_57 : f32 to vector<16x128xf32>
    %164 = arith.mulf %163, %162 : vector<16x128xf32>
    %165 = math.tanh %164 : vector<16x128xf32>
    %cst_58 = arith.constant 1.000000e+00 : f32
    %166 = vector.broadcast %cst_58 : f32 to vector<16x128xf32>
    %167 = arith.addf %166, %165 : vector<16x128xf32>
    %168 = arith.mulf %157, %167 : vector<16x128xf32>
    %c0_59 = arith.constant 0 : index
    %c0_60 = arith.constant 0 : index
    %c0_61 = arith.constant 0 : index
    %169 = vector.load %arg11[%c0_59, %c0_60, %c0_61] : memref<2x128x32xf32, #tpu.memory_space<vmem>>, vector<1x128x32xf32>
    %170 = vector.shape_cast %169 : vector<1x128x32xf32> to vector<128x32xf32>
    %c0_62 = arith.constant 0 : index
    %c0_63 = arith.constant 0 : index
    %c0_64 = arith.constant 0 : index
    %171 = vector.load %arg12[%c0_62, %c0_63, %c0_64] : memref<2x1x32xf32, #tpu.memory_space<vmem>>, vector<1x1x32xf32>
    %172 = vector.shape_cast %171 : vector<1x1x32xf32> to vector<1x32xf32>
    %173 = arith.truncf %168 : vector<16x128xf32> to vector<16x128xbf16>
    %174 = arith.truncf %170 : vector<128x32xf32> to vector<128x32xbf16>
    %cst_65 = arith.constant dense<0.000000e+00> : vector<16x32xf32>
    %175 = tpu.matmul %173, %174, %cst_65 {dimension_numbers = #tpu.dot_dimension_numbers<[1], [0], [0], [1], [0, 0, 1, 1], [], []>} : vector<16x128xbf16>, vector<128x32xbf16>, vector<16x32xf32> -> vector<16x32xf32>
    %176 = vector.broadcast %172 : vector<1x32xf32> to vector<16x32xf32>
    %177 = arith.addf %175, %176 : vector<16x32xf32>
    %178 = arith.addf %122, %177 : vector<16x32xf32>
    %c1 = arith.constant 1 : index
    %c0_66 = arith.constant 0 : index
    %c0_67 = arith.constant 0 : index
    %179 = vector.load %arg1[%c1, %c0_66, %c0_67] : memref<2x1x32xf32, #tpu.memory_space<vmem>>, vector<1x1x32xf32>
    %180 = vector.shape_cast %179 : vector<1x1x32xf32> to vector<1x32xf32>
    %c1_68 = arith.constant 1 : index
    %c0_69 = arith.constant 0 : index
    %c0_70 = arith.constant 0 : index
    %181 = vector.load %arg2[%c1_68, %c0_69, %c0_70] : memref<2x1x32xf32, #tpu.memory_space<vmem>>, vector<1x1x32xf32>
    %182 = vector.shape_cast %181 : vector<1x1x32xf32> to vector<1x32xf32>
    %cst_71 = arith.constant dense<0.000000e+00> : vector<16xf32>
    %183 = vector.multi_reduction <add>, %178, %cst_71 [1] : vector<16x32xf32> to vector<16xf32>
    %184 = vector.shape_cast %183 : vector<16xf32> to vector<16x1xf32>
    %cst_72 = arith.constant 3.200000e+01 : f32
    %185 = vector.broadcast %cst_72 : f32 to vector<16x1xf32>
    %186 = arith.divf %184, %185 : vector<16x1xf32>
    %187 = vector.broadcast %186 : vector<16x1xf32> to vector<16x32xf32>
    %188 = arith.subf %178, %187 : vector<16x32xf32>
    %189 = arith.mulf %188, %188 : vector<16x32xf32>
    %cst_73 = arith.constant dense<0.000000e+00> : vector<16xf32>
    %190 = vector.multi_reduction <add>, %189, %cst_73 [1] : vector<16x32xf32> to vector<16xf32>
    %191 = vector.shape_cast %190 : vector<16xf32> to vector<16x1xf32>
    %cst_74 = arith.constant 3.200000e+01 : f32
    %192 = vector.broadcast %cst_74 : f32 to vector<16x1xf32>
    %193 = arith.divf %191, %192 : vector<16x1xf32>
    %cst_75 = arith.constant 9.99999974E-6 : f32
    %194 = vector.broadcast %cst_75 : f32 to vector<16x1xf32>
    %195 = arith.addf %193, %194 : vector<16x1xf32>
    %196 = math.rsqrt %195 : vector<16x1xf32>
    %197 = vector.broadcast %196 : vector<16x1xf32> to vector<16x32xf32>
    %198 = arith.mulf %188, %197 : vector<16x32xf32>
    %199 = vector.broadcast %180 : vector<1x32xf32> to vector<16x32xf32>
    %200 = arith.mulf %198, %199 : vector<16x32xf32>
    %201 = vector.broadcast %182 : vector<1x32xf32> to vector<16x32xf32>
    %202 = arith.addf %200, %201 : vector<16x32xf32>
    %c1_76 = arith.constant 1 : index
    %c0_77 = arith.constant 0 : index
    %c0_78 = arith.constant 0 : index
    %203 = vector.load %arg3[%c1_76, %c0_77, %c0_78] : memref<2x32x96xf32, #tpu.memory_space<vmem>>, vector<1x32x96xf32>
    %204 = vector.shape_cast %203 : vector<1x32x96xf32> to vector<32x96xf32>
    %c1_79 = arith.constant 1 : index
    %c0_80 = arith.constant 0 : index
    %c0_81 = arith.constant 0 : index
    %205 = vector.load %arg4[%c1_79, %c0_80, %c0_81] : memref<2x1x96xf32, #tpu.memory_space<vmem>>, vector<1x1x96xf32>
    %206 = vector.shape_cast %205 : vector<1x1x96xf32> to vector<1x96xf32>
    %207 = arith.truncf %202 : vector<16x32xf32> to vector<16x32xbf16>
    %208 = arith.truncf %204 : vector<32x96xf32> to vector<32x96xbf16>
    %cst_82 = arith.constant dense<0.000000e+00> : vector<16x96xf32>
    %209 = tpu.matmul %207, %208, %cst_82 {dimension_numbers = #tpu.dot_dimension_numbers<[1], [0], [0], [1], [0, 0, 1, 1], [], []>} : vector<16x32xbf16>, vector<32x96xbf16>, vector<16x96xf32> -> vector<16x96xf32>
    %210 = vector.broadcast %206 : vector<1x96xf32> to vector<16x96xf32>
    %211 = arith.addf %209, %210 : vector<16x96xf32>
    %212 = vector.extract_strided_slice %211 {offsets = [0, 0], sizes = [16, 32], strides = [1, 1]} : vector<16x96xf32> to vector<16x32xf32>
    %213 = vector.extract_strided_slice %211 {offsets = [0, 32], sizes = [16, 32], strides = [1, 1]} : vector<16x96xf32> to vector<16x32xf32>
    %214 = vector.extract_strided_slice %211 {offsets = [0, 64], sizes = [16, 32], strides = [1, 1]} : vector<16x96xf32> to vector<16x32xf32>
    %c1_83 = arith.constant 1 : index
    %c0_84 = arith.constant 0 : index
    %c0_85 = arith.constant 0 : index
    %215 = vector.load %arg17[%c1_83, %c0_84, %c0_85] : memref<2x16x32xf32, #tpu.memory_space<vmem>>, vector<1x16x32xf32>
    %216 = vector.shape_cast %215 : vector<1x16x32xf32> to vector<16x32xf32>
    %217 = vector.shape_cast %213 : vector<16x32xf32> to vector<1x16x32xf32>
    tpu.vector_store %arg17[%c1_83, %c0_84, %c0_85], %217 {strides = array<i32>} : memref<2x16x32xf32, #tpu.memory_space<vmem>>, vector<1x16x32xf32>,
    %c1_86 = arith.constant 1 : index
    %c0_87 = arith.constant 0 : index
    %c0_88 = arith.constant 0 : index
    %218 = vector.load %arg18[%c1_86, %c0_87, %c0_88] : memref<2x16x32xf32, #tpu.memory_space<vmem>>, vector<1x16x32xf32>
    %219 = vector.shape_cast %218 : vector<1x16x32xf32> to vector<16x32xf32>
    %220 = vector.shape_cast %214 : vector<16x32xf32> to vector<1x16x32xf32>
    tpu.vector_store %arg18[%c1_86, %c0_87, %c0_88], %220 {strides = array<i32>} : memref<2x16x32xf32, #tpu.memory_space<vmem>>, vector<1x16x32xf32>,
    %221 = vector.shape_cast %212 : vector<16x32xf32> to vector<2x8x32xf32>
    %222 = vector.extract_strided_slice %221 {offsets = [0, 0, 0], sizes = [2, 8, 8], strides = [1, 1, 1]} : vector<2x8x32xf32> to vector<2x8x8xf32>
    %223 = vector.extract_strided_slice %221 {offsets = [0, 0, 8], sizes = [2, 8, 8], strides = [1, 1, 1]} : vector<2x8x32xf32> to vector<2x8x8xf32>
    %224 = vector.extract_strided_slice %221 {offsets = [0, 0, 16], sizes = [2, 8, 8], strides = [1, 1, 1]} : vector<2x8x32xf32> to vector<2x8x8xf32>
    %225 = vector.extract_strided_slice %221 {offsets = [0, 0, 24], sizes = [2, 8, 8], strides = [1, 1, 1]} : vector<2x8x32xf32> to vector<2x8x8xf32>
    %226 = vector.shape_cast %222 : vector<2x8x8xf32> to vector<2x1x8x8xf32>
    %227 = vector.shape_cast %223 : vector<2x8x8xf32> to vector<2x1x8x8xf32>
    %228 = vector.shape_cast %224 : vector<2x8x8xf32> to vector<2x1x8x8xf32>
    %229 = vector.shape_cast %225 : vector<2x8x8xf32> to vector<2x1x8x8xf32>
    %230 = tpu.concatenate %226, %227, %228, %229 in 1 : vector<2x1x8x8xf32>, vector<2x1x8x8xf32>, vector<2x1x8x8xf32>, vector<2x1x8x8xf32> -> vector<2x4x8x8xf32>
    %231 = vector.shape_cast %230 : vector<2x4x8x8xf32> to vector<8x8x8xf32>
    %232 = vector.shape_cast %213 : vector<16x32xf32> to vector<2x8x32xf32>
    %233 = vector.extract_strided_slice %232 {offsets = [0, 0, 0], sizes = [2, 8, 8], strides = [1, 1, 1]} : vector<2x8x32xf32> to vector<2x8x8xf32>
    %234 = vector.extract_strided_slice %232 {offsets = [0, 0, 8], sizes = [2, 8, 8], strides = [1, 1, 1]} : vector<2x8x32xf32> to vector<2x8x8xf32>
    %235 = vector.extract_strided_slice %232 {offsets = [0, 0, 16], sizes = [2, 8, 8], strides = [1, 1, 1]} : vector<2x8x32xf32> to vector<2x8x8xf32>
    %236 = vector.extract_strided_slice %232 {offsets = [0, 0, 24], sizes = [2, 8, 8], strides = [1, 1, 1]} : vector<2x8x32xf32> to vector<2x8x8xf32>
    %237 = vector.shape_cast %233 : vector<2x8x8xf32> to vector<2x1x8x8xf32>
    %238 = vector.shape_cast %234 : vector<2x8x8xf32> to vector<2x1x8x8xf32>
    %239 = vector.shape_cast %235 : vector<2x8x8xf32> to vector<2x1x8x8xf32>
    %240 = vector.shape_cast %236 : vector<2x8x8xf32> to vector<2x1x8x8xf32>
    %241 = tpu.concatenate %237, %238, %239, %240 in 1 : vector<2x1x8x8xf32>, vector<2x1x8x8xf32>, vector<2x1x8x8xf32>, vector<2x1x8x8xf32> -> vector<2x4x8x8xf32>
    %242 = vector.shape_cast %241 : vector<2x4x8x8xf32> to vector<8x8x8xf32>
    %243 = vector.shape_cast %214 : vector<16x32xf32> to vector<2x8x32xf32>
    %244 = vector.extract_strided_slice %243 {offsets = [0, 0, 0], sizes = [2, 8, 8], strides = [1, 1, 1]} : vector<2x8x32xf32> to vector<2x8x8xf32>
    %245 = vector.extract_strided_slice %243 {offsets = [0, 0, 8], sizes = [2, 8, 8], strides = [1, 1, 1]} : vector<2x8x32xf32> to vector<2x8x8xf32>
    %246 = vector.extract_strided_slice %243 {offsets = [0, 0, 16], sizes = [2, 8, 8], strides = [1, 1, 1]} : vector<2x8x32xf32> to vector<2x8x8xf32>
    %247 = vector.extract_strided_slice %243 {offsets = [0, 0, 24], sizes = [2, 8, 8], strides = [1, 1, 1]} : vector<2x8x32xf32> to vector<2x8x8xf32>
    %248 = vector.shape_cast %244 : vector<2x8x8xf32> to vector<2x1x8x8xf32>
    %249 = vector.shape_cast %245 : vector<2x8x8xf32> to vector<2x1x8x8xf32>
    %250 = vector.shape_cast %246 : vector<2x8x8xf32> to vector<2x1x8x8xf32>
    %251 = vector.shape_cast %247 : vector<2x8x8xf32> to vector<2x1x8x8xf32>
    %252 = tpu.concatenate %248, %249, %250, %251 in 1 : vector<2x1x8x8xf32>, vector<2x1x8x8xf32>, vector<2x1x8x8xf32>, vector<2x1x8x8xf32> -> vector<2x4x8x8xf32>
    %253 = vector.shape_cast %252 : vector<2x4x8x8xf32> to vector<8x8x8xf32>
    %254 = arith.truncf %231 : vector<8x8x8xf32> to vector<8x8x8xbf16>
    %255 = arith.truncf %242 : vector<8x8x8xf32> to vector<8x8x8xbf16>
    "tpu.trace_start"() <{level = 10 : i32, message = "bqd,bkd->bqk"}> : () -> ()
    %cst_89 = arith.constant dense<0.000000e+00> : vector<8x8x8xf32>
    %256 = tpu.matmul %254, %255, %cst_89 {dimension_numbers = #tpu.dot_dimension_numbers<[2], [2], [1], [1], [0, 0, 0, 1, 1, 1], [0], [0]>} : vector<8x8x8xbf16>, vector<8x8x8xbf16>, vector<8x8x8xf32> -> vector<8x8x8xf32>
    "tpu.trace_stop"() : () -> ()
    %cst_90 = arith.constant 0.353553385 : f32
    %257 = vector.broadcast %cst_90 : f32 to vector<8x8x8xf32>
    %258 = arith.mulf %256, %257 : vector<8x8x8xf32>
    %cst_91 = arith.constant -1.000000e+04 : f32
    %259 = vector.shape_cast %4 : vector<1x8x8xi1> to vector<1x8x8xi1>
    %260 = vector.broadcast %259 : vector<1x8x8xi1> to vector<8x8x8xi1>
    %261 = vector.broadcast %cst_91 : f32 to vector<8x8x8xf32>
    %262 = arith.select %260, %258, %261 : vector<8x8x8xi1>, vector<8x8x8xf32>
    %cst_92 = arith.constant dense<0xFF800000> : vector<8x8xf32>
    %263 = vector.multi_reduction <maximumf>, %262, %cst_92 [2] : vector<8x8x8xf32> to vector<8x8xf32>
    %264 = vector.shape_cast %263 : vector<8x8xf32> to vector<8x8x1xf32>
    %265 = vector.broadcast %264 : vector<8x8x1xf32> to vector<8x8x8xf32>
    %266 = arith.subf %262, %265 : vector<8x8x8xf32>
    %267 = math.exp %266 : vector<8x8x8xf32>
    %cst_93 = arith.constant dense<0.000000e+00> : vector<8x8xf32>
    %268 = vector.multi_reduction <add>, %267, %cst_93 [2] : vector<8x8x8xf32> to vector<8x8xf32>
    %269 = vector.shape_cast %268 : vector<8x8xf32> to vector<8x8x1xf32>
    %270 = tpu.reciprocal %269 {approx = true} : vector<8x8x1xf32> -> vector<8x8x1xf32>
    %271 = vector.broadcast %270 : vector<8x8x1xf32> to vector<8x8x8xf32>
    %272 = arith.mulf %267, %271 : vector<8x8x8xf32>
    %273 = arith.truncf %272 : vector<8x8x8xf32> to vector<8x8x8xbf16>
    %274 = arith.truncf %253 : vector<8x8x8xf32> to vector<8x8x8xbf16>
    "tpu.trace_start"() <{level = 10 : i32, message = "bqk,bkd->bqd"}> : () -> ()
    %cst_94 = arith.constant dense<0.000000e+00> : vector<8x8x8xf32>
    %275 = tpu.matmul %273, %274, %cst_94 {dimension_numbers = #tpu.dot_dimension_numbers<[2], [1], [1], [2], [0, 0, 0, 1, 1, 2], [0], [0]>} : vector<8x8x8xbf16>, vector<8x8x8xbf16>, vector<8x8x8xf32> -> vector<8x8x8xf32>
    "tpu.trace_stop"() : () -> ()
    %276 = vector.shape_cast %275 : vector<8x8x8xf32> to vector<2x4x8x8xf32>
    %277 = vector.extract_strided_slice %276 {offsets = [0, 0, 0, 0], sizes = [2, 1, 8, 8], strides = [1, 1, 1, 1]} : vector<2x4x8x8xf32> to vector<2x1x8x8xf32>
    %278 = vector.shape_cast %277 : vector<2x1x8x8xf32> to vector<2x8x8xf32>
    %279 = vector.extract_strided_slice %276 {offsets = [0, 1, 0, 0], sizes = [2, 1, 8, 8], strides = [1, 1, 1, 1]} : vector<2x4x8x8xf32> to vector<2x1x8x8xf32>
    %280 = vector.shape_cast %279 : vector<2x1x8x8xf32> to vector<2x8x8xf32>
    %281 = vector.extract_strided_slice %276 {offsets = [0, 2, 0, 0], sizes = [2, 1, 8, 8], strides = [1, 1, 1, 1]} : vector<2x4x8x8xf32> to vector<2x1x8x8xf32>
    %282 = vector.shape_cast %281 : vector<2x1x8x8xf32> to vector<2x8x8xf32>
    %283 = vector.extract_strided_slice %276 {offsets = [0, 3, 0, 0], sizes = [2, 1, 8, 8], strides = [1, 1, 1, 1]} : vector<2x4x8x8xf32> to vector<2x1x8x8xf32>
    %284 = vector.shape_cast %283 : vector<2x1x8x8xf32> to vector<2x8x8xf32>
    %285 = tpu.concatenate %278, %280, %282, %284 in 2 : vector<2x8x8xf32>, vector<2x8x8xf32>, vector<2x8x8xf32>, vector<2x8x8xf32> -> vector<2x8x32xf32>
    %286 = vector.shape_cast %285 : vector<2x8x32xf32> to vector<16x32xf32>
    %c1_95 = arith.constant 1 : index
    %c0_96 = arith.constant 0 : index
    %c0_97 = arith.constant 0 : index
    %287 = vector.load %arg5[%c1_95, %c0_96, %c0_97] : memref<2x32x32xf32, #tpu.memory_space<vmem>>, vector<1x32x32xf32>
    %288 = vector.shape_cast %287 : vector<1x32x32xf32> to vector<32x32xf32>
    %c1_98 = arith.constant 1 : index
    %c0_99 = arith.constant 0 : index
    %c0_100 = arith.constant 0 : index
    %289 = vector.load %arg6[%c1_98, %c0_99, %c0_100] : memref<2x1x32xf32, #tpu.memory_space<vmem>>, vector<1x1x32xf32>
    %290 = vector.shape_cast %289 : vector<1x1x32xf32> to vector<1x32xf32>
    %291 = arith.truncf %286 : vector<16x32xf32> to vector<16x32xbf16>
    %292 = arith.truncf %288 : vector<32x32xf32> to vector<32x32xbf16>
    %cst_101 = arith.constant dense<0.000000e+00> : vector<16x32xf32>
    %293 = tpu.matmul %291, %292, %cst_101 {dimension_numbers = #tpu.dot_dimension_numbers<[1], [0], [0], [1], [0, 0, 1, 1], [], []>} : vector<16x32xbf16>, vector<32x32xbf16>, vector<16x32xf32> -> vector<16x32xf32>
    %294 = vector.broadcast %290 : vector<1x32xf32> to vector<16x32xf32>
    %295 = arith.addf %293, %294 : vector<16x32xf32>
    %296 = arith.addf %178, %295 : vector<16x32xf32>
    %c1_102 = arith.constant 1 : index
    %c0_103 = arith.constant 0 : index
    %c0_104 = arith.constant 0 : index
    %297 = vector.load %arg7[%c1_102, %c0_103, %c0_104] : memref<2x1x32xf32, #tpu.memory_space<vmem>>, vector<1x1x32xf32>
    %298 = vector.shape_cast %297 : vector<1x1x32xf32> to vector<1x32xf32>
    %c1_105 = arith.constant 1 : index
    %c0_106 = arith.constant 0 : index
    %c0_107 = arith.constant 0 : index
    %299 = vector.load %arg8[%c1_105, %c0_106, %c0_107] : memref<2x1x32xf32, #tpu.memory_space<vmem>>, vector<1x1x32xf32>
    %300 = vector.shape_cast %299 : vector<1x1x32xf32> to vector<1x32xf32>
    %cst_108 = arith.constant dense<0.000000e+00> : vector<16xf32>
    %301 = vector.multi_reduction <add>, %296, %cst_108 [1] : vector<16x32xf32> to vector<16xf32>
    %302 = vector.shape_cast %301 : vector<16xf32> to vector<16x1xf32>
    %cst_109 = arith.constant 3.200000e+01 : f32
    %303 = vector.broadcast %cst_109 : f32 to vector<16x1xf32>
    %304 = arith.divf %302, %303 : vector<16x1xf32>
    %305 = vector.broadcast %304 : vector<16x1xf32> to vector<16x32xf32>
    %306 = arith.subf %296, %305 : vector<16x32xf32>
    %307 = arith.mulf %306, %306 : vector<16x32xf32>
    %cst_110 = arith.constant dense<0.000000e+00> : vector<16xf32>
    %308 = vector.multi_reduction <add>, %307, %cst_110 [1] : vector<16x32xf32> to vector<16xf32>
    %309 = vector.shape_cast %308 : vector<16xf32> to vector<16x1xf32>
    %cst_111 = arith.constant 3.200000e+01 : f32
    %310 = vector.broadcast %cst_111 : f32 to vector<16x1xf32>
    %311 = arith.divf %309, %310 : vector<16x1xf32>
    %cst_112 = arith.constant 9.99999974E-6 : f32
    %312 = vector.broadcast %cst_112 : f32 to vector<16x1xf32>
    %313 = arith.addf %311, %312 : vector<16x1xf32>
    %314 = math.rsqrt %313 : vector<16x1xf32>
    %315 = vector.broadcast %314 : vector<16x1xf32> to vector<16x32xf32>
    %316 = arith.mulf %306, %315 : vector<16x32xf32>
    %317 = vector.broadcast %298 : vector<1x32xf32> to vector<16x32xf32>
    %318 = arith.mulf %316, %317 : vector<16x32xf32>
    %319 = vector.broadcast %300 : vector<1x32xf32> to vector<16x32xf32>
    %320 = arith.addf %318, %319 : vector<16x32xf32>
    %c1_113 = arith.constant 1 : index
    %c0_114 = arith.constant 0 : index
    %c0_115 = arith.constant 0 : index
    %321 = vector.load %arg9[%c1_113, %c0_114, %c0_115] : memref<2x32x128xf32, #tpu.memory_space<vmem>>, vector<1x32x128xf32>
    %322 = vector.shape_cast %321 : vector<1x32x128xf32> to vector<32x128xf32>
    %c1_116 = arith.constant 1 : index
    %c0_117 = arith.constant 0 : index
    %c0_118 = arith.constant 0 : index
    %323 = vector.load %arg10[%c1_116, %c0_117, %c0_118] : memref<2x1x128xf32, #tpu.memory_space<vmem>>, vector<1x1x128xf32>
    %324 = vector.shape_cast %323 : vector<1x1x128xf32> to vector<1x128xf32>
    %325 = arith.truncf %320 : vector<16x32xf32> to vector<16x32xbf16>
    %326 = arith.truncf %322 : vector<32x128xf32> to vector<32x128xbf16>
    %cst_119 = arith.constant dense<0.000000e+00> : vector<16x128xf32>
    %327 = tpu.matmul %325, %326, %cst_119 {dimension_numbers = #tpu.dot_dimension_numbers<[1], [0], [0], [1], [0, 0, 1, 1], [], []>} : vector<16x32xbf16>, vector<32x128xbf16>, vector<16x128xf32> -> vector<16x128xf32>
    %328 = vector.broadcast %324 : vector<1x128xf32> to vector<16x128xf32>
    %329 = arith.addf %327, %328 : vector<16x128xf32>
    %cst_120 = arith.constant 5.000000e-01 : f32
    %330 = vector.broadcast %cst_120 : f32 to vector<16x128xf32>
    %331 = arith.mulf %330, %329 : vector<16x128xf32>
    %cst_121 = arith.constant 4.471500e-02 : f32
    %332 = vector.broadcast %cst_121 : f32 to vector<16x128xf32>
    %333 = arith.mulf %332, %329 : vector<16x128xf32>
    %334 = arith.mulf %333, %329 : vector<16x128xf32>
    %335 = arith.mulf %334, %329 : vector<16x128xf32>
    %336 = arith.addf %329, %335 : vector<16x128xf32>
    %cst_122 = arith.constant 0.797884583 : f32
    %337 = vector.broadcast %cst_122 : f32 to vector<16x128xf32>
    %338 = arith.mulf %337, %336 : vector<16x128xf32>
    %339 = math.tanh %338 : vector<16x128xf32>
    %cst_123 = arith.constant 1.000000e+00 : f32
    %340 = vector.broadcast %cst_123 : f32 to vector<16x128xf32>
    %341 = arith.addf %340, %339 : vector<16x128xf32>
    %342 = arith.mulf %331, %341 : vector<16x128xf32>
    %c1_124 = arith.constant 1 : index
    %c0_125 = arith.constant 0 : index
    %c0_126 = arith.constant 0 : index
    %343 = vector.load %arg11[%c1_124, %c0_125, %c0_126] : memref<2x128x32xf32, #tpu.memory_space<vmem>>, vector<1x128x32xf32>
    %344 = vector.shape_cast %343 : vector<1x128x32xf32> to vector<128x32xf32>
    %c1_127 = arith.constant 1 : index
    %c0_128 = arith.constant 0 : index
    %c0_129 = arith.constant 0 : index
    %345 = vector.load %arg12[%c1_127, %c0_128, %c0_129] : memref<2x1x32xf32, #tpu.memory_space<vmem>>, vector<1x1x32xf32>
    %346 = vector.shape_cast %345 : vector<1x1x32xf32> to vector<1x32xf32>
    %347 = arith.truncf %342 : vector<16x128xf32> to vector<16x128xbf16>
    %348 = arith.truncf %344 : vector<128x32xf32> to vector<128x32xbf16>
    %cst_130 = arith.constant dense<0.000000e+00> : vector<16x32xf32>
    %349 = tpu.matmul %347, %348, %cst_130 {dimension_numbers = #tpu.dot_dimension_numbers<[1], [0], [0], [1], [0, 0, 1, 1], [], []>} : vector<16x128xbf16>, vector<128x32xbf16>, vector<16x32xf32> -> vector<16x32xf32>
    %350 = vector.broadcast %346 : vector<1x32xf32> to vector<16x32xf32>
    %351 = arith.addf %349, %350 : vector<16x32xf32>
    %352 = arith.addf %296, %351 : vector<16x32xf32>
    %c0_131 = arith.constant 0 : index
    %c0_132 = arith.constant 0 : index
    %353 = vector.load %arg13[%c0_131, %c0_132] : memref<1x32xf32, #tpu.memory_space<vmem>>, vector<1x32xf32>
    %c0_133 = arith.constant 0 : index
    %c0_134 = arith.constant 0 : index
    %354 = vector.load %arg14[%c0_133, %c0_134] : memref<1x32xf32, #tpu.memory_space<vmem>>, vector<1x32xf32>
    %cst_135 = arith.constant dense<0.000000e+00> : vector<16xf32>
    %355 = vector.multi_reduction <add>, %352, %cst_135 [1] : vector<16x32xf32> to vector<16xf32>
    %356 = vector.shape_cast %355 : vector<16xf32> to vector<16x1xf32>
    %cst_136 = arith.constant 3.200000e+01 : f32
    %357 = vector.broadcast %cst_136 : f32 to vector<16x1xf32>
    %358 = arith.divf %356, %357 : vector<16x1xf32>
    %359 = vector.broadcast %358 : vector<16x1xf32> to vector<16x32xf32>
    %360 = arith.subf %352, %359 : vector<16x32xf32>
    %361 = arith.mulf %360, %360 : vector<16x32xf32>
    %cst_137 = arith.constant dense<0.000000e+00> : vector<16xf32>
    %362 = vector.multi_reduction <add>, %361, %cst_137 [1] : vector<16x32xf32> to vector<16xf32>
    %363 = vector.shape_cast %362 : vector<16xf32> to vector<16x1xf32>
    %cst_138 = arith.constant 3.200000e+01 : f32
    %364 = vector.broadcast %cst_138 : f32 to vector<16x1xf32>
    %365 = arith.divf %363, %364 : vector<16x1xf32>
    %cst_139 = arith.constant 9.99999974E-6 : f32
    %366 = vector.broadcast %cst_139 : f32 to vector<16x1xf32>
    %367 = arith.addf %365, %366 : vector<16x1xf32>
    %368 = math.rsqrt %367 : vector<16x1xf32>
    %369 = vector.broadcast %368 : vector<16x1xf32> to vector<16x32xf32>
    %370 = arith.mulf %360, %369 : vector<16x32xf32>
    %371 = vector.broadcast %353 : vector<1x32xf32> to vector<16x32xf32>
    %372 = arith.mulf %370, %371 : vector<16x32xf32>
    %373 = vector.broadcast %354 : vector<1x32xf32> to vector<16x32xf32>
    %374 = arith.addf %372, %373 : vector<16x32xf32>
    %375 = arith.truncf %374 : vector<16x32xf32> to vector<16x32xbf16>
    %c0_140 = arith.constant 0 : index
    %c0_141 = arith.constant 0 : index
    %376 = vector.load %arg15[%c0_140, %c0_141] : memref<32x128xf32, #tpu.memory_space<vmem>>, vector<32x128xf32>
    %377 = arith.truncf %376 : vector<32x128xf32> to vector<32x128xbf16>
    %cst_142 = arith.constant dense<0.000000e+00> : vector<16x128xf32>
    %378 = tpu.matmul %375, %377, %cst_142 {dimension_numbers = #tpu.dot_dimension_numbers<[1], [0], [0], [1], [0, 0, 1, 1], [], []>} : vector<16x32xbf16>, vector<32x128xbf16>, vector<16x128xf32> -> vector<16x128xf32>
    %c0_143 = arith.constant 0 : index
    %c0_144 = arith.constant 0 : index
    %379 = vector.load %arg16[%c0_143, %c0_144] : memref<16x128xf32, #tpu.memory_space<vmem>>, vector<16x128xf32>
    tpu.vector_store %arg16[%c0_143, %c0_144], %378 {strides = array<i32>} : memref<16x128xf32, #tpu.memory_space<vmem>>, vector<16x128xf32>,
    return
  }
}

</mosaic_0001>

<llo_original>
// kernel: tpu_custom_call.1
$region0: #{tpu_custom_call.1}
  #allocation0 [shape = 'u32[]', space=smem, size = 0x4, offset = 0x4, fixed_abs, tag = 'smem constant byte address 0x4 - core index']
  #allocation1 [shape = 'u32[144,128]{1,0:T(1,128)}', space=vmem, size = 0x12000, scoped, tag = 'internal scratch']
  %s0 = inlined_call_operand.vmem [shape: f32[16,32], index: 0, kind: input, shape index: {}]
  %s1 = inlined_call_operand.vmem [shape: f32[2,1,32], index: 1, kind: input, shape index: {}]
  %s2 = inlined_call_operand.vmem [shape: f32[2,1,32], index: 2, kind: input, shape index: {}]
  %s3 = inlined_call_operand.vmem [shape: f32[2,32,96], index: 3, kind: input, shape index: {}]
  %s4 = inlined_call_operand.vmem [shape: f32[2,1,96], index: 4, kind: input, shape index: {}]
  %s5 = inlined_call_operand.vmem [shape: f32[2,32,32], index: 5, kind: input, shape index: {}]
  %s6 = inlined_call_operand.vmem [shape: f32[2,1,32], index: 6, kind: input, shape index: {}]
  %s7 = inlined_call_operand.vmem [shape: f32[2,1,32], index: 7, kind: input, shape index: {}]
  %s8 = inlined_call_operand.vmem [shape: f32[2,1,32], index: 8, kind: input, shape index: {}]
  %s9 = inlined_call_operand.vmem [shape: f32[2,32,128], index: 9, kind: input, shape index: {}]
  %s10 = inlined_call_operand.vmem [shape: f32[2,1,128], index: 10, kind: input, shape index: {}]
  %s11 = inlined_call_operand.vmem [shape: f32[2,128,32], index: 11, kind: input, shape index: {}]
  %s12 = inlined_call_operand.vmem [shape: f32[2,1,32], index: 12, kind: input, shape index: {}]
  %s13 = inlined_call_operand.vmem [shape: f32[1,32], index: 13, kind: input, shape index: {}]
  %s14 = inlined_call_operand.vmem [shape: f32[1,32], index: 14, kind: input, shape index: {}]
  %s15 = inlined_call_operand.vmem [shape: f32[32,128], index: 15, kind: input, shape index: {}]
  %s16 = inlined_call_operand.hbm [shape: f32[16,128], index: 16, kind: output, shape index: {0}]
  %s17 = inlined_call_operand.hbm [shape: f32[2,16,32], index: 17, kind: output, shape index: {1}]
  %s18 = inlined_call_operand.hbm [shape: f32[2,16,32], index: 18, kind: output, shape index: {2}]
  %19 = xla_tuple %s16, %s17, %s18
  %s20 = sld [smem:[#allocation0]]
  $region90: #{tpu_custom_call.1} parent=0
    _
  %s22 = ssub.s32 1, %s20
  %s23 = scalar_select 0, %s22, %s20
  $region1: #{tpu_custom_call.1} parent=0
    #allocation2 [shape = 'u8[8192]{0}', space=vmem, size = 0x2000, scoped, tag = 'output window, operand 0, single buffered']
    #allocation3 [shape = 's32[1]{0}', space=sflag, size = 0x4, scoped, tag = 'scoped memory for tpu_custom_call.1']
    #allocation4 [shape = 'u8[16384]{0}', space=vmem, size = 0x4000, scoped, tag = 'output window, operand 1, single buffered']
    #allocation5 [shape = 's32[1]{0}', space=sflag, size = 0x4, scoped, tag = 'scoped memory for tpu_custom_call.1']
    #allocation6 [shape = 'u8[16384]{0}', space=vmem, size = 0x4000, scoped, tag = 'output window, operand 2, single buffered']
    %24 = vsyncpa [#allocation3], 0
    %25 = vsyncpa [#allocation5], 0
    // Predicated region
    $region2: #{tpu_custom_call.1} parent=1 // pred_check
      _
    $region3: #{tpu_custom_call.1} parent=1 // pred_check_branch
      %27 = sbr.rel (0) target = $region5
    $region4: #{tpu_custom_call.1} parent=1 // pred_region
      _
    $region5: #{tpu_custom_call.1} parent=1 // pred_fallthru
      _
    // Predicated region
    $region6: #{tpu_custom_call.1} parent=1 // pred_check
      _
    $region7: #{tpu_custom_call.1} parent=1 // pred_check_branch
      %29 = sbr.rel (0) target = $region9
    $region8: #{tpu_custom_call.1} parent=1 // pred_region
      _
    $region9: #{tpu_custom_call.1} parent=1 // pred_fallthru
      _
    // Predicated region
    $region10: #{tpu_custom_call.1} parent=1 // pred_check
      _
    $region11: #{tpu_custom_call.1} parent=1 // pred_check_branch
      %31 = sbr.rel (0) target = $region13
    $region12: #{tpu_custom_call.1} parent=1 // pred_region
      _
    $region13: #{tpu_custom_call.1} parent=1 // pred_fallthru
      _
    // Predicated region
    $region14: #{tpu_custom_call.1} parent=1 // pred_check
      _
    $region15: #{tpu_custom_call.1} parent=1 // pred_check_branch
      %33 = sbr.rel (0) target = $region17
    $region16: #{tpu_custom_call.1} parent=1 // pred_region
      _
    $region17: #{tpu_custom_call.1} parent=1 // pred_fallthru
      _
    // Predicated region
    $region18: #{tpu_custom_call.1} parent=1 // pred_check
      _
    $region19: #{tpu_custom_call.1} parent=1 // pred_check_branch
      %35 = sbr.rel (0) target = $region21
    $region20: #{tpu_custom_call.1} parent=1 // pred_region
      _
    $region21: #{tpu_custom_call.1} parent=1 // pred_fallthru
      _
    // Predicated region
    $region22: #{tpu_custom_call.1} parent=1 // pred_check
      _
    $region23: #{tpu_custom_call.1} parent=1 // pred_check_branch
      %37 = sbr.rel (0) target = $region25
    $region24: #{tpu_custom_call.1} parent=1 // pred_region
      _
    $region25: #{tpu_custom_call.1} parent=1 // pred_fallthru
      _
    // Predicated region
    $region26: #{tpu_custom_call.1} parent=1 // pred_check
      _
    $region27: #{tpu_custom_call.1} parent=1 // pred_check_branch
      %39 = sbr.rel (0) target = $region29
    $region28: #{tpu_custom_call.1} parent=1 // pred_region
      _
    $region29: #{tpu_custom_call.1} parent=1 // pred_fallthru
      _
    // Predicated region
    $region30: #{tpu_custom_call.1} parent=1 // pred_check
      _
    $region31: #{tpu_custom_call.1} parent=1 // pred_check_branch
      %41 = sbr.rel (0) target = $region33
    $region32: #{tpu_custom_call.1} parent=1 // pred_region
      _
    $region33: #{tpu_custom_call.1} parent=1 // pred_fallthru
      _
    // Predicated region
    $region34: #{tpu_custom_call.1} parent=1 // pred_check
      _
    $region35: #{tpu_custom_call.1} parent=1 // pred_check_branch
      %43 = sbr.rel (0) target = $region37
    $region36: #{tpu_custom_call.1} parent=1 // pred_region
      _
    $region37: #{tpu_custom_call.1} parent=1 // pred_fallthru
      _
    // Predicated region
    $region38: #{tpu_custom_call.1} parent=1 // pred_check
      _
    $region39: #{tpu_custom_call.1} parent=1 // pred_check_branch
      %45 = sbr.rel (0) target = $region41
    $region40: #{tpu_custom_call.1} parent=1 // pred_region
      _
    $region41: #{tpu_custom_call.1} parent=1 // pred_fallthru
      _
    // Predicated region
    $region42: #{tpu_custom_call.1} parent=1 // pred_check
      _
    $region43: #{tpu_custom_call.1} parent=1 // pred_check_branch
      %47 = sbr.rel (0) target = $region45
    $region44: #{tpu_custom_call.1} parent=1 // pred_region
      _
    $region45: #{tpu_custom_call.1} parent=1 // pred_fallthru
      _
    // Predicated region
    $region46: #{tpu_custom_call.1} parent=1 // pred_check
      _
    $region47: #{tpu_custom_call.1} parent=1 // pred_check_branch
      %49 = sbr.rel (0) target = $region49
    $region48: #{tpu_custom_call.1} parent=1 // pred_region
      _
    $region49: #{tpu_custom_call.1} parent=1 // pred_fallthru
      _
    // Predicated region
    $region50: #{tpu_custom_call.1} parent=1 // pred_check
      _
    $region51: #{tpu_custom_call.1} parent=1 // pred_check_branch
      %51 = sbr.rel (0) target = $region53
    $region52: #{tpu_custom_call.1} parent=1 // pred_region
      _
    $region53: #{tpu_custom_call.1} parent=1 // pred_fallthru
      _
    // Predicated region
    $region54: #{tpu_custom_call.1} parent=1 // pred_check
      _
    $region55: #{tpu_custom_call.1} parent=1 // pred_check_branch
      %53 = sbr.rel (0) target = $region57
    $region56: #{tpu_custom_call.1} parent=1 // pred_region
      _
    $region57: #{tpu_custom_call.1} parent=1 // pred_fallthru
      _
    // Predicated region
    $region58: #{tpu_custom_call.1} parent=1 // pred_check
      _
    $region59: #{tpu_custom_call.1} parent=1 // pred_check_branch
      %55 = sbr.rel (0) target = $region61
    $region60: #{tpu_custom_call.1} parent=1 // pred_region
      _
    $region61: #{tpu_custom_call.1} parent=1 // pred_fallthru
      _
    // Predicated region
    $region62: #{tpu_custom_call.1} parent=1 // pred_check
      _
    $region63: #{tpu_custom_call.1} parent=1 // pred_check_branch
      %57 = sbr.rel (0) target = $region65
    $region64: #{tpu_custom_call.1} parent=1 // pred_region
      _
    $region65: #{tpu_custom_call.1} parent=1 // pred_fallthru
      _
    %v59 = vld [vmem:[%s0] sm:$0xff]
    %v60 = vld [vmem:[%s0 + $0x8] sm:$0xff]
    %v61 = vlaneseq
    %v62 = vshrl.u32 %v61, 7
    %v63 = vlaneseq
    %v64 = vand.u32 %v63, 127
    %vm65 = vcmp.ge.s32.totalorder %v62, %v64
    %v66 = vld [vmem:[%s1] sm:$0x1]
    %v67 = vld [vmem:[%s2] sm:$0x1]
    %vm68 = vcmask 261120
    %v69 = vsel %vm68, %v59, 0.0
    %70 = vadd.xlane.f32.xlu0 %v69
    %v71 = vpop.xlane.xlu0 %70
    %v72 = vsel %vm68, %v60, 0.0
    %73 = vadd.xlane.f32.xlu0 %v72
    %v74 = vpop.xlane.xlu0 %73
    %v75 = vrcp.pop 32.0
    %v76 = vmul.f32 %v71, %v75
    %v77 = vmul.f32 %v74, %v75
    %v78 = vsub.f32 %v59, %v76
    %v79 = vsub.f32 %v60, %v77
    %v80 = vmul.f32 %v78, %v78
    %v81 = vmul.f32 %v79, %v79
    %v82 = vsel %vm68, %v80, 0.0
    %83 = vadd.xlane.f32.xlu0 %v82
    %v84 = vpop.xlane.xlu0 %83
    %v85 = vsel %vm68, %v81, 0.0
    %86 = vadd.xlane.f32.xlu0 %v85
    %v87 = vpop.xlane.xlu0 %86
    %v88 = vmul.f32 %v84, %v75
    %v89 = vmul.f32 %v87, %v75
    %v90 = vadd.f32 %v88, 1e-05
    %v91 = vadd.f32 %v89, 1e-05
    %v92 = vrsqrt.pop %v90
    %v93 = vrsqrt.pop %v91
    %v94 = vmul.f32 %v78, %v92
    %v95 = vmul.f32 %v79, %v93
    %v97 = vlaneseq
    %v98 = vshrl.u32 %v97, 7
    %v99 = vsub.s32 0, %v98
    %v100 = vrot.slane %v66, %v99
    %v102 = vmul.f32 %v94, %v100
    %v103 = vmul.f32 %v95, %v100
    %v105 = vlaneseq
    %v106 = vshrl.u32 %v105, 7
    %v107 = vsub.s32 0, %v106
    %v108 = vrot.slane %v67, %v107
    %v110 = vadd.f32 %v102, %v108
    %v111 = vadd.f32 %v103, %v108
    %v112 = vld [vmem:[%s3] sm:$0xff]
    %v113 = vld [vmem:[%s3 + $0x8] sm:$0xff]
    %v114 = vld [vmem:[%s3 + $0x10] sm:$0xff]
    %v115 = vld [vmem:[%s3 + $0x18] sm:$0xff]
    %v116 = vld [vmem:[%s4] sm:$0x1]
    %v117 = vpack.c.bf16 %v111, %v110
    %v118 = vpack.c.bf16 %v113, %v112
    %v119 = vpack.c.bf16 %v115, %v114
    %v121 = vlaneseq
    %v122 = vshrl.u32 %v121, 7
    %v123 = vsub.s32 0, %v122
    %v124 = vrot.slane %v116, %v123
    %v127 = vsel %vm68, %v117, 0
    %129 = vmatprep.subr.bf16.mxu0 0
    %130 = vmatpush1.bf16.msra.mxu0 0
    %131 = vmatprep.subr.bf16.mxu0 0
    %132 = vmatpush1.bf16.msra.mxu0 0
    %133 = vmatprep.subr.bf16.mxu0 0
    %134 = vmatpush1.bf16.msra.mxu0 0
    %135 = vmatprep.subr.bf16.mxu0 0
    %136 = vmatpush1.bf16.msra.mxu0 0
    %137 = vmatprep.subr.bf16.mxu0 0
    %138 = vmatpush1.bf16.msra.mxu0 0
    %139 = vmatprep.subr.bf16.mxu0 0
    %140 = vmatpush1.bf16.msra.mxu0 0
    %141 = vmatprep.subr.bf16.mxu0 0
    %142 = vmatpush1.bf16.msra.mxu0 %v119
    %143 = vmatprep.subr.bf16.mxu0 0
    %144 = vmatpush1.bf16.msra.mxu0 %v118
    %145 = vmatprep.subr.bf16.mxu0 0
    %146 = vmatpush2.bf16.msra.mxu0 0
    %147 = vmatprep.subr.bf16.mxu0 0
    %148 = vmatpush2.bf16.msra.mxu0 0
    %149 = vmatprep.subr.bf16.mxu0 0
    %150 = vmatpush2.bf16.msra.mxu0 0
    %151 = vmatprep.subr.bf16.mxu0 0
    %152 = vmatpush2.bf16.msra.mxu0 0
    %153 = vmatprep.subr.bf16.mxu0 0
    %154 = vmatpush2.bf16.msra.mxu0 0
    %155 = vmatprep.subr.bf16.mxu0 0
    %156 = vmatpush2.bf16.msra.mxu0 0
    %157 = vmatprep.subr.bf16.mxu0 0
    %158 = vmatpush2.bf16.msra.mxu0 0
    %159 = vmatprep.subr.bf16.mxu0 0
    %160 = vmatpush2.bf16.msra.mxu0 0
    %161 = vmatprep.mubr.bf16.mxu0 0
    %162 = vmatmul.mubr.bf16.gmra.mxu0 %v127
    %v163 = vpop.f32.mrf.mxu0
    %v164 = vadd.f32 %v124, %v163
    %v165 = vpop.f32.mrf.mxu0
    %v166 = vpop.f32.mrf.mxu0
    %v167 = vadd.f32 %v124, %v166
    %v168 = vpop.f32.mrf.mxu0
    %169 = vdwg.mxu0
    %172 = vrot.lane.b32.xlu0 %v164, 96
    %v173 = vpop.permute.xlu0 %172
    %174 = vrot.lane.b32.xlu0 %v167, 96
    %v175 = vpop.permute.xlu0 %174
    %178 = vst.msk [vmem:[#allocation4] sm:$0xff] %vm68, %v173
    %179 = vst.msk [vmem:[#allocation4 + $0x8] sm:$0xff] %vm68, %v175
    %180 = vrot.lane.b32.xlu0 %v164, 64
    %v181 = vpop.permute.xlu0 %180
    %182 = vrot.lane.b32.xlu0 %v167, 64
    %v183 = vpop.permute.xlu0 %182
    %186 = vst.msk [vmem:[#allocation6] sm:$0xff] %vm68, %v181
    %187 = vst.msk [vmem:[#allocation6 + $0x8] sm:$0xff] %vm68, %v183
    %188 = vrot.lane.b32.xlu0 %v164, 120
    %v189 = vpop.permute.xlu0 %188
    %190 = vrot.lane.b32.xlu0 %v167, 120
    %v191 = vpop.permute.xlu0 %190
    %194 = vrot.lane.b32.xlu0 %v164, 112
    %v195 = vpop.permute.xlu0 %194
    %196 = vrot.lane.b32.xlu0 %v167, 112
    %v197 = vpop.permute.xlu0 %196
    %200 = vrot.lane.b32.xlu0 %v164, 104
    %v201 = vpop.permute.xlu0 %200
    %202 = vrot.lane.b32.xlu0 %v167, 104
    %v203 = vpop.permute.xlu0 %202
    %v206 = vpack.c.bf16 %v164, %v164
    %v207 = vpack.c.bf16 %v189, %v189
    %v208 = vpack.c.bf16 %v195, %v195
    %v209 = vpack.c.bf16 %v201, %v201
    %v210 = vpack.c.bf16 %v167, %v167
    %v211 = vpack.c.bf16 %v191, %v191
    %v212 = vpack.c.bf16 %v197, %v197
    %v213 = vpack.c.bf16 %v203, %v203
    %215 = vrot.lane.b32.xlu0 %v206, 96
    %v216 = vpop.permute.xlu0 %215
    %vm217 = vcmask 64512
    %v219 = vsel %vm217, %v206, 0
    %v222 = vsel %vm217, %v216, 0
    %224 = vmatprep.subr.bf16.mxu0 0
    %225 = vmatpush1.bf16.xpose.msra.mxu0 0
    %226 = vmatprep.subr.bf16.mxu0 0
    %227 = vmatpush1.bf16.xpose.msra.mxu0 0
    %228 = vmatprep.subr.bf16.mxu0 0
    %229 = vmatpush1.bf16.xpose.msra.mxu0 0
    %230 = vmatprep.subr.bf16.mxu0 0
    %231 = vmatpush1.bf16.xpose.msra.mxu0 0
    %232 = vmatprep.subr.bf16.mxu0 0
    %233 = vmatpush1.bf16.xpose.msra.mxu0 0
    %234 = vmatprep.subr.bf16.mxu0 0
    %235 = vmatpush1.bf16.xpose.msra.mxu0 0
    %236 = vmatprep.subr.bf16.mxu0 0
    %237 = vmatpush1.bf16.xpose.msra.mxu0 0
    %238 = vmatprep.subr.bf16.mxu0 0
    %239 = vmatpush1.bf16.xpose.msra.mxu0 %v222
    %240 = vmatprep.subr.bf16.mxu0 0
    %241 = vmatpush2.bf16.xpose.msra.mxu0 0
    %242 = vmatprep.subr.bf16.mxu0 0
    %243 = vmatpush2.bf16.xpose.msra.mxu0 0
    %244 = vmatprep.subr.bf16.mxu0 0
    %245 = vmatpush2.bf16.xpose.msra.mxu0 0
    %246 = vmatprep.subr.bf16.mxu0 0
    %247 = vmatpush2.bf16.xpose.msra.mxu0 0
    %248 = vmatprep.subr.bf16.mxu0 0
    %249 = vmatpush2.bf16.xpose.msra.mxu0 0
    %250 = vmatprep.subr.bf16.mxu0 0
    %251 = vmatpush2.bf16.xpose.msra.mxu0 0
    %252 = vmatprep.subr.bf16.mxu0 0
    %253 = vmatpush2.bf16.xpose.msra.mxu0 0
    %254 = vmatprep.subr.bf16.mxu0 0
    %255 = vmatpush2.bf16.xpose.msra.mxu0 0
    %256 = vmatprep.mubr.bf16.mxu0 0
    %257 = vmatmul.mubr.bf16.gmra.mxu0 %v219
    %v258 = vpop.f32.mrf.mxu0
    %v259 = vadd.f32 0.0, %v258
    %v260 = vpop.f32.mrf.mxu0
    %v261 = vpop.f32.mrf.mxu0
    %v262 = vpop.f32.mrf.mxu0
    %263 = vdwg.mxu0
    %265 = vrot.lane.b32.xlu0 %v207, 96
    %v266 = vpop.permute.xlu0 %265
    %v268 = vsel %vm217, %v207, 0
    %v271 = vsel %vm217, %v266, 0
    %273 = vmatprep.subr.bf16.mxu0 0
    %274 = vmatpush1.bf16.xpose.msra.mxu0 0
    %275 = vmatprep.subr.bf16.mxu0 0
    %276 = vmatpush1.bf16.xpose.msra.mxu0 0
    %277 = vmatprep.subr.bf16.mxu0 0
    %278 = vmatpush1.bf16.xpose.msra.mxu0 0
    %279 = vmatprep.subr.bf16.mxu0 0
    %280 = vmatpush1.bf16.xpose.msra.mxu0 0
    %281 = vmatprep.subr.bf16.mxu0 0
    %282 = vmatpush1.bf16.xpose.msra.mxu0 0
    %283 = vmatprep.subr.bf16.mxu0 0
    %284 = vmatpush1.bf16.xpose.msra.mxu0 0
    %285 = vmatprep.subr.bf16.mxu0 0
    %286 = vmatpush1.bf16.xpose.msra.mxu0 0
    %287 = vmatprep.subr.bf16.mxu0 0
    %288 = vmatpush1.bf16.xpose.msra.mxu0 %v271
    %289 = vmatprep.subr.bf16.mxu0 0
    %290 = vmatpush2.bf16.xpose.msra.mxu0 0
    %291 = vmatprep.subr.bf16.mxu0 0
    %292 = vmatpush2.bf16.xpose.msra.mxu0 0
    %293 = vmatprep.subr.bf16.mxu0 0
    %294 = vmatpush2.bf16.xpose.msra.mxu0 0
    %295 = vmatprep.subr.bf16.mxu0 0
    %296 = vmatpush2.bf16.xpose.msra.mxu0 0
    %297 = vmatprep.subr.bf16.mxu0 0
    %298 = vmatpush2.bf16.xpose.msra.mxu0 0
    %299 = vmatprep.subr.bf16.mxu0 0
    %300 = vmatpush2.bf16.xpose.msra.mxu0 0
    %301 = vmatprep.subr.bf16.mxu0 0
    %302 = vmatpush2.bf16.xpose.msra.mxu0 0
    %303 = vmatprep.subr.bf16.mxu0 0
    %304 = vmatpush2.bf16.xpose.msra.mxu0 0
    %305 = vmatprep.mubr.bf16.mxu0 0
    %306 = vmatmul.mubr.bf16.gmra.mxu0 %v268
    %v307 = vpop.f32.mrf.mxu0
    %v308 = vadd.f32 0.0, %v307
    %v309 = vpop.f32.mrf.mxu0
    %v310 = vpop.f32.mrf.mxu0
    %v311 = vpop.f32.mrf.mxu0
    %312 = vdwg.mxu0
    %314 = vrot.lane.b32.xlu0 %v208, 96
    %v315 = vpop.permute.xlu0 %314
    %v317 = vsel %vm217, %v208, 0
    %v320 = vsel %vm217, %v315, 0
    %322 = vmatprep.subr.bf16.mxu0 0
    %323 = vmatpush1.bf16.xpose.msra.mxu0 0
    %324 = vmatprep.subr.bf16.mxu0 0
    %325 = vmatpush1.bf16.xpose.msra.mxu0 0
    %326 = vmatprep.subr.bf16.mxu0 0
    %327 = vmatpush1.bf16.xpose.msra.mxu0 0
    %328 = vmatprep.subr.bf16.mxu0 0
    %329 = vmatpush1.bf16.xpose.msra.mxu0 0
    %330 = vmatprep.subr.bf16.mxu0 0
    %331 = vmatpush1.bf16.xpose.msra.mxu0 0
    %332 = vmatprep.subr.bf16.mxu0 0
    %333 = vmatpush1.bf16.xpose.msra.mxu0 0
    %334 = vmatprep.subr.bf16.mxu0 0
    %335 = vmatpush1.bf16.xpose.msra.mxu0 0
    %336 = vmatprep.subr.bf16.mxu0 0
    %337 = vmatpush1.bf16.xpose.msra.mxu0 %v320
    %338 = vmatprep.subr.bf16.mxu0 0
    %339 = vmatpush2.bf16.xpose.msra.mxu0 0
    %340 = vmatprep.subr.bf16.mxu0 0
    %341 = vmatpush2.bf16.xpose.msra.mxu0 0
    %342 = vmatprep.subr.bf16.mxu0 0
    %343 = vmatpush2.bf16.xpose.msra.mxu0 0
    %344 = vmatprep.subr.bf16.mxu0 0
    %345 = vmatpush2.bf16.xpose.msra.mxu0 0
    %346 = vmatprep.subr.bf16.mxu0 0
    %347 = vmatpush2.bf16.xpose.msra.mxu0 0
    %348 = vmatprep.subr.bf16.mxu0 0
    %349 = vmatpush2.bf16.xpose.msra.mxu0 0
    %350 = vmatprep.subr.bf16.mxu0 0
    %351 = vmatpush2.bf16.xpose.msra.mxu0 0
    %352 = vmatprep.subr.bf16.mxu0 0
    %353 = vmatpush2.bf16.xpose.msra.mxu0 0
    %354 = vmatprep.mubr.bf16.mxu0 0
    %355 = vmatmul.mubr.bf16.gmra.mxu0 %v317
    %v356 = vpop.f32.mrf.mxu0
    %v357 = vadd.f32 0.0, %v356
    %v358 = vpop.f32.mrf.mxu0
    %v359 = vpop.f32.mrf.mxu0
    %v360 = vpop.f32.mrf.mxu0
    %361 = vdwg.mxu0
    %363 = vrot.lane.b32.xlu0 %v209, 96
    %v364 = vpop.permute.xlu0 %363
    %v366 = vsel %vm217, %v209, 0
    %v369 = vsel %vm217, %v364, 0
    %371 = vmatprep.subr.bf16.mxu0 0
    %372 = vmatpush1.bf16.xpose.msra.mxu0 0
    %373 = vmatprep.subr.bf16.mxu0 0
    %374 = vmatpush1.bf16.xpose.msra.mxu0 0
    %375 = vmatprep.subr.bf16.mxu0 0
    %376 = vmatpush1.bf16.xpose.msra.mxu0 0
    %377 = vmatprep.subr.bf16.mxu0 0
    %378 = vmatpush1.bf16.xpose.msra.mxu0 0
    %379 = vmatprep.subr.bf16.mxu0 0
    %380 = vmatpush1.bf16.xpose.msra.mxu0 0
    %381 = vmatprep.subr.bf16.mxu0 0
    %382 = vmatpush1.bf16.xpose.msra.mxu0 0
    %383 = vmatprep.subr.bf16.mxu0 0
    %384 = vmatpush1.bf16.xpose.msra.mxu0 0
    %385 = vmatprep.subr.bf16.mxu0 0
    %386 = vmatpush1.bf16.xpose.msra.mxu0 %v369
    %387 = vmatprep.subr.bf16.mxu0 0
    %388 = vmatpush2.bf16.xpose.msra.mxu0 0
    %389 = vmatprep.subr.bf16.mxu0 0
    %390 = vmatpush2.bf16.xpose.msra.mxu0 0
    %391 = vmatprep.subr.bf16.mxu0 0
    %392 = vmatpush2.bf16.xpose.msra.mxu0 0
    %393 = vmatprep.subr.bf16.mxu0 0
    %394 = vmatpush2.bf16.xpose.msra.mxu0 0
    %395 = vmatprep.subr.bf16.mxu0 0
    %396 = vmatpush2.bf16.xpose.msra.mxu0 0
    %397 = vmatprep.subr.bf16.mxu0 0
    %398 = vmatpush2.bf16.xpose.msra.mxu0 0
    %399 = vmatprep.subr.bf16.mxu0 0
    %400 = vmatpush2.bf16.xpose.msra.mxu0 0
    %401 = vmatprep.subr.bf16.mxu0 0
    %402 = vmatpush2.bf16.xpose.msra.mxu0 0
    %403 = vmatprep.mubr.bf16.mxu0 0
    %404 = vmatmul.mubr.bf16.gmra.mxu0 %v366
    %v405 = vpop.f32.mrf.mxu0
    %v406 = vadd.f32 0.0, %v405
    %v407 = vpop.f32.mrf.mxu0
    %v408 = vpop.f32.mrf.mxu0
    %v409 = vpop.f32.mrf.mxu0
    %410 = vdwg.mxu0
    %412 = vrot.lane.b32.xlu0 %v210, 96
    %v413 = vpop.permute.xlu0 %412
    %v415 = vsel %vm217, %v210, 0
    %v418 = vsel %vm217, %v413, 0
    %420 = vmatprep.subr.bf16.mxu0 0
    %421 = vmatpush1.bf16.xpose.msra.mxu0 0
    %422 = vmatprep.subr.bf16.mxu0 0
    %423 = vmatpush1.bf16.xpose.msra.mxu0 0
    %424 = vmatprep.subr.bf16.mxu0 0
    %425 = vmatpush1.bf16.xpose.msra.mxu0 0
    %426 = vmatprep.subr.bf16.mxu0 0
    %427 = vmatpush1.bf16.xpose.msra.mxu0 0
    %428 = vmatprep.subr.bf16.mxu0 0
    %429 = vmatpush1.bf16.xpose.msra.mxu0 0
    %430 = vmatprep.subr.bf16.mxu0 0
    %431 = vmatpush1.bf16.xpose.msra.mxu0 0
    %432 = vmatprep.subr.bf16.mxu0 0
    %433 = vmatpush1.bf16.xpose.msra.mxu0 0
    %434 = vmatprep.subr.bf16.mxu0 0
    %435 = vmatpush1.bf16.xpose.msra.mxu0 %v418
    %436 = vmatprep.subr.bf16.mxu0 0
    %437 = vmatpush2.bf16.xpose.msra.mxu0 0
    %438 = vmatprep.subr.bf16.mxu0 0
    %439 = vmatpush2.bf16.xpose.msra.mxu0 0
    %440 = vmatprep.subr.bf16.mxu0 0
    %441 = vmatpush2.bf16.xpose.msra.mxu0 0
    %442 = vmatprep.subr.bf16.mxu0 0
    %443 = vmatpush2.bf16.xpose.msra.mxu0 0
    %444 = vmatprep.subr.bf16.mxu0 0
    %445 = vmatpush2.bf16.xpose.msra.mxu0 0
    %446 = vmatprep.subr.bf16.mxu0 0
    %447 = vmatpush2.bf16.xpose.msra.mxu0 0
    %448 = vmatprep.subr.bf16.mxu0 0
    %449 = vmatpush2.bf16.xpose.msra.mxu0 0
    %450 = vmatprep.subr.bf16.mxu0 0
    %451 = vmatpush2.bf16.xpose.msra.mxu0 0
    %452 = vmatprep.mubr.bf16.mxu0 0
    %453 = vmatmul.mubr.bf16.gmra.mxu0 %v415
    %v454 = vpop.f32.mrf.mxu0
    %v455 = vadd.f32 0.0, %v454
    %v456 = vpop.f32.mrf.mxu0
    %v457 = vpop.f32.mrf.mxu0
    %v458 = vpop.f32.mrf.mxu0
    %459 = vdwg.mxu0
    %461 = vrot.lane.b32.xlu0 %v211, 96
    %v462 = vpop.permute.xlu0 %461
    %v464 = vsel %vm217, %v211, 0
    %v467 = vsel %vm217, %v462, 0
    %469 = vmatprep.subr.bf16.mxu0 0
    %470 = vmatpush1.bf16.xpose.msra.mxu0 0
    %471 = vmatprep.subr.bf16.mxu0 0
    %472 = vmatpush1.bf16.xpose.msra.mxu0 0
    %473 = vmatprep.subr.bf16.mxu0 0
    %474 = vmatpush1.bf16.xpose.msra.mxu0 0
    %475 = vmatprep.subr.bf16.mxu0 0
    %476 = vmatpush1.bf16.xpose.msra.mxu0 0
    %477 = vmatprep.subr.bf16.mxu0 0
    %478 = vmatpush1.bf16.xpose.msra.mxu0 0
    %479 = vmatprep.subr.bf16.mxu0 0
    %480 = vmatpush1.bf16.xpose.msra.mxu0 0
    %481 = vmatprep.subr.bf16.mxu0 0
    %482 = vmatpush1.bf16.xpose.msra.mxu0 0
    %483 = vmatprep.subr.bf16.mxu0 0
    %484 = vmatpush1.bf16.xpose.msra.mxu0 %v467
    %485 = vmatprep.subr.bf16.mxu0 0
    %486 = vmatpush2.bf16.xpose.msra.mxu0 0
    %487 = vmatprep.subr.bf16.mxu0 0
    %488 = vmatpush2.bf16.xpose.msra.mxu0 0
    %489 = vmatprep.subr.bf16.mxu0 0
    %490 = vmatpush2.bf16.xpose.msra.mxu0 0
    %491 = vmatprep.subr.bf16.mxu0 0
    %492 = vmatpush2.bf16.xpose.msra.mxu0 0
    %493 = vmatprep.subr.bf16.mxu0 0
    %494 = vmatpush2.bf16.xpose.msra.mxu0 0
    %495 = vmatprep.subr.bf16.mxu0 0
    %496 = vmatpush2.bf16.xpose.msra.mxu0 0
    %497 = vmatprep.subr.bf16.mxu0 0
    %498 = vmatpush2.bf16.xpose.msra.mxu0 0
    %499 = vmatprep.subr.bf16.mxu0 0
    %500 = vmatpush2.bf16.xpose.msra.mxu0 0
    %501 = vmatprep.mubr.bf16.mxu0 0
    %502 = vmatmul.mubr.bf16.gmra.mxu0 %v464
    %v503 = vpop.f32.mrf.mxu0
    %v504 = vadd.f32 0.0, %v503
    %v505 = vpop.f32.mrf.mxu0
    %v506 = vpop.f32.mrf.mxu0
    %v507 = vpop.f32.mrf.mxu0
    %508 = vdwg.mxu0
    %510 = vrot.lane.b32.xlu0 %v212, 96
    %v511 = vpop.permute.xlu0 %510
    %v513 = vsel %vm217, %v212, 0
    %v516 = vsel %vm217, %v511, 0
    %518 = vmatprep.subr.bf16.mxu0 0
    %519 = vmatpush1.bf16.xpose.msra.mxu0 0
    %520 = vmatprep.subr.bf16.mxu0 0
    %521 = vmatpush1.bf16.xpose.msra.mxu0 0
    %522 = vmatprep.subr.bf16.mxu0 0
    %523 = vmatpush1.bf16.xpose.msra.mxu0 0
    %524 = vmatprep.subr.bf16.mxu0 0
    %525 = vmatpush1.bf16.xpose.msra.mxu0 0
    %526 = vmatprep.subr.bf16.mxu0 0
    %527 = vmatpush1.bf16.xpose.msra.mxu0 0
    %528 = vmatprep.subr.bf16.mxu0 0
    %529 = vmatpush1.bf16.xpose.msra.mxu0 0
    %530 = vmatprep.subr.bf16.mxu0 0
    %531 = vmatpush1.bf16.xpose.msra.mxu0 0
    %532 = vmatprep.subr.bf16.mxu0 0
    %533 = vmatpush1.bf16.xpose.msra.mxu0 %v516
    %534 = vmatprep.subr.bf16.mxu0 0
    %535 = vmatpush2.bf16.xpose.msra.mxu0 0
    %536 = vmatprep.subr.bf16.mxu0 0
    %537 = vmatpush2.bf16.xpose.msra.mxu0 0
    %538 = vmatprep.subr.bf16.mxu0 0
    %539 = vmatpush2.bf16.xpose.msra.mxu0 0
    %540 = vmatprep.subr.bf16.mxu0 0
    %541 = vmatpush2.bf16.xpose.msra.mxu0 0
    %542 = vmatprep.subr.bf16.mxu0 0
    %543 = vmatpush2.bf16.xpose.msra.mxu0 0
    %544 = vmatprep.subr.bf16.mxu0 0
    %545 = vmatpush2.bf16.xpose.msra.mxu0 0
    %546 = vmatprep.subr.bf16.mxu0 0
    %547 = vmatpush2.bf16.xpose.msra.mxu0 0
    %548 = vmatprep.subr.bf16.mxu0 0
    %549 = vmatpush2.bf16.xpose.msra.mxu0 0
    %550 = vmatprep.mubr.bf16.mxu0 0
    %551 = vmatmul.mubr.bf16.gmra.mxu0 %v513
    %v552 = vpop.f32.mrf.mxu0
    %v553 = vadd.f32 0.0, %v552
    %v554 = vpop.f32.mrf.mxu0
    %v555 = vpop.f32.mrf.mxu0
    %v556 = vpop.f32.mrf.mxu0
    %557 = vdwg.mxu0
    %559 = vrot.lane.b32.xlu0 %v213, 96
    %v560 = vpop.permute.xlu0 %559
    %v562 = vsel %vm217, %v213, 0
    %v565 = vsel %vm217, %v560, 0
    %567 = vmatprep.subr.bf16.mxu0 0
    %568 = vmatpush1.bf16.xpose.msra.mxu0 0
    %569 = vmatprep.subr.bf16.mxu0 0
    %570 = vmatpush1.bf16.xpose.msra.mxu0 0
    %571 = vmatprep.subr.bf16.mxu0 0
    %572 = vmatpush1.bf16.xpose.msra.mxu0 0
    %573 = vmatprep.subr.bf16.mxu0 0
    %574 = vmatpush1.bf16.xpose.msra.mxu0 0
    %575 = vmatprep.subr.bf16.mxu0 0
    %576 = vmatpush1.bf16.xpose.msra.mxu0 0
    %577 = vmatprep.subr.bf16.mxu0 0
    %578 = vmatpush1.bf16.xpose.msra.mxu0 0
    %579 = vmatprep.subr.bf16.mxu0 0
    %580 = vmatpush1.bf16.xpose.msra.mxu0 0
    %581 = vmatprep.subr.bf16.mxu0 0
    %582 = vmatpush1.bf16.xpose.msra.mxu0 %v565
    %583 = vmatprep.subr.bf16.mxu0 0
    %584 = vmatpush2.bf16.xpose.msra.mxu0 0
    %585 = vmatprep.subr.bf16.mxu0 0
    %586 = vmatpush2.bf16.xpose.msra.mxu0 0
    %587 = vmatprep.subr.bf16.mxu0 0
    %588 = vmatpush2.bf16.xpose.msra.mxu0 0
    %589 = vmatprep.subr.bf16.mxu0 0
    %590 = vmatpush2.bf16.xpose.msra.mxu0 0
    %591 = vmatprep.subr.bf16.mxu0 0
    %592 = vmatpush2.bf16.xpose.msra.mxu0 0
    %593 = vmatprep.subr.bf16.mxu0 0
    %594 = vmatpush2.bf16.xpose.msra.mxu0 0
    %595 = vmatprep.subr.bf16.mxu0 0
    %596 = vmatpush2.bf16.xpose.msra.mxu0 0
    %597 = vmatprep.subr.bf16.mxu0 0
    %598 = vmatpush2.bf16.xpose.msra.mxu0 0
    %599 = vmatprep.mubr.bf16.mxu0 0
    %600 = vmatmul.mubr.bf16.gmra.mxu0 %v562
    %v601 = vpop.f32.mrf.mxu0
    %v602 = vadd.f32 0.0, %v601
    %v603 = vpop.f32.mrf.mxu0
    %v604 = vpop.f32.mrf.mxu0
    %v605 = vpop.f32.mrf.mxu0
    %606 = vdwg.mxu0
    %v607 = vmul.f32 %v259, 0.35355338
    %v608 = vmul.f32 %v308, 0.35355338
    %v609 = vmul.f32 %v357, 0.35355338
    %v610 = vmul.f32 %v406, 0.35355338
    %v611 = vmul.f32 %v455, 0.35355338
    %v612 = vmul.f32 %v504, 0.35355338
    %v613 = vmul.f32 %v553, 0.35355338
    %v614 = vmul.f32 %v602, 0.35355338
    %v615 = vsel %vm65, 1, 0
    %vm616 = vcmp.eq.s32.totalorder %v615, 1
    %v617 = vsel %vm616, %v607, -10000.0
    %v618 = vsel %vm616, %v608, -10000.0
    %v619 = vsel %vm616, %v609, -10000.0
    %v620 = vsel %vm616, %v610, -10000.0
    %v621 = vsel %vm616, %v611, -10000.0
    %v622 = vsel %vm616, %v612, -10000.0
    %v623 = vsel %vm616, %v613, -10000.0
    %v624 = vsel %vm616, %v614, -10000.0
    %v625 = vsel %vm217, %v617, -inf
    %626 = vmax.xlane.f32.xlu0 %v625
    %v627 = vpop.xlane.xlu0 %626
    %v628 = vsel %vm217, %v618, -inf
    %629 = vmax.xlane.f32.xlu0 %v628
    %v630 = vpop.xlane.xlu0 %629
    %v631 = vsel %vm217, %v619, -inf
    %632 = vmax.xlane.f32.xlu0 %v631
    %v633 = vpop.xlane.xlu0 %632
    %v634 = vsel %vm217, %v620, -inf
    %635 = vmax.xlane.f32.xlu0 %v634
    %v636 = vpop.xlane.xlu0 %635
    %v637 = vsel %vm217, %v621, -inf
    %638 = vmax.xlane.f32.xlu0 %v637
    %v639 = vpop.xlane.xlu0 %638
    %v640 = vsel %vm217, %v622, -inf
    %641 = vmax.xlane.f32.xlu0 %v640
    %v642 = vpop.xlane.xlu0 %641
    %v643 = vsel %vm217, %v623, -inf
    %644 = vmax.xlane.f32.xlu0 %v643
    %v645 = vpop.xlane.xlu0 %644
    %v646 = vsel %vm217, %v624, -inf
    %647 = vmax.xlane.f32.xlu0 %v646
    %v648 = vpop.xlane.xlu0 %647
    %v649 = vsub.f32 %v617, %v627
    %v650 = vsub.f32 %v618, %v630
    %v651 = vsub.f32 %v619, %v633
    %v652 = vsub.f32 %v620, %v636
    %v653 = vsub.f32 %v621, %v639
    %v654 = vsub.f32 %v622, %v642
    %v655 = vsub.f32 %v623, %v645
    %v656 = vsub.f32 %v624, %v648
    %v657 = vmul.f32 %v649, 1.442695
    %v658 = vpow.pop %v657
    %v659 = vmul.f32 %v650, 1.442695
    %v660 = vpow.pop %v659
    %v661 = vmul.f32 %v651, 1.442695
    %v662 = vpow.pop %v661
    %v663 = vmul.f32 %v652, 1.442695
    %v664 = vpow.pop %v663
    %v665 = vmul.f32 %v653, 1.442695
    %v666 = vpow.pop %v665
    %v667 = vmul.f32 %v654, 1.442695
    %v668 = vpow.pop %v667
    %v669 = vmul.f32 %v655, 1.442695
    %v670 = vpow.pop %v669
    %v671 = vmul.f32 %v656, 1.442695
    %v672 = vpow.pop %v671
    %v673 = vsel %vm217, %v658, 0.0
    %674 = vadd.xlane.f32.xlu0 %v673
    %v675 = vpop.xlane.xlu0 %674
    %v676 = vsel %vm217, %v660, 0.0
    %677 = vadd.xlane.f32.xlu0 %v676
    %v678 = vpop.xlane.xlu0 %677
    %v679 = vsel %vm217, %v662, 0.0
    %680 = vadd.xlane.f32.xlu0 %v679
    %v681 = vpop.xlane.xlu0 %680
    %v682 = vsel %vm217, %v664, 0.0
    %683 = vadd.xlane.f32.xlu0 %v682
    %v684 = vpop.xlane.xlu0 %683
    %v685 = vsel %vm217, %v666, 0.0
    %686 = vadd.xlane.f32.xlu0 %v685
    %v687 = vpop.xlane.xlu0 %686
    %v688 = vsel %vm217, %v668, 0.0
    %689 = vadd.xlane.f32.xlu0 %v688
    %v690 = vpop.xlane.xlu0 %689
    %v691 = vsel %vm217, %v670, 0.0
    %692 = vadd.xlane.f32.xlu0 %v691
    %v693 = vpop.xlane.xlu0 %692
    %v694 = vsel %vm217, %v672, 0.0
    %695 = vadd.xlane.f32.xlu0 %v694
    %v696 = vpop.xlane.xlu0 %695
    %v697 = vrcp.pop %v675
    %v698 = vrcp.pop %v678
    %v699 = vrcp.pop %v681
    %v700 = vrcp.pop %v684
    %v701 = vrcp.pop %v687
    %v702 = vrcp.pop %v690
    %v703 = vrcp.pop %v693
    %v704 = vrcp.pop %v696
    %v705 = vmul.f32 %v658, %v697
    %v706 = vmul.f32 %v660, %v698
    %v707 = vmul.f32 %v662, %v699
    %v708 = vmul.f32 %v664, %v700
    %v709 = vmul.f32 %v666, %v701
    %v710 = vmul.f32 %v668, %v702
    %v711 = vmul.f32 %v670, %v703
    %v712 = vmul.f32 %v672, %v704
    %v713 = vpack.c.bf16 %v705, %v705
    %v714 = vpack.c.bf16 %v706, %v706
    %v715 = vpack.c.bf16 %v707, %v707
    %v716 = vpack.c.bf16 %v708, %v708
    %v717 = vpack.c.bf16 %v709, %v709
    %v718 = vpack.c.bf16 %v710, %v710
    %v719 = vpack.c.bf16 %v711, %v711
    %v720 = vpack.c.bf16 %v712, %v712
    %721 = vrot.lane.b32.xlu0 %v206, 64
    %v722 = vpop.permute.xlu0 %721
    %v724 = vsel %vm217, %v713, 0
    %vm726 = vcmask 1043456
    %v728 = vsel %vm726, %v722, 0
    %730 = vmatprep.subr.bf16.mxu0 0
    %731 = vmatpush1.bf16.msra.mxu0 0
    %732 = vmatprep.subr.bf16.mxu0 0
    %733 = vmatpush1.bf16.msra.mxu0 0
    %734 = vmatprep.subr.bf16.mxu0 0
    %735 = vmatpush1.bf16.msra.mxu0 0
    %736 = vmatprep.subr.bf16.mxu0 0
    %737 = vmatpush1.bf16.msra.mxu0 0
    %738 = vmatprep.subr.bf16.mxu0 0
    %739 = vmatpush1.bf16.msra.mxu0 0
    %740 = vmatprep.subr.bf16.mxu0 0
    %741 = vmatpush1.bf16.msra.mxu0 0
    %742 = vmatprep.subr.bf16.mxu0 0
    %743 = vmatpush1.bf16.msra.mxu0 0
    %744 = vmatprep.subr.bf16.mxu0 0
    %745 = vmatpush1.bf16.msra.mxu0 %v728
    %746 = vmatprep.subr.bf16.mxu0 0
    %747 = vmatpush2.bf16.msra.mxu0 0
    %748 = vmatprep.subr.bf16.mxu0 0
    %749 = vmatpush2.bf16.msra.mxu0 0
    %750 = vmatprep.subr.bf16.mxu0 0
    %751 = vmatpush2.bf16.msra.mxu0 0
    %752 = vmatprep.subr.bf16.mxu0 0
    %753 = vmatpush2.bf16.msra.mxu0 0
    %754 = vmatprep.subr.bf16.mxu0 0
    %755 = vmatpush2.bf16.msra.mxu0 0
    %756 = vmatprep.subr.bf16.mxu0 0
    %757 = vmatpush2.bf16.msra.mxu0 0
    %758 = vmatprep.subr.bf16.mxu0 0
    %759 = vmatpush2.bf16.msra.mxu0 0
    %760 = vmatprep.subr.bf16.mxu0 0
    %761 = vmatpush2.bf16.msra.mxu0 0
    %762 = vmatprep.mubr.bf16.mxu0 0
    %763 = vmatmul.mubr.bf16.gmra.mxu0 %v724
    %v764 = vpop.f32.mrf.mxu0
    %v765 = vadd.f32 0.0, %v764
    %v766 = vpop.f32.mrf.mxu0
    %v767 = vpop.f32.mrf.mxu0
    %v768 = vpop.f32.mrf.mxu0
    %769 = vdwg.mxu0
    %770 = vrot.lane.b32.xlu0 %v207, 64
    %v771 = vpop.permute.xlu0 %770
    %v773 = vsel %vm217, %v714, 0
    %v776 = vsel %vm726, %v771, 0
    %778 = vmatprep.subr.bf16.mxu0 0
    %779 = vmatpush1.bf16.msra.mxu0 0
    %780 = vmatprep.subr.bf16.mxu0 0
    %781 = vmatpush1.bf16.msra.mxu0 0
    %782 = vmatprep.subr.bf16.mxu0 0
    %783 = vmatpush1.bf16.msra.mxu0 0
    %784 = vmatprep.subr.bf16.mxu0 0
    %785 = vmatpush1.bf16.msra.mxu0 0
    %786 = vmatprep.subr.bf16.mxu0 0
    %787 = vmatpush1.bf16.msra.mxu0 0
    %788 = vmatprep.subr.bf16.mxu0 0
    %789 = vmatpush1.bf16.msra.mxu0 0
    %790 = vmatprep.subr.bf16.mxu0 0
    %791 = vmatpush1.bf16.msra.mxu0 0
    %792 = vmatprep.subr.bf16.mxu0 0
    %793 = vmatpush1.bf16.msra.mxu0 %v776
    %794 = vmatprep.subr.bf16.mxu0 0
    %795 = vmatpush2.bf16.msra.mxu0 0
    %796 = vmatprep.subr.bf16.mxu0 0
    %797 = vmatpush2.bf16.msra.mxu0 0
    %798 = vmatprep.subr.bf16.mxu0 0
    %799 = vmatpush2.bf16.msra.mxu0 0
    %800 = vmatprep.subr.bf16.mxu0 0
    %801 = vmatpush2.bf16.msra.mxu0 0
    %802 = vmatprep.subr.bf16.mxu0 0
    %803 = vmatpush2.bf16.msra.mxu0 0
    %804 = vmatprep.subr.bf16.mxu0 0
    %805 = vmatpush2.bf16.msra.mxu0 0
    %806 = vmatprep.subr.bf16.mxu0 0
    %807 = vmatpush2.bf16.msra.mxu0 0
    %808 = vmatprep.subr.bf16.mxu0 0
    %809 = vmatpush2.bf16.msra.mxu0 0
    %810 = vmatprep.mubr.bf16.mxu0 0
    %811 = vmatmul.mubr.bf16.gmra.mxu0 %v773
    %v812 = vpop.f32.mrf.mxu0
    %v813 = vadd.f32 0.0, %v812
    %v814 = vpop.f32.mrf.mxu0
    %v815 = vpop.f32.mrf.mxu0
    %v816 = vpop.f32.mrf.mxu0
    %817 = vdwg.mxu0
    %818 = vrot.lane.b32.xlu0 %v208, 64
    %v819 = vpop.permute.xlu0 %818
    %v821 = vsel %vm217, %v715, 0
    %v824 = vsel %vm726, %v819, 0
    %826 = vmatprep.subr.bf16.mxu0 0
    %827 = vmatpush1.bf16.msra.mxu0 0
    %828 = vmatprep.subr.bf16.mxu0 0
    %829 = vmatpush1.bf16.msra.mxu0 0
    %830 = vmatprep.subr.bf16.mxu0 0
    %831 = vmatpush1.bf16.msra.mxu0 0
    %832 = vmatprep.subr.bf16.mxu0 0
    %833 = vmatpush1.bf16.msra.mxu0 0
    %834 = vmatprep.subr.bf16.mxu0 0
    %835 = vmatpush1.bf16.msra.mxu0 0
    %836 = vmatprep.subr.bf16.mxu0 0
    %837 = vmatpush1.bf16.msra.mxu0 0
    %838 = vmatprep.subr.bf16.mxu0 0
    %839 = vmatpush1.bf16.msra.mxu0 0
    %840 = vmatprep.subr.bf16.mxu0 0
    %841 = vmatpush1.bf16.msra.mxu0 %v824
    %842 = vmatprep.subr.bf16.mxu0 0
    %843 = vmatpush2.bf16.msra.mxu0 0
    %844 = vmatprep.subr.bf16.mxu0 0
    %845 = vmatpush2.bf16.msra.mxu0 0
    %846 = vmatprep.subr.bf16.mxu0 0
    %847 = vmatpush2.bf16.msra.mxu0 0
    %848 = vmatprep.subr.bf16.mxu0 0
    %849 = vmatpush2.bf16.msra.mxu0 0
    %850 = vmatprep.subr.bf16.mxu0 0
    %851 = vmatpush2.bf16.msra.mxu0 0
    %852 = vmatprep.subr.bf16.mxu0 0
    %853 = vmatpush2.bf16.msra.mxu0 0
    %854 = vmatprep.subr.bf16.mxu0 0
    %855 = vmatpush2.bf16.msra.mxu0 0
    %856 = vmatprep.subr.bf16.mxu0 0
    %857 = vmatpush2.bf16.msra.mxu0 0
    %858 = vmatprep.mubr.bf16.mxu0 0
    %859 = vmatmul.mubr.bf16.gmra.mxu0 %v821
    %v860 = vpop.f32.mrf.mxu0
    %v861 = vadd.f32 0.0, %v860
    %v862 = vpop.f32.mrf.mxu0
    %v863 = vpop.f32.mrf.mxu0
    %v864 = vpop.f32.mrf.mxu0
    %865 = vdwg.mxu0
    %866 = vrot.lane.b32.xlu0 %v209, 64
    %v867 = vpop.permute.xlu0 %866
    %v869 = vsel %vm217, %v716, 0
    %v872 = vsel %vm726, %v867, 0
    %874 = vmatprep.subr.bf16.mxu0 0
    %875 = vmatpush1.bf16.msra.mxu0 0
    %876 = vmatprep.subr.bf16.mxu0 0
    %877 = vmatpush1.bf16.msra.mxu0 0
    %878 = vmatprep.subr.bf16.mxu0 0
    %879 = vmatpush1.bf16.msra.mxu0 0
    %880 = vmatprep.subr.bf16.mxu0 0
    %881 = vmatpush1.bf16.msra.mxu0 0
    %882 = vmatprep.subr.bf16.mxu0 0
    %883 = vmatpush1.bf16.msra.mxu0 0
    %884 = vmatprep.subr.bf16.mxu0 0
    %885 = vmatpush1.bf16.msra.mxu0 0
    %886 = vmatprep.subr.bf16.mxu0 0
    %887 = vmatpush1.bf16.msra.mxu0 0
    %888 = vmatprep.subr.bf16.mxu0 0
    %889 = vmatpush1.bf16.msra.mxu0 %v872
    %890 = vmatprep.subr.bf16.mxu0 0
    %891 = vmatpush2.bf16.msra.mxu0 0
    %892 = vmatprep.subr.bf16.mxu0 0
    %893 = vmatpush2.bf16.msra.mxu0 0
    %894 = vmatprep.subr.bf16.mxu0 0
    %895 = vmatpush2.bf16.msra.mxu0 0
    %896 = vmatprep.subr.bf16.mxu0 0
    %897 = vmatpush2.bf16.msra.mxu0 0
    %898 = vmatprep.subr.bf16.mxu0 0
    %899 = vmatpush2.bf16.msra.mxu0 0
    %900 = vmatprep.subr.bf16.mxu0 0
    %901 = vmatpush2.bf16.msra.mxu0 0
    %902 = vmatprep.subr.bf16.mxu0 0
    %903 = vmatpush2.bf16.msra.mxu0 0
    %904 = vmatprep.subr.bf16.mxu0 0
    %905 = vmatpush2.bf16.msra.mxu0 0
    %906 = vmatprep.mubr.bf16.mxu0 0
    %907 = vmatmul.mubr.bf16.gmra.mxu0 %v869
    %v908 = vpop.f32.mrf.mxu0
    %v909 = vadd.f32 0.0, %v908
    %v910 = vpop.f32.mrf.mxu0
    %v911 = vpop.f32.mrf.mxu0
    %v912 = vpop.f32.mrf.mxu0
    %913 = vdwg.mxu0
    %914 = vrot.lane.b32.xlu0 %v210, 64
    %v915 = vpop.permute.xlu0 %914
    %v917 = vsel %vm217, %v717, 0
    %v920 = vsel %vm726, %v915, 0
    %922 = vmatprep.subr.bf16.mxu0 0
    %923 = vmatpush1.bf16.msra.mxu0 0
    %924 = vmatprep.subr.bf16.mxu0 0
    %925 = vmatpush1.bf16.msra.mxu0 0
    %926 = vmatprep.subr.bf16.mxu0 0
    %927 = vmatpush1.bf16.msra.mxu0 0
    %928 = vmatprep.subr.bf16.mxu0 0
    %929 = vmatpush1.bf16.msra.mxu0 0
    %930 = vmatprep.subr.bf16.mxu0 0
    %931 = vmatpush1.bf16.msra.mxu0 0
    %932 = vmatprep.subr.bf16.mxu0 0
    %933 = vmatpush1.bf16.msra.mxu0 0
    %934 = vmatprep.subr.bf16.mxu0 0
    %935 = vmatpush1.bf16.msra.mxu0 0
    %936 = vmatprep.subr.bf16.mxu0 0
    %937 = vmatpush1.bf16.msra.mxu0 %v920
    %938 = vmatprep.subr.bf16.mxu0 0
    %939 = vmatpush2.bf16.msra.mxu0 0
    %940 = vmatprep.subr.bf16.mxu0 0
    %941 = vmatpush2.bf16.msra.mxu0 0
    %942 = vmatprep.subr.bf16.mxu0 0
    %943 = vmatpush2.bf16.msra.mxu0 0
    %944 = vmatprep.subr.bf16.mxu0 0
    %945 = vmatpush2.bf16.msra.mxu0 0
    %946 = vmatprep.subr.bf16.mxu0 0
    %947 = vmatpush2.bf16.msra.mxu0 0
    %948 = vmatprep.subr.bf16.mxu0 0
    %949 = vmatpush2.bf16.msra.mxu0 0
    %950 = vmatprep.subr.bf16.mxu0 0
    %951 = vmatpush2.bf16.msra.mxu0 0
    %952 = vmatprep.subr.bf16.mxu0 0
    %953 = vmatpush2.bf16.msra.mxu0 0
    %954 = vmatprep.mubr.bf16.mxu0 0
    %955 = vmatmul.mubr.bf16.gmra.mxu0 %v917
    %v956 = vpop.f32.mrf.mxu0
    %v957 = vadd.f32 0.0, %v956
    %v958 = vpop.f32.mrf.mxu0
    %v959 = vpop.f32.mrf.mxu0
    %v960 = vpop.f32.mrf.mxu0
    %961 = vdwg.mxu0
    %962 = vrot.lane.b32.xlu0 %v211, 64
    %v963 = vpop.permute.xlu0 %962
    %v965 = vsel %vm217, %v718, 0
    %v968 = vsel %vm726, %v963, 0
    %970 = vmatprep.subr.bf16.mxu0 0
    %971 = vmatpush1.bf16.msra.mxu0 0
    %972 = vmatprep.subr.bf16.mxu0 0
    %973 = vmatpush1.bf16.msra.mxu0 0
    %974 = vmatprep.subr.bf16.mxu0 0
    %975 = vmatpush1.bf16.msra.mxu0 0
    %976 = vmatprep.subr.bf16.mxu0 0
    %977 = vmatpush1.bf16.msra.mxu0 0
    %978 = vmatprep.subr.bf16.mxu0 0
    %979 = vmatpush1.bf16.msra.mxu0 0
    %980 = vmatprep.subr.bf16.mxu0 0
    %981 = vmatpush1.bf16.msra.mxu0 0
    %982 = vmatprep.subr.bf16.mxu0 0
    %983 = vmatpush1.bf16.msra.mxu0 0
    %984 = vmatprep.subr.bf16.mxu0 0
    %985 = vmatpush1.bf16.msra.mxu0 %v968
    %986 = vmatprep.subr.bf16.mxu0 0
    %987 = vmatpush2.bf16.msra.mxu0 0
    %988 = vmatprep.subr.bf16.mxu0 0
    %989 = vmatpush2.bf16.msra.mxu0 0
    %990 = vmatprep.subr.bf16.mxu0 0
    %991 = vmatpush2.bf16.msra.mxu0 0
    %992 = vmatprep.subr.bf16.mxu0 0
    %993 = vmatpush2.bf16.msra.mxu0 0
    %994 = vmatprep.subr.bf16.mxu0 0
    %995 = vmatpush2.bf16.msra.mxu0 0
    %996 = vmatprep.subr.bf16.mxu0 0
    %997 = vmatpush2.bf16.msra.mxu0 0
    %998 = vmatprep.subr.bf16.mxu0 0
    %999 = vmatpush2.bf16.msra.mxu0 0
    %1000 = vmatprep.subr.bf16.mxu0 0
    %1001 = vmatpush2.bf16.msra.mxu0 0
    %1002 = vmatprep.mubr.bf16.mxu0 0
    %1003 = vmatmul.mubr.bf16.gmra.mxu0 %v965
    %v1004 = vpop.f32.mrf.mxu0
    %v1005 = vadd.f32 0.0, %v1004
    %v1006 = vpop.f32.mrf.mxu0
    %v1007 = vpop.f32.mrf.mxu0
    %v1008 = vpop.f32.mrf.mxu0
    %1009 = vdwg.mxu0
    %1010 = vrot.lane.b32.xlu0 %v212, 64
    %v1011 = vpop.permute.xlu0 %1010
    %v1013 = vsel %vm217, %v719, 0
    %v1016 = vsel %vm726, %v1011, 0
    %1018 = vmatprep.subr.bf16.mxu0 0
    %1019 = vmatpush1.bf16.msra.mxu0 0
    %1020 = vmatprep.subr.bf16.mxu0 0
    %1021 = vmatpush1.bf16.msra.mxu0 0
    %1022 = vmatprep.subr.bf16.mxu0 0
    %1023 = vmatpush1.bf16.msra.mxu0 0
    %1024 = vmatprep.subr.bf16.mxu0 0
    %1025 = vmatpush1.bf16.msra.mxu0 0
    %1026 = vmatprep.subr.bf16.mxu0 0
    %1027 = vmatpush1.bf16.msra.mxu0 0
    %1028 = vmatprep.subr.bf16.mxu0 0
    %1029 = vmatpush1.bf16.msra.mxu0 0
    %1030 = vmatprep.subr.bf16.mxu0 0
    %1031 = vmatpush1.bf16.msra.mxu0 0
    %1032 = vmatprep.subr.bf16.mxu0 0
    %1033 = vmatpush1.bf16.msra.mxu0 %v1016
    %1034 = vmatprep.subr.bf16.mxu0 0
    %1035 = vmatpush2.bf16.msra.mxu0 0
    %1036 = vmatprep.subr.bf16.mxu0 0
    %1037 = vmatpush2.bf16.msra.mxu0 0
    %1038 = vmatprep.subr.bf16.mxu0 0
    %1039 = vmatpush2.bf16.msra.mxu0 0
    %1040 = vmatprep.subr.bf16.mxu0 0
    %1041 = vmatpush2.bf16.msra.mxu0 0
    %1042 = vmatprep.subr.bf16.mxu0 0
    %1043 = vmatpush2.bf16.msra.mxu0 0
    %1044 = vmatprep.subr.bf16.mxu0 0
    %1045 = vmatpush2.bf16.msra.mxu0 0
    %1046 = vmatprep.subr.bf16.mxu0 0
    %1047 = vmatpush2.bf16.msra.mxu0 0
    %1048 = vmatprep.subr.bf16.mxu0 0
    %1049 = vmatpush2.bf16.msra.mxu0 0
    %1050 = vmatprep.mubr.bf16.mxu0 0
    %1051 = vmatmul.mubr.bf16.gmra.mxu0 %v1013
    %v1052 = vpop.f32.mrf.mxu0
    %v1053 = vadd.f32 0.0, %v1052
    %v1054 = vpop.f32.mrf.mxu0
    %v1055 = vpop.f32.mrf.mxu0
    %v1056 = vpop.f32.mrf.mxu0
    %1057 = vdwg.mxu0
    %1058 = vrot.lane.b32.xlu0 %v213, 64
    %v1059 = vpop.permute.xlu0 %1058
    %v1061 = vsel %vm217, %v720, 0
    %v1064 = vsel %vm726, %v1059, 0
    %1066 = vmatprep.subr.bf16.mxu0 0
    %1067 = vmatpush1.bf16.msra.mxu0 0
    %1068 = vmatprep.subr.bf16.mxu0 0
    %1069 = vmatpush1.bf16.msra.mxu0 0
    %1070 = vmatprep.subr.bf16.mxu0 0
    %1071 = vmatpush1.bf16.msra.mxu0 0
    %1072 = vmatprep.subr.bf16.mxu0 0
    %1073 = vmatpush1.bf16.msra.mxu0 0
    %1074 = vmatprep.subr.bf16.mxu0 0
    %1075 = vmatpush1.bf16.msra.mxu0 0
    %1076 = vmatprep.subr.bf16.mxu0 0
    %1077 = vmatpush1.bf16.msra.mxu0 0
    %1078 = vmatprep.subr.bf16.mxu0 0
    %1079 = vmatpush1.bf16.msra.mxu0 0
    %1080 = vmatprep.subr.bf16.mxu0 0
    %1081 = vmatpush1.bf16.msra.mxu0 %v1064
    %1082 = vmatprep.subr.bf16.mxu0 0
    %1083 = vmatpush2.bf16.msra.mxu0 0
    %1084 = vmatprep.subr.bf16.mxu0 0
    %1085 = vmatpush2.bf16.msra.mxu0 0
    %1086 = vmatprep.subr.bf16.mxu0 0
    %1087 = vmatpush2.bf16.msra.mxu0 0
    %1088 = vmatprep.subr.bf16.mxu0 0
    %1089 = vmatpush2.bf16.msra.mxu0 0
    %1090 = vmatprep.subr.bf16.mxu0 0
    %1091 = vmatpush2.bf16.msra.mxu0 0
    %1092 = vmatprep.subr.bf16.mxu0 0
    %1093 = vmatpush2.bf16.msra.mxu0 0
    %1094 = vmatprep.subr.bf16.mxu0 0
    %1095 = vmatpush2.bf16.msra.mxu0 0
    %1096 = vmatprep.subr.bf16.mxu0 0
    %1097 = vmatpush2.bf16.msra.mxu0 0
    %1098 = vmatprep.mubr.bf16.mxu0 0
    %1099 = vmatmul.mubr.bf16.gmra.mxu0 %v1061
    %v1100 = vpop.f32.mrf.mxu0
    %v1101 = vadd.f32 0.0, %v1100
    %v1102 = vpop.f32.mrf.mxu0
    %v1103 = vpop.f32.mrf.mxu0
    %v1104 = vpop.f32.mrf.mxu0
    %1105 = vdwg.mxu0
    %1108 = vrot.lane.b32.xlu0 %v813, 8
    %v1109 = vpop.permute.xlu0 %1108
    %1110 = vrot.lane.b32.xlu0 %v1005, 8
    %v1111 = vpop.permute.xlu0 %1110
    %1116 = vrot.lane.b32.xlu0 %v861, 16
    %v1117 = vpop.permute.xlu0 %1116
    %1118 = vrot.lane.b32.xlu0 %v1053, 16
    %v1119 = vpop.permute.xlu0 %1118
    %1124 = vrot.lane.b32.xlu0 %v909, 24
    %v1125 = vpop.permute.xlu0 %1124
    %1126 = vrot.lane.b32.xlu0 %v1101, 24
    %v1127 = vpop.permute.xlu0 %1126
    %v1130 = vsel %vm217, %v765, %v1109
    %v1131 = vsel %vm217, %v957, %v1111
    %vm1132 = vcmask 130048
    %v1133 = vsel %vm1132, %v1130, %v1117
    %v1134 = vsel %vm1132, %v1131, %v1119
    %vm1135 = vcmask 195584
    %v1136 = vsel %vm1135, %v1133, %v1125
    %v1137 = vsel %vm1135, %v1134, %v1127
    %v1138 = vld [vmem:[%s5] sm:$0xff]
    %v1139 = vld [vmem:[%s5 + $0x8] sm:$0xff]
    %v1140 = vld [vmem:[%s5 + $0x10] sm:$0xff]
    %v1141 = vld [vmem:[%s5 + $0x18] sm:$0xff]
    %v1142 = vld [vmem:[%s6] sm:$0x1]
    %v1143 = vpack.c.bf16 %v1137, %v1136
    %v1144 = vpack.c.bf16 %v1139, %v1138
    %v1145 = vpack.c.bf16 %v1141, %v1140
    %v1147 = vlaneseq
    %v1148 = vshrl.u32 %v1147, 7
    %v1149 = vsub.s32 0, %v1148
    %v1150 = vrot.slane %v1142, %v1149
    %v1153 = vsel %vm68, %v1143, 0
    %1155 = vmatprep.subr.bf16.mxu0 0
    %1156 = vmatpush1.bf16.msra.mxu0 0
    %1157 = vmatprep.subr.bf16.mxu0 0
    %1158 = vmatpush1.bf16.msra.mxu0 0
    %1159 = vmatprep.subr.bf16.mxu0 0
    %1160 = vmatpush1.bf16.msra.mxu0 0
    %1161 = vmatprep.subr.bf16.mxu0 0
    %1162 = vmatpush1.bf16.msra.mxu0 0
    %1163 = vmatprep.subr.bf16.mxu0 0
    %1164 = vmatpush1.bf16.msra.mxu0 0
    %1165 = vmatprep.subr.bf16.mxu0 0
    %1166 = vmatpush1.bf16.msra.mxu0 0
    %1167 = vmatprep.subr.bf16.mxu0 0
    %1168 = vmatpush1.bf16.msra.mxu0 %v1145
    %1169 = vmatprep.subr.bf16.mxu0 0
    %1170 = vmatpush1.bf16.msra.mxu0 %v1144
    %1171 = vmatprep.subr.bf16.mxu0 0
    %1172 = vmatpush2.bf16.msra.mxu0 0
    %1173 = vmatprep.subr.bf16.mxu0 0
    %1174 = vmatpush2.bf16.msra.mxu0 0
    %1175 = vmatprep.subr.bf16.mxu0 0
    %1176 = vmatpush2.bf16.msra.mxu0 0
    %1177 = vmatprep.subr.bf16.mxu0 0
    %1178 = vmatpush2.bf16.msra.mxu0 0
    %1179 = vmatprep.subr.bf16.mxu0 0
    %1180 = vmatpush2.bf16.msra.mxu0 0
    %1181 = vmatprep.subr.bf16.mxu0 0
    %1182 = vmatpush2.bf16.msra.mxu0 0
    %1183 = vmatprep.subr.bf16.mxu0 0
    %1184 = vmatpush2.bf16.msra.mxu0 0
    %1185 = vmatprep.subr.bf16.mxu0 0
    %1186 = vmatpush2.bf16.msra.mxu0 0
    %1187 = vmatprep.mubr.bf16.mxu0 0
    %1188 = vmatmul.mubr.bf16.gmra.mxu0 %v1153
    %v1189 = vpop.f32.mrf.mxu0
    %v1190 = vadd.f32 %v1150, %v1189
    %v1191 = vpop.f32.mrf.mxu0
    %v1192 = vpop.f32.mrf.mxu0
    %v1193 = vadd.f32 %v1150, %v1192
    %v1194 = vpop.f32.mrf.mxu0
    %1195 = vdwg.mxu0
    %v1196 = vadd.f32 %v59, %v1190
    %v1197 = vadd.f32 %v60, %v1193
    %v1198 = vld [vmem:[%s7] sm:$0x1]
    %v1199 = vld [vmem:[%s8] sm:$0x1]
    %v1200 = vsel %vm68, %v1196, 0.0
    %1201 = vadd.xlane.f32.xlu0 %v1200
    %v1202 = vpop.xlane.xlu0 %1201
    %v1203 = vsel %vm68, %v1197, 0.0
    %1204 = vadd.xlane.f32.xlu0 %v1203
    %v1205 = vpop.xlane.xlu0 %1204
    %v1206 = vmul.f32 %v1202, %v75
    %v1207 = vmul.f32 %v1205, %v75
    %v1208 = vsub.f32 %v1196, %v1206
    %v1209 = vsub.f32 %v1197, %v1207
    %v1210 = vmul.f32 %v1208, %v1208
    %v1211 = vmul.f32 %v1209, %v1209
    %v1212 = vsel %vm68, %v1210, 0.0
    %1213 = vadd.xlane.f32.xlu0 %v1212
    %v1214 = vpop.xlane.xlu0 %1213
    %v1215 = vsel %vm68, %v1211, 0.0
    %1216 = vadd.xlane.f32.xlu0 %v1215
    %v1217 = vpop.xlane.xlu0 %1216
    %v1218 = vmul.f32 %v1214, %v75
    %v1219 = vmul.f32 %v1217, %v75
    %v1220 = vadd.f32 %v1218, 1e-05
    %v1221 = vadd.f32 %v1219, 1e-05
    %v1222 = vrsqrt.pop %v1220
    %v1223 = vrsqrt.pop %v1221
    %v1224 = vmul.f32 %v1208, %v1222
    %v1225 = vmul.f32 %v1209, %v1223
    %v1227 = vlaneseq
    %v1228 = vshrl.u32 %v1227, 7
    %v1229 = vsub.s32 0, %v1228
    %v1230 = vrot.slane %v1198, %v1229
    %v1232 = vmul.f32 %v1224, %v1230
    %v1233 = vmul.f32 %v1225, %v1230
    %v1235 = vlaneseq
    %v1236 = vshrl.u32 %v1235, 7
    %v1237 = vsub.s32 0, %v1236
    %v1238 = vrot.slane %v1199, %v1237
    %v1240 = vadd.f32 %v1232, %v1238
    %v1241 = vadd.f32 %v1233, %v1238
    %v1242 = vld [vmem:[%s9] sm:$0xff]
    %v1243 = vld [vmem:[%s9 + $0x8] sm:$0xff]
    %v1244 = vld [vmem:[%s9 + $0x10] sm:$0xff]
    %v1245 = vld [vmem:[%s9 + $0x18] sm:$0xff]
    %v1246 = vld [vmem:[%s10] sm:$0x1]
    %v1247 = vpack.c.bf16 %v1241, %v1240
    %v1248 = vpack.c.bf16 %v1243, %v1242
    %v1249 = vpack.c.bf16 %v1245, %v1244
    %v1251 = vlaneseq
    %v1252 = vshrl.u32 %v1251, 7
    %v1253 = vsub.s32 0, %v1252
    %v1254 = vrot.slane %v1246, %v1253
    %v1257 = vsel %vm68, %v1247, 0
    %1259 = vmatprep.subr.bf16.mxu0 0
    %1260 = vmatpush1.bf16.msra.mxu0 0
    %1261 = vmatprep.subr.bf16.mxu0 0
    %1262 = vmatpush1.bf16.msra.mxu0 0
    %1263 = vmatprep.subr.bf16.mxu0 0
    %1264 = vmatpush1.bf16.msra.mxu0 0
    %1265 = vmatprep.subr.bf16.mxu0 0
    %1266 = vmatpush1.bf16.msra.mxu0 0
    %1267 = vmatprep.subr.bf16.mxu0 0
    %1268 = vmatpush1.bf16.msra.mxu0 0
    %1269 = vmatprep.subr.bf16.mxu0 0
    %1270 = vmatpush1.bf16.msra.mxu0 0
    %1271 = vmatprep.subr.bf16.mxu0 0
    %1272 = vmatpush1.bf16.msra.mxu0 %v1249
    %1273 = vmatprep.subr.bf16.mxu0 0
    %1274 = vmatpush1.bf16.msra.mxu0 %v1248
    %1275 = vmatprep.subr.bf16.mxu0 0
    %1276 = vmatpush2.bf16.msra.mxu0 0
    %1277 = vmatprep.subr.bf16.mxu0 0
    %1278 = vmatpush2.bf16.msra.mxu0 0
    %1279 = vmatprep.subr.bf16.mxu0 0
    %1280 = vmatpush2.bf16.msra.mxu0 0
    %1281 = vmatprep.subr.bf16.mxu0 0
    %1282 = vmatpush2.bf16.msra.mxu0 0
    %1283 = vmatprep.subr.bf16.mxu0 0
    %1284 = vmatpush2.bf16.msra.mxu0 0
    %1285 = vmatprep.subr.bf16.mxu0 0
    %1286 = vmatpush2.bf16.msra.mxu0 0
    %1287 = vmatprep.subr.bf16.mxu0 0
    %1288 = vmatpush2.bf16.msra.mxu0 0
    %1289 = vmatprep.subr.bf16.mxu0 0
    %1290 = vmatpush2.bf16.msra.mxu0 0
    %1291 = vmatprep.mubr.bf16.mxu0 0
    %1292 = vmatmul.mubr.bf16.gmra.mxu0 %v1257
    %v1293 = vpop.f32.mrf.mxu0
    %v1294 = vadd.f32 %v1254, %v1293
    %v1295 = vpop.f32.mrf.mxu0
    %v1296 = vpop.f32.mrf.mxu0
    %v1297 = vadd.f32 %v1254, %v1296
    %v1298 = vpop.f32.mrf.mxu0
    %1299 = vdwg.mxu0
    %v1300 = vmul.f32 %v1294, 0.5
    %v1301 = vmul.f32 %v1297, 0.5
    %v1302 = vmul.f32 %v1294, 0.044715
    %v1303 = vmul.f32 %v1297, 0.044715
    %v1304 = vmul.f32 %v1302, %v1294
    %v1305 = vmul.f32 %v1303, %v1297
    %v1306 = vmul.f32 %v1304, %v1294
    %v1307 = vmul.f32 %v1305, %v1297
    %v1308 = vadd.f32 %v1294, %v1306
    %v1309 = vadd.f32 %v1297, %v1307
    %v1310 = vmul.f32 %v1308, 0.7978846
    %v1311 = vmul.f32 %v1309, 0.7978846
    %v1312 = vtanh.pop %v1310
    %v1313 = vtanh.pop %v1311
    %v1314 = vadd.f32 %v1312, 1.0
    %v1315 = vadd.f32 %v1313, 1.0
    %v1316 = vmul.f32 %v1300, %v1314
    %v1317 = vmul.f32 %v1301, %v1315
    %v1318 = vld [vmem:[%s11] sm:$0xff]
    %v1319 = vld [vmem:[%s11 + $0x8] sm:$0xff]
    %v1320 = vld [vmem:[%s11 + $0x10] sm:$0xff]
    %v1321 = vld [vmem:[%s11 + $0x18] sm:$0xff]
    %v1322 = vld [vmem:[%s11 + $0x20] sm:$0xff]
    %v1323 = vld [vmem:[%s11 + $0x28] sm:$0xff]
    %v1324 = vld [vmem:[%s11 + $0x30] sm:$0xff]
    %v1325 = vld [vmem:[%s11 + $0x38] sm:$0xff]
    %v1326 = vld [vmem:[%s11 + $0x40] sm:$0xff]
    %v1327 = vld [vmem:[%s11 + $0x48] sm:$0xff]
    %v1328 = vld [vmem:[%s11 + $0x50] sm:$0xff]
    %v1329 = vld [vmem:[%s11 + $0x58] sm:$0xff]
    %v1330 = vld [vmem:[%s11 + $0x60] sm:$0xff]
    %v1331 = vld [vmem:[%s11 + $0x68] sm:$0xff]
    %v1332 = vld [vmem:[%s11 + $0x70] sm:$0xff]
    %v1333 = vld [vmem:[%s11 + $0x78] sm:$0xff]
    %v1334 = vld [vmem:[%s12] sm:$0x1]
    %v1335 = vpack.c.bf16 %v1317, %v1316
    %v1336 = vpack.c.bf16 %v1319, %v1318
    %v1337 = vpack.c.bf16 %v1321, %v1320
    %v1338 = vpack.c.bf16 %v1323, %v1322
    %v1339 = vpack.c.bf16 %v1325, %v1324
    %v1340 = vpack.c.bf16 %v1327, %v1326
    %v1341 = vpack.c.bf16 %v1329, %v1328
    %v1342 = vpack.c.bf16 %v1331, %v1330
    %v1343 = vpack.c.bf16 %v1333, %v1332
    %v1345 = vlaneseq
    %v1346 = vshrl.u32 %v1345, 7
    %v1347 = vsub.s32 0, %v1346
    %v1348 = vrot.slane %v1334, %v1347
    %1350 = vmatprep.subr.bf16.mxu0 0
    %1351 = vmatpush1.bf16.msra.mxu0 %v1343
    %1352 = vmatprep.subr.bf16.mxu0 0
    %1353 = vmatpush1.bf16.msra.mxu0 %v1342
    %1354 = vmatprep.subr.bf16.mxu0 0
    %1355 = vmatpush1.bf16.msra.mxu0 %v1341
    %1356 = vmatprep.subr.bf16.mxu0 0
    %1357 = vmatpush1.bf16.msra.mxu0 %v1340
    %1358 = vmatprep.subr.bf16.mxu0 0
    %1359 = vmatpush1.bf16.msra.mxu0 %v1339
    %1360 = vmatprep.subr.bf16.mxu0 0
    %1361 = vmatpush1.bf16.msra.mxu0 %v1338
    %1362 = vmatprep.subr.bf16.mxu0 0
    %1363 = vmatpush1.bf16.msra.mxu0 %v1337
    %1364 = vmatprep.subr.bf16.mxu0 0
    %1365 = vmatpush1.bf16.msra.mxu0 %v1336
    %1366 = vmatprep.subr.bf16.mxu0 0
    %1367 = vmatpush2.bf16.msra.mxu0 0
    %1368 = vmatprep.subr.bf16.mxu0 0
    %1369 = vmatpush2.bf16.msra.mxu0 0
    %1370 = vmatprep.subr.bf16.mxu0 0
    %1371 = vmatpush2.bf16.msra.mxu0 0
    %1372 = vmatprep.subr.bf16.mxu0 0
    %1373 = vmatpush2.bf16.msra.mxu0 0
    %1374 = vmatprep.subr.bf16.mxu0 0
    %1375 = vmatpush2.bf16.msra.mxu0 0
    %1376 = vmatprep.subr.bf16.mxu0 0
    %1377 = vmatpush2.bf16.msra.mxu0 0
    %1378 = vmatprep.subr.bf16.mxu0 0
    %1379 = vmatpush2.bf16.msra.mxu0 0
    %1380 = vmatprep.subr.bf16.mxu0 0
    %1381 = vmatpush2.bf16.msra.mxu0 0
    %1382 = vmatprep.mubr.bf16.mxu0 0
    %1383 = vmatmul.mubr.bf16.gmra.mxu0 %v1335
    %v1384 = vpop.f32.mrf.mxu0
    %v1385 = vadd.f32 %v1348, %v1384
    %v1386 = vpop.f32.mrf.mxu0
    %v1387 = vpop.f32.mrf.mxu0
    %v1388 = vadd.f32 %v1348, %v1387
    %v1389 = vpop.f32.mrf.mxu0
    %1390 = vdwg.mxu0
    %v1391 = vadd.f32 %v1196, %v1385
    %v1392 = vadd.f32 %v1197, %v1388
    %s1393 = scalar_lea.vmem %s1, 1
    %v1394 = vld [vmem:[%s1393] sm:$0x1]
    %s1395 = scalar_lea.vmem %s2, 1
    %v1396 = vld [vmem:[%s1395] sm:$0x1]
    %v1397 = vsel %vm68, %v1391, 0.0
    %1398 = vadd.xlane.f32.xlu0 %v1397
    %v1399 = vpop.xlane.xlu0 %1398
    %v1400 = vsel %vm68, %v1392, 0.0
    %1401 = vadd.xlane.f32.xlu0 %v1400
    %v1402 = vpop.xlane.xlu0 %1401
    %v1403 = vmul.f32 %v1399, %v75
    %v1404 = vmul.f32 %v1402, %v75
    %v1405 = vsub.f32 %v1391, %v1403
    %v1406 = vsub.f32 %v1392, %v1404
    %v1407 = vmul.f32 %v1405, %v1405
    %v1408 = vmul.f32 %v1406, %v1406
    %v1409 = vsel %vm68, %v1407, 0.0
    %1410 = vadd.xlane.f32.xlu0 %v1409
    %v1411 = vpop.xlane.xlu0 %1410
    %v1412 = vsel %vm68, %v1408, 0.0
    %1413 = vadd.xlane.f32.xlu0 %v1412
    %v1414 = vpop.xlane.xlu0 %1413
    %v1415 = vmul.f32 %v1411, %v75
    %v1416 = vmul.f32 %v1414, %v75
    %v1417 = vadd.f32 %v1415, 1e-05
    %v1418 = vadd.f32 %v1416, 1e-05
    %v1419 = vrsqrt.pop %v1417
    %v1420 = vrsqrt.pop %v1418
    %v1421 = vmul.f32 %v1405, %v1419
    %v1422 = vmul.f32 %v1406, %v1420
    %v1424 = vlaneseq
    %v1425 = vshrl.u32 %v1424, 7
    %v1426 = vsub.s32 0, %v1425
    %v1427 = vrot.slane %v1394, %v1426
    %v1429 = vmul.f32 %v1421, %v1427
    %v1430 = vmul.f32 %v1422, %v1427
    %v1432 = vlaneseq
    %v1433 = vshrl.u32 %v1432, 7
    %v1434 = vsub.s32 0, %v1433
    %v1435 = vrot.slane %v1396, %v1434
    %v1437 = vadd.f32 %v1429, %v1435
    %v1438 = vadd.f32 %v1430, %v1435
    %s1439 = scalar_lea.vmem %s3, 32
    %v1440 = vld [vmem:[%s1439] sm:$0xff]
    %v1441 = vld [vmem:[%s1439 + $0x8] sm:$0xff]
    %v1442 = vld [vmem:[%s1439 + $0x10] sm:$0xff]
    %v1443 = vld [vmem:[%s1439 + $0x18] sm:$0xff]
    %s1444 = scalar_lea.vmem %s4, 1
    %v1445 = vld [vmem:[%s1444] sm:$0x1]
    %v1446 = vpack.c.bf16 %v1438, %v1437
    %v1447 = vpack.c.bf16 %v1441, %v1440
    %v1448 = vpack.c.bf16 %v1443, %v1442
    %v1450 = vlaneseq
    %v1451 = vshrl.u32 %v1450, 7
    %v1452 = vsub.s32 0, %v1451
    %v1453 = vrot.slane %v1445, %v1452
    %v1456 = vsel %vm68, %v1446, 0
    %1458 = vmatprep.subr.bf16.mxu0 0
    %1459 = vmatpush1.bf16.msra.mxu0 0
    %1460 = vmatprep.subr.bf16.mxu0 0
    %1461 = vmatpush1.bf16.msra.mxu0 0
    %1462 = vmatprep.subr.bf16.mxu0 0
    %1463 = vmatpush1.bf16.msra.mxu0 0
    %1464 = vmatprep.subr.bf16.mxu0 0
    %1465 = vmatpush1.bf16.msra.mxu0 0
    %1466 = vmatprep.subr.bf16.mxu0 0
    %1467 = vmatpush1.bf16.msra.mxu0 0
    %1468 = vmatprep.subr.bf16.mxu0 0
    %1469 = vmatpush1.bf16.msra.mxu0 0
    %1470 = vmatprep.subr.bf16.mxu0 0
    %1471 = vmatpush1.bf16.msra.mxu0 %v1448
    %1472 = vmatprep.subr.bf16.mxu0 0
    %1473 = vmatpush1.bf16.msra.mxu0 %v1447
    %1474 = vmatprep.subr.bf16.mxu0 0
    %1475 = vmatpush2.bf16.msra.mxu0 0
    %1476 = vmatprep.subr.bf16.mxu0 0
    %1477 = vmatpush2.bf16.msra.mxu0 0
    %1478 = vmatprep.subr.bf16.mxu0 0
    %1479 = vmatpush2.bf16.msra.mxu0 0
    %1480 = vmatprep.subr.bf16.mxu0 0
    %1481 = vmatpush2.bf16.msra.mxu0 0
    %1482 = vmatprep.subr.bf16.mxu0 0
    %1483 = vmatpush2.bf16.msra.mxu0 0
    %1484 = vmatprep.subr.bf16.mxu0 0
    %1485 = vmatpush2.bf16.msra.mxu0 0
    %1486 = vmatprep.subr.bf16.mxu0 0
    %1487 = vmatpush2.bf16.msra.mxu0 0
    %1488 = vmatprep.subr.bf16.mxu0 0
    %1489 = vmatpush2.bf16.msra.mxu0 0
    %1490 = vmatprep.mubr.bf16.mxu0 0
    %1491 = vmatmul.mubr.bf16.gmra.mxu0 %v1456
    %v1492 = vpop.f32.mrf.mxu0
    %v1493 = vadd.f32 %v1453, %v1492
    %v1494 = vpop.f32.mrf.mxu0
    %v1495 = vpop.f32.mrf.mxu0
    %v1496 = vadd.f32 %v1453, %v1495
    %v1497 = vpop.f32.mrf.mxu0
    %1498 = vdwg.mxu0
    %1501 = vrot.lane.b32.xlu0 %v1493, 96
    %v1502 = vpop.permute.xlu0 %1501
    %1503 = vrot.lane.b32.xlu0 %v1496, 96
    %v1504 = vpop.permute.xlu0 %1503
    %s1507 = scalar_lea.vmem [#allocation4], 16
    %1508 = vst.msk [vmem:[%s1507] sm:$0xff] %vm68, %v1502
    %1509 = vst.msk [vmem:[%s1507 + $0x8] sm:$0xff] %vm68, %v1504
    %1510 = vrot.lane.b32.xlu0 %v1493, 64
    %v1511 = vpop.permute.xlu0 %1510
    %1512 = vrot.lane.b32.xlu0 %v1496, 64
    %v1513 = vpop.permute.xlu0 %1512
    %s1516 = scalar_lea.vmem [#allocation6], 16
    %1517 = vst.msk [vmem:[%s1516] sm:$0xff] %vm68, %v1511
    %1518 = vst.msk [vmem:[%s1516 + $0x8] sm:$0xff] %vm68, %v1513
    %1519 = vrot.lane.b32.xlu0 %v1493, 120
    %v1520 = vpop.permute.xlu0 %1519
    %1521 = vrot.lane.b32.xlu0 %v1496, 120
    %v1522 = vpop.permute.xlu0 %1521
    %1525 = vrot.lane.b32.xlu0 %v1493, 112
    %v1526 = vpop.permute.xlu0 %1525
    %1527 = vrot.lane.b32.xlu0 %v1496, 112
    %v1528 = vpop.permute.xlu0 %1527
    %1531 = vrot.lane.b32.xlu0 %v1493, 104
    %v1532 = vpop.permute.xlu0 %1531
    %1533 = vrot.lane.b32.xlu0 %v1496, 104
    %v1534 = vpop.permute.xlu0 %1533
    %v1537 = vpack.c.bf16 %v1493, %v1493
    %v1538 = vpack.c.bf16 %v1520, %v1520
    %v1539 = vpack.c.bf16 %v1526, %v1526
    %v1540 = vpack.c.bf16 %v1532, %v1532
    %v1541 = vpack.c.bf16 %v1496, %v1496
    %v1542 = vpack.c.bf16 %v1522, %v1522
    %v1543 = vpack.c.bf16 %v1528, %v1528
    %v1544 = vpack.c.bf16 %v1534, %v1534
    %1546 = vrot.lane.b32.xlu0 %v1537, 96
    %v1547 = vpop.permute.xlu0 %1546
    %v1549 = vsel %vm217, %v1537, 0
    %v1552 = vsel %vm217, %v1547, 0
    %1554 = vmatprep.subr.bf16.mxu0 0
    %1555 = vmatpush1.bf16.xpose.msra.mxu0 0
    %1556 = vmatprep.subr.bf16.mxu0 0
    %1557 = vmatpush1.bf16.xpose.msra.mxu0 0
    %1558 = vmatprep.subr.bf16.mxu0 0
    %1559 = vmatpush1.bf16.xpose.msra.mxu0 0
    %1560 = vmatprep.subr.bf16.mxu0 0
    %1561 = vmatpush1.bf16.xpose.msra.mxu0 0
    %1562 = vmatprep.subr.bf16.mxu0 0
    %1563 = vmatpush1.bf16.xpose.msra.mxu0 0
    %1564 = vmatprep.subr.bf16.mxu0 0
    %1565 = vmatpush1.bf16.xpose.msra.mxu0 0
    %1566 = vmatprep.subr.bf16.mxu0 0
    %1567 = vmatpush1.bf16.xpose.msra.mxu0 0
    %1568 = vmatprep.subr.bf16.mxu0 0
    %1569 = vmatpush1.bf16.xpose.msra.mxu0 %v1552
    %1570 = vmatprep.subr.bf16.mxu0 0
    %1571 = vmatpush2.bf16.xpose.msra.mxu0 0
    %1572 = vmatprep.subr.bf16.mxu0 0
    %1573 = vmatpush2.bf16.xpose.msra.mxu0 0
    %1574 = vmatprep.subr.bf16.mxu0 0
    %1575 = vmatpush2.bf16.xpose.msra.mxu0 0
    %1576 = vmatprep.subr.bf16.mxu0 0
    %1577 = vmatpush2.bf16.xpose.msra.mxu0 0
    %1578 = vmatprep.subr.bf16.mxu0 0
    %1579 = vmatpush2.bf16.xpose.msra.mxu0 0
    %1580 = vmatprep.subr.bf16.mxu0 0
    %1581 = vmatpush2.bf16.xpose.msra.mxu0 0
    %1582 = vmatprep.subr.bf16.mxu0 0
    %1583 = vmatpush2.bf16.xpose.msra.mxu0 0
    %1584 = vmatprep.subr.bf16.mxu0 0
    %1585 = vmatpush2.bf16.xpose.msra.mxu0 0
    %1586 = vmatprep.mubr.bf16.mxu0 0
    %1587 = vmatmul.mubr.bf16.gmra.mxu0 %v1549
    %v1588 = vpop.f32.mrf.mxu0
    %v1589 = vadd.f32 0.0, %v1588
    %v1590 = vpop.f32.mrf.mxu0
    %v1591 = vpop.f32.mrf.mxu0
    %v1592 = vpop.f32.mrf.mxu0
    %1593 = vdwg.mxu0
    %1595 = vrot.lane.b32.xlu0 %v1538, 96
    %v1596 = vpop.permute.xlu0 %1595
    %v1598 = vsel %vm217, %v1538, 0
    %v1601 = vsel %vm217, %v1596, 0
    %1603 = vmatprep.subr.bf16.mxu0 0
    %1604 = vmatpush1.bf16.xpose.msra.mxu0 0
    %1605 = vmatprep.subr.bf16.mxu0 0
    %1606 = vmatpush1.bf16.xpose.msra.mxu0 0
    %1607 = vmatprep.subr.bf16.mxu0 0
    %1608 = vmatpush1.bf16.xpose.msra.mxu0 0
    %1609 = vmatprep.subr.bf16.mxu0 0
    %1610 = vmatpush1.bf16.xpose.msra.mxu0 0
    %1611 = vmatprep.subr.bf16.mxu0 0
    %1612 = vmatpush1.bf16.xpose.msra.mxu0 0
    %1613 = vmatprep.subr.bf16.mxu0 0
    %1614 = vmatpush1.bf16.xpose.msra.mxu0 0
    %1615 = vmatprep.subr.bf16.mxu0 0
    %1616 = vmatpush1.bf16.xpose.msra.mxu0 0
    %1617 = vmatprep.subr.bf16.mxu0 0
    %1618 = vmatpush1.bf16.xpose.msra.mxu0 %v1601
    %1619 = vmatprep.subr.bf16.mxu0 0
    %1620 = vmatpush2.bf16.xpose.msra.mxu0 0
    %1621 = vmatprep.subr.bf16.mxu0 0
    %1622 = vmatpush2.bf16.xpose.msra.mxu0 0
    %1623 = vmatprep.subr.bf16.mxu0 0
    %1624 = vmatpush2.bf16.xpose.msra.mxu0 0
    %1625 = vmatprep.subr.bf16.mxu0 0
    %1626 = vmatpush2.bf16.xpose.msra.mxu0 0
    %1627 = vmatprep.subr.bf16.mxu0 0
    %1628 = vmatpush2.bf16.xpose.msra.mxu0 0
    %1629 = vmatprep.subr.bf16.mxu0 0
    %1630 = vmatpush2.bf16.xpose.msra.mxu0 0
    %1631 = vmatprep.subr.bf16.mxu0 0
    %1632 = vmatpush2.bf16.xpose.msra.mxu0 0
    %1633 = vmatprep.subr.bf16.mxu0 0
    %1634 = vmatpush2.bf16.xpose.msra.mxu0 0
    %1635 = vmatprep.mubr.bf16.mxu0 0
    %1636 = vmatmul.mubr.bf16.gmra.mxu0 %v1598
    %v1637 = vpop.f32.mrf.mxu0
    %v1638 = vadd.f32 0.0, %v1637
    %v1639 = vpop.f32.mrf.mxu0
    %v1640 = vpop.f32.mrf.mxu0
    %v1641 = vpop.f32.mrf.mxu0
    %1642 = vdwg.mxu0
    %1644 = vrot.lane.b32.xlu0 %v1539, 96
    %v1645 = vpop.permute.xlu0 %1644
    %v1647 = vsel %vm217, %v1539, 0
    %v1650 = vsel %vm217, %v1645, 0
    %1652 = vmatprep.subr.bf16.mxu0 0
    %1653 = vmatpush1.bf16.xpose.msra.mxu0 0
    %1654 = vmatprep.subr.bf16.mxu0 0
    %1655 = vmatpush1.bf16.xpose.msra.mxu0 0
    %1656 = vmatprep.subr.bf16.mxu0 0
    %1657 = vmatpush1.bf16.xpose.msra.mxu0 0
    %1658 = vmatprep.subr.bf16.mxu0 0
    %1659 = vmatpush1.bf16.xpose.msra.mxu0 0
    %1660 = vmatprep.subr.bf16.mxu0 0
    %1661 = vmatpush1.bf16.xpose.msra.mxu0 0
    %1662 = vmatprep.subr.bf16.mxu0 0
    %1663 = vmatpush1.bf16.xpose.msra.mxu0 0
    %1664 = vmatprep.subr.bf16.mxu0 0
    %1665 = vmatpush1.bf16.xpose.msra.mxu0 0
    %1666 = vmatprep.subr.bf16.mxu0 0
    %1667 = vmatpush1.bf16.xpose.msra.mxu0 %v1650
    %1668 = vmatprep.subr.bf16.mxu0 0
    %1669 = vmatpush2.bf16.xpose.msra.mxu0 0
    %1670 = vmatprep.subr.bf16.mxu0 0
    %1671 = vmatpush2.bf16.xpose.msra.mxu0 0
    %1672 = vmatprep.subr.bf16.mxu0 0
    %1673 = vmatpush2.bf16.xpose.msra.mxu0 0
    %1674 = vmatprep.subr.bf16.mxu0 0
    %1675 = vmatpush2.bf16.xpose.msra.mxu0 0
    %1676 = vmatprep.subr.bf16.mxu0 0
    %1677 = vmatpush2.bf16.xpose.msra.mxu0 0
    %1678 = vmatprep.subr.bf16.mxu0 0
    %1679 = vmatpush2.bf16.xpose.msra.mxu0 0
    %1680 = vmatprep.subr.bf16.mxu0 0
    %1681 = vmatpush2.bf16.xpose.msra.mxu0 0
    %1682 = vmatprep.subr.bf16.mxu0 0
    %1683 = vmatpush2.bf16.xpose.msra.mxu0 0
    %1684 = vmatprep.mubr.bf16.mxu0 0
    %1685 = vmatmul.mubr.bf16.gmra.mxu0 %v1647
    %v1686 = vpop.f32.mrf.mxu0
    %v1687 = vadd.f32 0.0, %v1686
    %v1688 = vpop.f32.mrf.mxu0
    %v1689 = vpop.f32.mrf.mxu0
    %v1690 = vpop.f32.mrf.mxu0
    %1691 = vdwg.mxu0
    %1693 = vrot.lane.b32.xlu0 %v1540, 96
    %v1694 = vpop.permute.xlu0 %1693
    %v1696 = vsel %vm217, %v1540, 0
    %v1699 = vsel %vm217, %v1694, 0
    %1701 = vmatprep.subr.bf16.mxu0 0
    %1702 = vmatpush1.bf16.xpose.msra.mxu0 0
    %1703 = vmatprep.subr.bf16.mxu0 0
    %1704 = vmatpush1.bf16.xpose.msra.mxu0 0
    %1705 = vmatprep.subr.bf16.mxu0 0
    %1706 = vmatpush1.bf16.xpose.msra.mxu0 0
    %1707 = vmatprep.subr.bf16.mxu0 0
    %1708 = vmatpush1.bf16.xpose.msra.mxu0 0
    %1709 = vmatprep.subr.bf16.mxu0 0
    %1710 = vmatpush1.bf16.xpose.msra.mxu0 0
    %1711 = vmatprep.subr.bf16.mxu0 0
    %1712 = vmatpush1.bf16.xpose.msra.mxu0 0
    %1713 = vmatprep.subr.bf16.mxu0 0
    %1714 = vmatpush1.bf16.xpose.msra.mxu0 0
    %1715 = vmatprep.subr.bf16.mxu0 0
    %1716 = vmatpush1.bf16.xpose.msra.mxu0 %v1699
    %1717 = vmatprep.subr.bf16.mxu0 0
    %1718 = vmatpush2.bf16.xpose.msra.mxu0 0
    %1719 = vmatprep.subr.bf16.mxu0 0
    %1720 = vmatpush2.bf16.xpose.msra.mxu0 0
    %1721 = vmatprep.subr.bf16.mxu0 0
    %1722 = vmatpush2.bf16.xpose.msra.mxu0 0
    %1723 = vmatprep.subr.bf16.mxu0 0
    %1724 = vmatpush2.bf16.xpose.msra.mxu0 0
    %1725 = vmatprep.subr.bf16.mxu0 0
    %1726 = vmatpush2.bf16.xpose.msra.mxu0 0
    %1727 = vmatprep.subr.bf16.mxu0 0
    %1728 = vmatpush2.bf16.xpose.msra.mxu0 0
    %1729 = vmatprep.subr.bf16.mxu0 0
    %1730 = vmatpush2.bf16.xpose.msra.mxu0 0
    %1731 = vmatprep.subr.bf16.mxu0 0
    %1732 = vmatpush2.bf16.xpose.msra.mxu0 0
    %1733 = vmatprep.mubr.bf16.mxu0 0
    %1734 = vmatmul.mubr.bf16.gmra.mxu0 %v1696
    %v1735 = vpop.f32.mrf.mxu0
    %v1736 = vadd.f32 0.0, %v1735
    %v1737 = vpop.f32.mrf.mxu0
    %v1738 = vpop.f32.mrf.mxu0
    %v1739 = vpop.f32.mrf.mxu0
    %1740 = vdwg.mxu0
    %1742 = vrot.lane.b32.xlu0 %v1541, 96
    %v1743 = vpop.permute.xlu0 %1742
    %v1745 = vsel %vm217, %v1541, 0
    %v1748 = vsel %vm217, %v1743, 0
    %1750 = vmatprep.subr.bf16.mxu0 0
    %1751 = vmatpush1.bf16.xpose.msra.mxu0 0
    %1752 = vmatprep.subr.bf16.mxu0 0
    %1753 = vmatpush1.bf16.xpose.msra.mxu0 0
    %1754 = vmatprep.subr.bf16.mxu0 0
    %1755 = vmatpush1.bf16.xpose.msra.mxu0 0
    %1756 = vmatprep.subr.bf16.mxu0 0
    %1757 = vmatpush1.bf16.xpose.msra.mxu0 0
    %1758 = vmatprep.subr.bf16.mxu0 0
    %1759 = vmatpush1.bf16.xpose.msra.mxu0 0
    %1760 = vmatprep.subr.bf16.mxu0 0
    %1761 = vmatpush1.bf16.xpose.msra.mxu0 0
    %1762 = vmatprep.subr.bf16.mxu0 0
    %1763 = vmatpush1.bf16.xpose.msra.mxu0 0
    %1764 = vmatprep.subr.bf16.mxu0 0
    %1765 = vmatpush1.bf16.xpose.msra.mxu0 %v1748
    %1766 = vmatprep.subr.bf16.mxu0 0
    %1767 = vmatpush2.bf16.xpose.msra.mxu0 0
    %1768 = vmatprep.subr.bf16.mxu0 0
    %1769 = vmatpush2.bf16.xpose.msra.mxu0 0
    %1770 = vmatprep.subr.bf16.mxu0 0
    %1771 = vmatpush2.bf16.xpose.msra.mxu0 0
    %1772 = vmatprep.subr.bf16.mxu0 0
    %1773 = vmatpush2.bf16.xpose.msra.mxu0 0
    %1774 = vmatprep.subr.bf16.mxu0 0
    %1775 = vmatpush2.bf16.xpose.msra.mxu0 0
    %1776 = vmatprep.subr.bf16.mxu0 0
    %1777 = vmatpush2.bf16.xpose.msra.mxu0 0
    %1778 = vmatprep.subr.bf16.mxu0 0
    %1779 = vmatpush2.bf16.xpose.msra.mxu0 0
    %1780 = vmatprep.subr.bf16.mxu0 0
    %1781 = vmatpush2.bf16.xpose.msra.mxu0 0
    %1782 = vmatprep.mubr.bf16.mxu0 0
    %1783 = vmatmul.mubr.bf16.gmra.mxu0 %v1745
    %v1784 = vpop.f32.mrf.mxu0
    %v1785 = vadd.f32 0.0, %v1784
    %v1786 = vpop.f32.mrf.mxu0
    %v1787 = vpop.f32.mrf.mxu0
    %v1788 = vpop.f32.mrf.mxu0
    %1789 = vdwg.mxu0
    %1791 = vrot.lane.b32.xlu0 %v1542, 96
    %v1792 = vpop.permute.xlu0 %1791
    %v1794 = vsel %vm217, %v1542, 0
    %v1797 = vsel %vm217, %v1792, 0
    %1799 = vmatprep.subr.bf16.mxu0 0
    %1800 = vmatpush1.bf16.xpose.msra.mxu0 0
    %1801 = vmatprep.subr.bf16.mxu0 0
    %1802 = vmatpush1.bf16.xpose.msra.mxu0 0
    %1803 = vmatprep.subr.bf16.mxu0 0
    %1804 = vmatpush1.bf16.xpose.msra.mxu0 0
    %1805 = vmatprep.subr.bf16.mxu0 0
    %1806 = vmatpush1.bf16.xpose.msra.mxu0 0
    %1807 = vmatprep.subr.bf16.mxu0 0
    %1808 = vmatpush1.bf16.xpose.msra.mxu0 0
    %1809 = vmatprep.subr.bf16.mxu0 0
    %1810 = vmatpush1.bf16.xpose.msra.mxu0 0
    %1811 = vmatprep.subr.bf16.mxu0 0
    %1812 = vmatpush1.bf16.xpose.msra.mxu0 0
    %1813 = vmatprep.subr.bf16.mxu0 0
    %1814 = vmatpush1.bf16.xpose.msra.mxu0 %v1797
    %1815 = vmatprep.subr.bf16.mxu0 0
    %1816 = vmatpush2.bf16.xpose.msra.mxu0 0
    %1817 = vmatprep.subr.bf16.mxu0 0
    %1818 = vmatpush2.bf16.xpose.msra.mxu0 0
    %1819 = vmatprep.subr.bf16.mxu0 0
    %1820 = vmatpush2.bf16.xpose.msra.mxu0 0
    %1821 = vmatprep.subr.bf16.mxu0 0
    %1822 = vmatpush2.bf16.xpose.msra.mxu0 0
    %1823 = vmatprep.subr.bf16.mxu0 0
    %1824 = vmatpush2.bf16.xpose.msra.mxu0 0
    %1825 = vmatprep.subr.bf16.mxu0 0
    %1826 = vmatpush2.bf16.xpose.msra.mxu0 0
    %1827 = vmatprep.subr.bf16.mxu0 0
    %1828 = vmatpush2.bf16.xpose.msra.mxu0 0
    %1829 = vmatprep.subr.bf16.mxu0 0
    %1830 = vmatpush2.bf16.xpose.msra.mxu0 0
    %1831 = vmatprep.mubr.bf16.mxu0 0
    %1832 = vmatmul.mubr.bf16.gmra.mxu0 %v1794
    %v1833 = vpop.f32.mrf.mxu0
    %v1834 = vadd.f32 0.0, %v1833
    %v1835 = vpop.f32.mrf.mxu0
    %v1836 = vpop.f32.mrf.mxu0
    %v1837 = vpop.f32.mrf.mxu0
    %1838 = vdwg.mxu0
    %1840 = vrot.lane.b32.xlu0 %v1543, 96
    %v1841 = vpop.permute.xlu0 %1840
    %v1843 = vsel %vm217, %v1543, 0
    %v1846 = vsel %vm217, %v1841, 0
    %1848 = vmatprep.subr.bf16.mxu0 0
    %1849 = vmatpush1.bf16.xpose.msra.mxu0 0
    %1850 = vmatprep.subr.bf16.mxu0 0
    %1851 = vmatpush1.bf16.xpose.msra.mxu0 0
    %1852 = vmatprep.subr.bf16.mxu0 0
    %1853 = vmatpush1.bf16.xpose.msra.mxu0 0
    %1854 = vmatprep.subr.bf16.mxu0 0
    %1855 = vmatpush1.bf16.xpose.msra.mxu0 0
    %1856 = vmatprep.subr.bf16.mxu0 0
    %1857 = vmatpush1.bf16.xpose.msra.mxu0 0
    %1858 = vmatprep.subr.bf16.mxu0 0
    %1859 = vmatpush1.bf16.xpose.msra.mxu0 0
    %1860 = vmatprep.subr.bf16.mxu0 0
    %1861 = vmatpush1.bf16.xpose.msra.mxu0 0
    %1862 = vmatprep.subr.bf16.mxu0 0
    %1863 = vmatpush1.bf16.xpose.msra.mxu0 %v1846
    %1864 = vmatprep.subr.bf16.mxu0 0
    %1865 = vmatpush2.bf16.xpose.msra.mxu0 0
    %1866 = vmatprep.subr.bf16.mxu0 0
    %1867 = vmatpush2.bf16.xpose.msra.mxu0 0
    %1868 = vmatprep.subr.bf16.mxu0 0
    %1869 = vmatpush2.bf16.xpose.msra.mxu0 0
    %1870 = vmatprep.subr.bf16.mxu0 0
    %1871 = vmatpush2.bf16.xpose.msra.mxu0 0
    %1872 = vmatprep.subr.bf16.mxu0 0
    %1873 = vmatpush2.bf16.xpose.msra.mxu0 0
    %1874 = vmatprep.subr.bf16.mxu0 0
    %1875 = vmatpush2.bf16.xpose.msra.mxu0 0
    %1876 = vmatprep.subr.bf16.mxu0 0
    %1877 = vmatpush2.bf16.xpose.msra.mxu0 0
    %1878 = vmatprep.subr.bf16.mxu0 0
    %1879 = vmatpush2.bf16.xpose.msra.mxu0 0
    %1880 = vmatprep.mubr.bf16.mxu0 0
    %1881 = vmatmul.mubr.bf16.gmra.mxu0 %v1843
    %v1882 = vpop.f32.mrf.mxu0
    %v1883 = vadd.f32 0.0, %v1882
    %v1884 = vpop.f32.mrf.mxu0
    %v1885 = vpop.f32.mrf.mxu0
    %v1886 = vpop.f32.mrf.mxu0
    %1887 = vdwg.mxu0
    %1889 = vrot.lane.b32.xlu0 %v1544, 96
    %v1890 = vpop.permute.xlu0 %1889
    %v1892 = vsel %vm217, %v1544, 0
    %v1895 = vsel %vm217, %v1890, 0
    %1897 = vmatprep.subr.bf16.mxu0 0
    %1898 = vmatpush1.bf16.xpose.msra.mxu0 0
    %1899 = vmatprep.subr.bf16.mxu0 0
    %1900 = vmatpush1.bf16.xpose.msra.mxu0 0
    %1901 = vmatprep.subr.bf16.mxu0 0
    %1902 = vmatpush1.bf16.xpose.msra.mxu0 0
    %1903 = vmatprep.subr.bf16.mxu0 0
    %1904 = vmatpush1.bf16.xpose.msra.mxu0 0
    %1905 = vmatprep.subr.bf16.mxu0 0
    %1906 = vmatpush1.bf16.xpose.msra.mxu0 0
    %1907 = vmatprep.subr.bf16.mxu0 0
    %1908 = vmatpush1.bf16.xpose.msra.mxu0 0
    %1909 = vmatprep.subr.bf16.mxu0 0
    %1910 = vmatpush1.bf16.xpose.msra.mxu0 0
    %1911 = vmatprep.subr.bf16.mxu0 0
    %1912 = vmatpush1.bf16.xpose.msra.mxu0 %v1895
    %1913 = vmatprep.subr.bf16.mxu0 0
    %1914 = vmatpush2.bf16.xpose.msra.mxu0 0
    %1915 = vmatprep.subr.bf16.mxu0 0
    %1916 = vmatpush2.bf16.xpose.msra.mxu0 0
    %1917 = vmatprep.subr.bf16.mxu0 0
    %1918 = vmatpush2.bf16.xpose.msra.mxu0 0
    %1919 = vmatprep.subr.bf16.mxu0 0
    %1920 = vmatpush2.bf16.xpose.msra.mxu0 0
    %1921 = vmatprep.subr.bf16.mxu0 0
    %1922 = vmatpush2.bf16.xpose.msra.mxu0 0
    %1923 = vmatprep.subr.bf16.mxu0 0
    %1924 = vmatpush2.bf16.xpose.msra.mxu0 0
    %1925 = vmatprep.subr.bf16.mxu0 0
    %1926 = vmatpush2.bf16.xpose.msra.mxu0 0
    %1927 = vmatprep.subr.bf16.mxu0 0
    %1928 = vmatpush2.bf16.xpose.msra.mxu0 0
    %1929 = vmatprep.mubr.bf16.mxu0 0
    %1930 = vmatmul.mubr.bf16.gmra.mxu0 %v1892
    %v1931 = vpop.f32.mrf.mxu0
    %v1932 = vadd.f32 0.0, %v1931
    %v1933 = vpop.f32.mrf.mxu0
    %v1934 = vpop.f32.mrf.mxu0
    %v1935 = vpop.f32.mrf.mxu0
    %1936 = vdwg.mxu0
    %v1937 = vmul.f32 %v1589, 0.35355338
    %v1938 = vmul.f32 %v1638, 0.35355338
    %v1939 = vmul.f32 %v1687, 0.35355338
    %v1940 = vmul.f32 %v1736, 0.35355338
    %v1941 = vmul.f32 %v1785, 0.35355338
    %v1942 = vmul.f32 %v1834, 0.35355338
    %v1943 = vmul.f32 %v1883, 0.35355338
    %v1944 = vmul.f32 %v1932, 0.35355338
    %v1945 = vsel %vm616, %v1937, -10000.0
    %v1946 = vsel %vm616, %v1938, -10000.0
    %v1947 = vsel %vm616, %v1939, -10000.0
    %v1948 = vsel %vm616, %v1940, -10000.0
    %v1949 = vsel %vm616, %v1941, -10000.0
    %v1950 = vsel %vm616, %v1942, -10000.0
    %v1951 = vsel %vm616, %v1943, -10000.0
    %v1952 = vsel %vm616, %v1944, -10000.0
    %v1953 = vsel %vm217, %v1945, -inf
    %1954 = vmax.xlane.f32.xlu0 %v1953
    %v1955 = vpop.xlane.xlu0 %1954
    %v1956 = vsel %vm217, %v1946, -inf
    %1957 = vmax.xlane.f32.xlu0 %v1956
    %v1958 = vpop.xlane.xlu0 %1957
    %v1959 = vsel %vm217, %v1947, -inf
    %1960 = vmax.xlane.f32.xlu0 %v1959
    %v1961 = vpop.xlane.xlu0 %1960
    %v1962 = vsel %vm217, %v1948, -inf
    %1963 = vmax.xlane.f32.xlu0 %v1962
    %v1964 = vpop.xlane.xlu0 %1963
    %v1965 = vsel %vm217, %v1949, -inf
    %1966 = vmax.xlane.f32.xlu0 %v1965
    %v1967 = vpop.xlane.xlu0 %1966
    %v1968 = vsel %vm217, %v1950, -inf
    %1969 = vmax.xlane.f32.xlu0 %v1968
    %v1970 = vpop.xlane.xlu0 %1969
    %v1971 = vsel %vm217, %v1951, -inf
    %1972 = vmax.xlane.f32.xlu0 %v1971
    %v1973 = vpop.xlane.xlu0 %1972
    %v1974 = vsel %vm217, %v1952, -inf
    %1975 = vmax.xlane.f32.xlu0 %v1974
    %v1976 = vpop.xlane.xlu0 %1975
    %v1977 = vsub.f32 %v1945, %v1955
    %v1978 = vsub.f32 %v1946, %v1958
    %v1979 = vsub.f32 %v1947, %v1961
    %v1980 = vsub.f32 %v1948, %v1964
    %v1981 = vsub.f32 %v1949, %v1967
    %v1982 = vsub.f32 %v1950, %v1970
    %v1983 = vsub.f32 %v1951, %v1973
    %v1984 = vsub.f32 %v1952, %v1976
    %v1985 = vmul.f32 %v1977, 1.442695
    %v1986 = vpow.pop %v1985
    %v1987 = vmul.f32 %v1978, 1.442695
    %v1988 = vpow.pop %v1987
    %v1989 = vmul.f32 %v1979, 1.442695
    %v1990 = vpow.pop %v1989
    %v1991 = vmul.f32 %v1980, 1.442695
    %v1992 = vpow.pop %v1991
    %v1993 = vmul.f32 %v1981, 1.442695
    %v1994 = vpow.pop %v1993
    %v1995 = vmul.f32 %v1982, 1.442695
    %v1996 = vpow.pop %v1995
    %v1997 = vmul.f32 %v1983, 1.442695
    %v1998 = vpow.pop %v1997
    %v1999 = vmul.f32 %v1984, 1.442695
    %v2000 = vpow.pop %v1999
    %v2001 = vsel %vm217, %v1986, 0.0
    %2002 = vadd.xlane.f32.xlu0 %v2001
    %v2003 = vpop.xlane.xlu0 %2002
    %v2004 = vsel %vm217, %v1988, 0.0
    %2005 = vadd.xlane.f32.xlu0 %v2004
    %v2006 = vpop.xlane.xlu0 %2005
    %v2007 = vsel %vm217, %v1990, 0.0
    %2008 = vadd.xlane.f32.xlu0 %v2007
    %v2009 = vpop.xlane.xlu0 %2008
    %v2010 = vsel %vm217, %v1992, 0.0
    %2011 = vadd.xlane.f32.xlu0 %v2010
    %v2012 = vpop.xlane.xlu0 %2011
    %v2013 = vsel %vm217, %v1994, 0.0
    %2014 = vadd.xlane.f32.xlu0 %v2013
    %v2015 = vpop.xlane.xlu0 %2014
    %v2016 = vsel %vm217, %v1996, 0.0
    %2017 = vadd.xlane.f32.xlu0 %v2016
    %v2018 = vpop.xlane.xlu0 %2017
    %v2019 = vsel %vm217, %v1998, 0.0
    %2020 = vadd.xlane.f32.xlu0 %v2019
    %v2021 = vpop.xlane.xlu0 %2020
    %v2022 = vsel %vm217, %v2000, 0.0
    %2023 = vadd.xlane.f32.xlu0 %v2022
    %v2024 = vpop.xlane.xlu0 %2023
    %v2025 = vrcp.pop %v2003
    %v2026 = vrcp.pop %v2006
    %v2027 = vrcp.pop %v2009
    %v2028 = vrcp.pop %v2012
    %v2029 = vrcp.pop %v2015
    %v2030 = vrcp.pop %v2018
    %v2031 = vrcp.pop %v2021
    %v2032 = vrcp.pop %v2024
    %v2033 = vmul.f32 %v1986, %v2025
    %v2034 = vmul.f32 %v1988, %v2026
    %v2035 = vmul.f32 %v1990, %v2027
    %v2036 = vmul.f32 %v1992, %v2028
    %v2037 = vmul.f32 %v1994, %v2029
    %v2038 = vmul.f32 %v1996, %v2030
    %v2039 = vmul.f32 %v1998, %v2031
    %v2040 = vmul.f32 %v2000, %v2032
    %v2041 = vpack.c.bf16 %v2033, %v2033
    %v2042 = vpack.c.bf16 %v2034, %v2034
    %v2043 = vpack.c.bf16 %v2035, %v2035
    %v2044 = vpack.c.bf16 %v2036, %v2036
    %v2045 = vpack.c.bf16 %v2037, %v2037
    %v2046 = vpack.c.bf16 %v2038, %v2038
    %v2047 = vpack.c.bf16 %v2039, %v2039
    %v2048 = vpack.c.bf16 %v2040, %v2040
    %2049 = vrot.lane.b32.xlu0 %v1537, 64
    %v2050 = vpop.permute.xlu0 %2049
    %v2052 = vsel %vm217, %v2041, 0
    %v2055 = vsel %vm726, %v2050, 0
    %2057 = vmatprep.subr.bf16.mxu0 0
    %2058 = vmatpush1.bf16.msra.mxu0 0
    %2059 = vmatprep.subr.bf16.mxu0 0
    %2060 = vmatpush1.bf16.msra.mxu0 0
    %2061 = vmatprep.subr.bf16.mxu0 0
    %2062 = vmatpush1.bf16.msra.mxu0 0
    %2063 = vmatprep.subr.bf16.mxu0 0
    %2064 = vmatpush1.bf16.msra.mxu0 0
    %2065 = vmatprep.subr.bf16.mxu0 0
    %2066 = vmatpush1.bf16.msra.mxu0 0
    %2067 = vmatprep.subr.bf16.mxu0 0
    %2068 = vmatpush1.bf16.msra.mxu0 0
    %2069 = vmatprep.subr.bf16.mxu0 0
    %2070 = vmatpush1.bf16.msra.mxu0 0
    %2071 = vmatprep.subr.bf16.mxu0 0
    %2072 = vmatpush1.bf16.msra.mxu0 %v2055
    %2073 = vmatprep.subr.bf16.mxu0 0
    %2074 = vmatpush2.bf16.msra.mxu0 0
    %2075 = vmatprep.subr.bf16.mxu0 0
    %2076 = vmatpush2.bf16.msra.mxu0 0
    %2077 = vmatprep.subr.bf16.mxu0 0
    %2078 = vmatpush2.bf16.msra.mxu0 0
    %2079 = vmatprep.subr.bf16.mxu0 0
    %2080 = vmatpush2.bf16.msra.mxu0 0
    %2081 = vmatprep.subr.bf16.mxu0 0
    %2082 = vmatpush2.bf16.msra.mxu0 0
    %2083 = vmatprep.subr.bf16.mxu0 0
    %2084 = vmatpush2.bf16.msra.mxu0 0
    %2085 = vmatprep.subr.bf16.mxu0 0
    %2086 = vmatpush2.bf16.msra.mxu0 0
    %2087 = vmatprep.subr.bf16.mxu0 0
    %2088 = vmatpush2.bf16.msra.mxu0 0
    %2089 = vmatprep.mubr.bf16.mxu0 0
    %2090 = vmatmul.mubr.bf16.gmra.mxu0 %v2052
    %v2091 = vpop.f32.mrf.mxu0
    %v2092 = vadd.f32 0.0, %v2091
    %v2093 = vpop.f32.mrf.mxu0
    %v2094 = vpop.f32.mrf.mxu0
    %v2095 = vpop.f32.mrf.mxu0
    %2096 = vdwg.mxu0
    %2097 = vrot.lane.b32.xlu0 %v1538, 64
    %v2098 = vpop.permute.xlu0 %2097
    %v2100 = vsel %vm217, %v2042, 0
    %v2103 = vsel %vm726, %v2098, 0
    %2105 = vmatprep.subr.bf16.mxu0 0
    %2106 = vmatpush1.bf16.msra.mxu0 0
    %2107 = vmatprep.subr.bf16.mxu0 0
    %2108 = vmatpush1.bf16.msra.mxu0 0
    %2109 = vmatprep.subr.bf16.mxu0 0
    %2110 = vmatpush1.bf16.msra.mxu0 0
    %2111 = vmatprep.subr.bf16.mxu0 0
    %2112 = vmatpush1.bf16.msra.mxu0 0
    %2113 = vmatprep.subr.bf16.mxu0 0
    %2114 = vmatpush1.bf16.msra.mxu0 0
    %2115 = vmatprep.subr.bf16.mxu0 0
    %2116 = vmatpush1.bf16.msra.mxu0 0
    %2117 = vmatprep.subr.bf16.mxu0 0
    %2118 = vmatpush1.bf16.msra.mxu0 0
    %2119 = vmatprep.subr.bf16.mxu0 0
    %2120 = vmatpush1.bf16.msra.mxu0 %v2103
    %2121 = vmatprep.subr.bf16.mxu0 0
    %2122 = vmatpush2.bf16.msra.mxu0 0
    %2123 = vmatprep.subr.bf16.mxu0 0
    %2124 = vmatpush2.bf16.msra.mxu0 0
    %2125 = vmatprep.subr.bf16.mxu0 0
    %2126 = vmatpush2.bf16.msra.mxu0 0
    %2127 = vmatprep.subr.bf16.mxu0 0
    %2128 = vmatpush2.bf16.msra.mxu0 0
    %2129 = vmatprep.subr.bf16.mxu0 0
    %2130 = vmatpush2.bf16.msra.mxu0 0
    %2131 = vmatprep.subr.bf16.mxu0 0
    %2132 = vmatpush2.bf16.msra.mxu0 0
    %2133 = vmatprep.subr.bf16.mxu0 0
    %2134 = vmatpush2.bf16.msra.mxu0 0
    %2135 = vmatprep.subr.bf16.mxu0 0
    %2136 = vmatpush2.bf16.msra.mxu0 0
    %2137 = vmatprep.mubr.bf16.mxu0 0
    %2138 = vmatmul.mubr.bf16.gmra.mxu0 %v2100
    %v2139 = vpop.f32.mrf.mxu0
    %v2140 = vadd.f32 0.0, %v2139
    %v2141 = vpop.f32.mrf.mxu0
    %v2142 = vpop.f32.mrf.mxu0
    %v2143 = vpop.f32.mrf.mxu0
    %2144 = vdwg.mxu0
    %2145 = vrot.lane.b32.xlu0 %v1539, 64
    %v2146 = vpop.permute.xlu0 %2145
    %v2148 = vsel %vm217, %v2043, 0
    %v2151 = vsel %vm726, %v2146, 0
    %2153 = vmatprep.subr.bf16.mxu0 0
    %2154 = vmatpush1.bf16.msra.mxu0 0
    %2155 = vmatprep.subr.bf16.mxu0 0
    %2156 = vmatpush1.bf16.msra.mxu0 0
    %2157 = vmatprep.subr.bf16.mxu0 0
    %2158 = vmatpush1.bf16.msra.mxu0 0
    %2159 = vmatprep.subr.bf16.mxu0 0
    %2160 = vmatpush1.bf16.msra.mxu0 0
    %2161 = vmatprep.subr.bf16.mxu0 0
    %2162 = vmatpush1.bf16.msra.mxu0 0
    %2163 = vmatprep.subr.bf16.mxu0 0
    %2164 = vmatpush1.bf16.msra.mxu0 0
    %2165 = vmatprep.subr.bf16.mxu0 0
    %2166 = vmatpush1.bf16.msra.mxu0 0
    %2167 = vmatprep.subr.bf16.mxu0 0
    %2168 = vmatpush1.bf16.msra.mxu0 %v2151
    %2169 = vmatprep.subr.bf16.mxu0 0
    %2170 = vmatpush2.bf16.msra.mxu0 0
    %2171 = vmatprep.subr.bf16.mxu0 0
    %2172 = vmatpush2.bf16.msra.mxu0 0
    %2173 = vmatprep.subr.bf16.mxu0 0
    %2174 = vmatpush2.bf16.msra.mxu0 0
    %2175 = vmatprep.subr.bf16.mxu0 0
    %2176 = vmatpush2.bf16.msra.mxu0 0
    %2177 = vmatprep.subr.bf16.mxu0 0
    %2178 = vmatpush2.bf16.msra.mxu0 0
    %2179 = vmatprep.subr.bf16.mxu0 0
    %2180 = vmatpush2.bf16.msra.mxu0 0
    %2181 = vmatprep.subr.bf16.mxu0 0
    %2182 = vmatpush2.bf16.msra.mxu0 0
    %2183 = vmatprep.subr.bf16.mxu0 0
    %2184 = vmatpush2.bf16.msra.mxu0 0
    %2185 = vmatprep.mubr.bf16.mxu0 0
    %2186 = vmatmul.mubr.bf16.gmra.mxu0 %v2148
    %v2187 = vpop.f32.mrf.mxu0
    %v2188 = vadd.f32 0.0, %v2187
    %v2189 = vpop.f32.mrf.mxu0
    %v2190 = vpop.f32.mrf.mxu0
    %v2191 = vpop.f32.mrf.mxu0
    %2192 = vdwg.mxu0
    %2193 = vrot.lane.b32.xlu0 %v1540, 64
    %v2194 = vpop.permute.xlu0 %2193
    %v2196 = vsel %vm217, %v2044, 0
    %v2199 = vsel %vm726, %v2194, 0
    %2201 = vmatprep.subr.bf16.mxu0 0
    %2202 = vmatpush1.bf16.msra.mxu0 0
    %2203 = vmatprep.subr.bf16.mxu0 0
    %2204 = vmatpush1.bf16.msra.mxu0 0
    %2205 = vmatprep.subr.bf16.mxu0 0
    %2206 = vmatpush1.bf16.msra.mxu0 0
    %2207 = vmatprep.subr.bf16.mxu0 0
    %2208 = vmatpush1.bf16.msra.mxu0 0
    %2209 = vmatprep.subr.bf16.mxu0 0
    %2210 = vmatpush1.bf16.msra.mxu0 0
    %2211 = vmatprep.subr.bf16.mxu0 0
    %2212 = vmatpush1.bf16.msra.mxu0 0
    %2213 = vmatprep.subr.bf16.mxu0 0
    %2214 = vmatpush1.bf16.msra.mxu0 0
    %2215 = vmatprep.subr.bf16.mxu0 0
    %2216 = vmatpush1.bf16.msra.mxu0 %v2199
    %2217 = vmatprep.subr.bf16.mxu0 0
    %2218 = vmatpush2.bf16.msra.mxu0 0
    %2219 = vmatprep.subr.bf16.mxu0 0
    %2220 = vmatpush2.bf16.msra.mxu0 0
    %2221 = vmatprep.subr.bf16.mxu0 0
    %2222 = vmatpush2.bf16.msra.mxu0 0
    %2223 = vmatprep.subr.bf16.mxu0 0
    %2224 = vmatpush2.bf16.msra.mxu0 0
    %2225 = vmatprep.subr.bf16.mxu0 0
    %2226 = vmatpush2.bf16.msra.mxu0 0
    %2227 = vmatprep.subr.bf16.mxu0 0
    %2228 = vmatpush2.bf16.msra.mxu0 0
    %2229 = vmatprep.subr.bf16.mxu0 0
    %2230 = vmatpush2.bf16.msra.mxu0 0
    %2231 = vmatprep.subr.bf16.mxu0 0
    %2232 = vmatpush2.bf16.msra.mxu0 0
    %2233 = vmatprep.mubr.bf16.mxu0 0
    %2234 = vmatmul.mubr.bf16.gmra.mxu0 %v2196
    %v2235 = vpop.f32.mrf.mxu0
    %v2236 = vadd.f32 0.0, %v2235
    %v2237 = vpop.f32.mrf.mxu0
    %v2238 = vpop.f32.mrf.mxu0
    %v2239 = vpop.f32.mrf.mxu0
    %2240 = vdwg.mxu0
    %2241 = vrot.lane.b32.xlu0 %v1541, 64
    %v2242 = vpop.permute.xlu0 %2241
    %v2244 = vsel %vm217, %v2045, 0
    %v2247 = vsel %vm726, %v2242, 0
    %2249 = vmatprep.subr.bf16.mxu0 0
    %2250 = vmatpush1.bf16.msra.mxu0 0
    %2251 = vmatprep.subr.bf16.mxu0 0
    %2252 = vmatpush1.bf16.msra.mxu0 0
    %2253 = vmatprep.subr.bf16.mxu0 0
    %2254 = vmatpush1.bf16.msra.mxu0 0
    %2255 = vmatprep.subr.bf16.mxu0 0
    %2256 = vmatpush1.bf16.msra.mxu0 0
    %2257 = vmatprep.subr.bf16.mxu0 0
    %2258 = vmatpush1.bf16.msra.mxu0 0
    %2259 = vmatprep.subr.bf16.mxu0 0
    %2260 = vmatpush1.bf16.msra.mxu0 0
    %2261 = vmatprep.subr.bf16.mxu0 0
    %2262 = vmatpush1.bf16.msra.mxu0 0
    %2263 = vmatprep.subr.bf16.mxu0 0
    %2264 = vmatpush1.bf16.msra.mxu0 %v2247
    %2265 = vmatprep.subr.bf16.mxu0 0
    %2266 = vmatpush2.bf16.msra.mxu0 0
    %2267 = vmatprep.subr.bf16.mxu0 0
    %2268 = vmatpush2.bf16.msra.mxu0 0
    %2269 = vmatprep.subr.bf16.mxu0 0
    %2270 = vmatpush2.bf16.msra.mxu0 0
    %2271 = vmatprep.subr.bf16.mxu0 0
    %2272 = vmatpush2.bf16.msra.mxu0 0
    %2273 = vmatprep.subr.bf16.mxu0 0
    %2274 = vmatpush2.bf16.msra.mxu0 0
    %2275 = vmatprep.subr.bf16.mxu0 0
    %2276 = vmatpush2.bf16.msra.mxu0 0
    %2277 = vmatprep.subr.bf16.mxu0 0
    %2278 = vmatpush2.bf16.msra.mxu0 0
    %2279 = vmatprep.subr.bf16.mxu0 0
    %2280 = vmatpush2.bf16.msra.mxu0 0
    %2281 = vmatprep.mubr.bf16.mxu0 0
    %2282 = vmatmul.mubr.bf16.gmra.mxu0 %v2244
    %v2283 = vpop.f32.mrf.mxu0
    %v2284 = vadd.f32 0.0, %v2283
    %v2285 = vpop.f32.mrf.mxu0
    %v2286 = vpop.f32.mrf.mxu0
    %v2287 = vpop.f32.mrf.mxu0
    %2288 = vdwg.mxu0
    %2289 = vrot.lane.b32.xlu0 %v1542, 64
    %v2290 = vpop.permute.xlu0 %2289
    %v2292 = vsel %vm217, %v2046, 0
    %v2295 = vsel %vm726, %v2290, 0
    %2297 = vmatprep.subr.bf16.mxu0 0
    %2298 = vmatpush1.bf16.msra.mxu0 0
    %2299 = vmatprep.subr.bf16.mxu0 0
    %2300 = vmatpush1.bf16.msra.mxu0 0
    %2301 = vmatprep.subr.bf16.mxu0 0
    %2302 = vmatpush1.bf16.msra.mxu0 0
    %2303 = vmatprep.subr.bf16.mxu0 0
    %2304 = vmatpush1.bf16.msra.mxu0 0
    %2305 = vmatprep.subr.bf16.mxu0 0
    %2306 = vmatpush1.bf16.msra.mxu0 0
    %2307 = vmatprep.subr.bf16.mxu0 0
    %2308 = vmatpush1.bf16.msra.mxu0 0
    %2309 = vmatprep.subr.bf16.mxu0 0
    %2310 = vmatpush1.bf16.msra.mxu0 0
    %2311 = vmatprep.subr.bf16.mxu0 0
    %2312 = vmatpush1.bf16.msra.mxu0 %v2295
    %2313 = vmatprep.subr.bf16.mxu0 0
    %2314 = vmatpush2.bf16.msra.mxu0 0
    %2315 = vmatprep.subr.bf16.mxu0 0
    %2316 = vmatpush2.bf16.msra.mxu0 0
    %2317 = vmatprep.subr.bf16.mxu0 0
    %2318 = vmatpush2.bf16.msra.mxu0 0
    %2319 = vmatprep.subr.bf16.mxu0 0
    %2320 = vmatpush2.bf16.msra.mxu0 0
    %2321 = vmatprep.subr.bf16.mxu0 0
    %2322 = vmatpush2.bf16.msra.mxu0 0
    %2323 = vmatprep.subr.bf16.mxu0 0
    %2324 = vmatpush2.bf16.msra.mxu0 0
    %2325 = vmatprep.subr.bf16.mxu0 0
    %2326 = vmatpush2.bf16.msra.mxu0 0
    %2327 = vmatprep.subr.bf16.mxu0 0
    %2328 = vmatpush2.bf16.msra.mxu0 0
    %2329 = vmatprep.mubr.bf16.mxu0 0
    %2330 = vmatmul.mubr.bf16.gmra.mxu0 %v2292
    %v2331 = vpop.f32.mrf.mxu0
    %v2332 = vadd.f32 0.0, %v2331
    %v2333 = vpop.f32.mrf.mxu0
    %v2334 = vpop.f32.mrf.mxu0
    %v2335 = vpop.f32.mrf.mxu0
    %2336 = vdwg.mxu0
    %2337 = vrot.lane.b32.xlu0 %v1543, 64
    %v2338 = vpop.permute.xlu0 %2337
    %v2340 = vsel %vm217, %v2047, 0
    %v2343 = vsel %vm726, %v2338, 0
    %2345 = vmatprep.subr.bf16.mxu0 0
    %2346 = vmatpush1.bf16.msra.mxu0 0
    %2347 = vmatprep.subr.bf16.mxu0 0
    %2348 = vmatpush1.bf16.msra.mxu0 0
    %2349 = vmatprep.subr.bf16.mxu0 0
    %2350 = vmatpush1.bf16.msra.mxu0 0
    %2351 = vmatprep.subr.bf16.mxu0 0
    %2352 = vmatpush1.bf16.msra.mxu0 0
    %2353 = vmatprep.subr.bf16.mxu0 0
    %2354 = vmatpush1.bf16.msra.mxu0 0
    %2355 = vmatprep.subr.bf16.mxu0 0
    %2356 = vmatpush1.bf16.msra.mxu0 0
    %2357 = vmatprep.subr.bf16.mxu0 0
    %2358 = vmatpush1.bf16.msra.mxu0 0
    %2359 = vmatprep.subr.bf16.mxu0 0
    %2360 = vmatpush1.bf16.msra.mxu0 %v2343
    %2361 = vmatprep.subr.bf16.mxu0 0
    %2362 = vmatpush2.bf16.msra.mxu0 0
    %2363 = vmatprep.subr.bf16.mxu0 0
    %2364 = vmatpush2.bf16.msra.mxu0 0
    %2365 = vmatprep.subr.bf16.mxu0 0
    %2366 = vmatpush2.bf16.msra.mxu0 0
    %2367 = vmatprep.subr.bf16.mxu0 0
    %2368 = vmatpush2.bf16.msra.mxu0 0
    %2369 = vmatprep.subr.bf16.mxu0 0
    %2370 = vmatpush2.bf16.msra.mxu0 0
    %2371 = vmatprep.subr.bf16.mxu0 0
    %2372 = vmatpush2.bf16.msra.mxu0 0
    %2373 = vmatprep.subr.bf16.mxu0 0
    %2374 = vmatpush2.bf16.msra.mxu0 0
    %2375 = vmatprep.subr.bf16.mxu0 0
    %2376 = vmatpush2.bf16.msra.mxu0 0
    %2377 = vmatprep.mubr.bf16.mxu0 0
    %2378 = vmatmul.mubr.bf16.gmra.mxu0 %v2340
    %v2379 = vpop.f32.mrf.mxu0
    %v2380 = vadd.f32 0.0, %v2379
    %v2381 = vpop.f32.mrf.mxu0
    %v2382 = vpop.f32.mrf.mxu0
    %v2383 = vpop.f32.mrf.mxu0
    %2384 = vdwg.mxu0
    %2385 = vrot.lane.b32.xlu0 %v1544, 64
    %v2386 = vpop.permute.xlu0 %2385
    %v2388 = vsel %vm217, %v2048, 0
    %v2391 = vsel %vm726, %v2386, 0
    %2393 = vmatprep.subr.bf16.mxu0 0
    %2394 = vmatpush1.bf16.msra.mxu0 0
    %2395 = vmatprep.subr.bf16.mxu0 0
    %2396 = vmatpush1.bf16.msra.mxu0 0
    %2397 = vmatprep.subr.bf16.mxu0 0
    %2398 = vmatpush1.bf16.msra.mxu0 0
    %2399 = vmatprep.subr.bf16.mxu0 0
    %2400 = vmatpush1.bf16.msra.mxu0 0
    %2401 = vmatprep.subr.bf16.mxu0 0
    %2402 = vmatpush1.bf16.msra.mxu0 0
    %2403 = vmatprep.subr.bf16.mxu0 0
    %2404 = vmatpush1.bf16.msra.mxu0 0
    %2405 = vmatprep.subr.bf16.mxu0 0
    %2406 = vmatpush1.bf16.msra.mxu0 0
    %2407 = vmatprep.subr.bf16.mxu0 0
    %2408 = vmatpush1.bf16.msra.mxu0 %v2391
    %2409 = vmatprep.subr.bf16.mxu0 0
    %2410 = vmatpush2.bf16.msra.mxu0 0
    %2411 = vmatprep.subr.bf16.mxu0 0
    %2412 = vmatpush2.bf16.msra.mxu0 0
    %2413 = vmatprep.subr.bf16.mxu0 0
    %2414 = vmatpush2.bf16.msra.mxu0 0
    %2415 = vmatprep.subr.bf16.mxu0 0
    %2416 = vmatpush2.bf16.msra.mxu0 0
    %2417 = vmatprep.subr.bf16.mxu0 0
    %2418 = vmatpush2.bf16.msra.mxu0 0
    %2419 = vmatprep.subr.bf16.mxu0 0
    %2420 = vmatpush2.bf16.msra.mxu0 0
    %2421 = vmatprep.subr.bf16.mxu0 0
    %2422 = vmatpush2.bf16.msra.mxu0 0
    %2423 = vmatprep.subr.bf16.mxu0 0
    %2424 = vmatpush2.bf16.msra.mxu0 0
    %2425 = vmatprep.mubr.bf16.mxu0 0
    %2426 = vmatmul.mubr.bf16.gmra.mxu0 %v2388
    %v2427 = vpop.f32.mrf.mxu0
    %v2428 = vadd.f32 0.0, %v2427
    %v2429 = vpop.f32.mrf.mxu0
    %v2430 = vpop.f32.mrf.mxu0
    %v2431 = vpop.f32.mrf.mxu0
    %2432 = vdwg.mxu0
    %2435 = vrot.lane.b32.xlu0 %v2140, 8
    %v2436 = vpop.permute.xlu0 %2435
    %2437 = vrot.lane.b32.xlu0 %v2332, 8
    %v2438 = vpop.permute.xlu0 %2437
    %2443 = vrot.lane.b32.xlu0 %v2188, 16
    %v2444 = vpop.permute.xlu0 %2443
    %2445 = vrot.lane.b32.xlu0 %v2380, 16
    %v2446 = vpop.permute.xlu0 %2445
    %2451 = vrot.lane.b32.xlu0 %v2236, 24
    %v2452 = vpop.permute.xlu0 %2451
    %2453 = vrot.lane.b32.xlu0 %v2428, 24
    %v2454 = vpop.permute.xlu0 %2453
    %v2457 = vsel %vm217, %v2092, %v2436
    %v2458 = vsel %vm217, %v2284, %v2438
    %v2459 = vsel %vm1132, %v2457, %v2444
    %v2460 = vsel %vm1132, %v2458, %v2446
    %v2461 = vsel %vm1135, %v2459, %v2452
    %v2462 = vsel %vm1135, %v2460, %v2454
    %s2463 = scalar_lea.vmem %s5, 32
    %v2464 = vld [vmem:[%s2463] sm:$0xff]
    %v2465 = vld [vmem:[%s2463 + $0x8] sm:$0xff]
    %v2466 = vld [vmem:[%s2463 + $0x10] sm:$0xff]
    %v2467 = vld [vmem:[%s2463 + $0x18] sm:$0xff]
    %s2468 = scalar_lea.vmem %s6, 1
    %v2469 = vld [vmem:[%s2468] sm:$0x1]
    %v2470 = vpack.c.bf16 %v2462, %v2461
    %v2471 = vpack.c.bf16 %v2465, %v2464
    %v2472 = vpack.c.bf16 %v2467, %v2466
    %v2474 = vlaneseq
    %v2475 = vshrl.u32 %v2474, 7
    %v2476 = vsub.s32 0, %v2475
    %v2477 = vrot.slane %v2469, %v2476
    %v2480 = vsel %vm68, %v2470, 0
    %2482 = vmatprep.subr.bf16.mxu0 0
    %2483 = vmatpush1.bf16.msra.mxu0 0
    %2484 = vmatprep.subr.bf16.mxu0 0
    %2485 = vmatpush1.bf16.msra.mxu0 0
    %2486 = vmatprep.subr.bf16.mxu0 0
    %2487 = vmatpush1.bf16.msra.mxu0 0
    %2488 = vmatprep.subr.bf16.mxu0 0
    %2489 = vmatpush1.bf16.msra.mxu0 0
    %2490 = vmatprep.subr.bf16.mxu0 0
    %2491 = vmatpush1.bf16.msra.mxu0 0
    %2492 = vmatprep.subr.bf16.mxu0 0
    %2493 = vmatpush1.bf16.msra.mxu0 0
    %2494 = vmatprep.subr.bf16.mxu0 0
    %2495 = vmatpush1.bf16.msra.mxu0 %v2472
    %2496 = vmatprep.subr.bf16.mxu0 0
    %2497 = vmatpush1.bf16.msra.mxu0 %v2471
    %2498 = vmatprep.subr.bf16.mxu0 0
    %2499 = vmatpush2.bf16.msra.mxu0 0
    %2500 = vmatprep.subr.bf16.mxu0 0
    %2501 = vmatpush2.bf16.msra.mxu0 0
    %2502 = vmatprep.subr.bf16.mxu0 0
    %2503 = vmatpush2.bf16.msra.mxu0 0
    %2504 = vmatprep.subr.bf16.mxu0 0
    %2505 = vmatpush2.bf16.msra.mxu0 0
    %2506 = vmatprep.subr.bf16.mxu0 0
    %2507 = vmatpush2.bf16.msra.mxu0 0
    %2508 = vmatprep.subr.bf16.mxu0 0
    %2509 = vmatpush2.bf16.msra.mxu0 0
    %2510 = vmatprep.subr.bf16.mxu0 0
    %2511 = vmatpush2.bf16.msra.mxu0 0
    %2512 = vmatprep.subr.bf16.mxu0 0
    %2513 = vmatpush2.bf16.msra.mxu0 0
    %2514 = vmatprep.mubr.bf16.mxu0 0
    %2515 = vmatmul.mubr.bf16.gmra.mxu0 %v2480
    %v2516 = vpop.f32.mrf.mxu0
    %v2517 = vadd.f32 %v2477, %v2516
    %v2518 = vpop.f32.mrf.mxu0
    %v2519 = vpop.f32.mrf.mxu0
    %v2520 = vadd.f32 %v2477, %v2519
    %v2521 = vpop.f32.mrf.mxu0
    %2522 = vdwg.mxu0
    %v2523 = vadd.f32 %v1391, %v2517
    %v2524 = vadd.f32 %v1392, %v2520
    %s2525 = scalar_lea.vmem %s7, 1
    %v2526 = vld [vmem:[%s2525] sm:$0x1]
    %s2527 = scalar_lea.vmem %s8, 1
    %v2528 = vld [vmem:[%s2527] sm:$0x1]
    %v2529 = vsel %vm68, %v2523, 0.0
    %2530 = vadd.xlane.f32.xlu0 %v2529
    %v2531 = vpop.xlane.xlu0 %2530
    %v2532 = vsel %vm68, %v2524, 0.0
    %2533 = vadd.xlane.f32.xlu0 %v2532
    %v2534 = vpop.xlane.xlu0 %2533
    %v2535 = vmul.f32 %v2531, %v75
    %v2536 = vmul.f32 %v2534, %v75
    %v2537 = vsub.f32 %v2523, %v2535
    %v2538 = vsub.f32 %v2524, %v2536
    %v2539 = vmul.f32 %v2537, %v2537
    %v2540 = vmul.f32 %v2538, %v2538
    %v2541 = vsel %vm68, %v2539, 0.0
    %2542 = vadd.xlane.f32.xlu0 %v2541
    %v2543 = vpop.xlane.xlu0 %2542
    %v2544 = vsel %vm68, %v2540, 0.0
    %2545 = vadd.xlane.f32.xlu0 %v2544
    %v2546 = vpop.xlane.xlu0 %2545
    %v2547 = vmul.f32 %v2543, %v75
    %v2548 = vmul.f32 %v2546, %v75
    %v2549 = vadd.f32 %v2547, 1e-05
    %v2550 = vadd.f32 %v2548, 1e-05
    %v2551 = vrsqrt.pop %v2549
    %v2552 = vrsqrt.pop %v2550
    %v2553 = vmul.f32 %v2537, %v2551
    %v2554 = vmul.f32 %v2538, %v2552
    %v2556 = vlaneseq
    %v2557 = vshrl.u32 %v2556, 7
    %v2558 = vsub.s32 0, %v2557
    %v2559 = vrot.slane %v2526, %v2558
    %v2561 = vmul.f32 %v2553, %v2559
    %v2562 = vmul.f32 %v2554, %v2559
    %v2564 = vlaneseq
    %v2565 = vshrl.u32 %v2564, 7
    %v2566 = vsub.s32 0, %v2565
    %v2567 = vrot.slane %v2528, %v2566
    %v2569 = vadd.f32 %v2561, %v2567
    %v2570 = vadd.f32 %v2562, %v2567
    %s2571 = scalar_lea.vmem %s9, 32
    %v2572 = vld [vmem:[%s2571] sm:$0xff]
    %v2573 = vld [vmem:[%s2571 + $0x8] sm:$0xff]
    %v2574 = vld [vmem:[%s2571 + $0x10] sm:$0xff]
    %v2575 = vld [vmem:[%s2571 + $0x18] sm:$0xff]
    %s2576 = scalar_lea.vmem %s10, 1
    %v2577 = vld [vmem:[%s2576] sm:$0x1]
    %v2578 = vpack.c.bf16 %v2570, %v2569
    %v2579 = vpack.c.bf16 %v2573, %v2572
    %v2580 = vpack.c.bf16 %v2575, %v2574
    %v2582 = vlaneseq
    %v2583 = vshrl.u32 %v2582, 7
    %v2584 = vsub.s32 0, %v2583
    %v2585 = vrot.slane %v2577, %v2584
    %v2588 = vsel %vm68, %v2578, 0
    %2590 = vmatprep.subr.bf16.mxu0 0
    %2591 = vmatpush1.bf16.msra.mxu0 0
    %2592 = vmatprep.subr.bf16.mxu0 0
    %2593 = vmatpush1.bf16.msra.mxu0 0
    %2594 = vmatprep.subr.bf16.mxu0 0
    %2595 = vmatpush1.bf16.msra.mxu0 0
    %2596 = vmatprep.subr.bf16.mxu0 0
    %2597 = vmatpush1.bf16.msra.mxu0 0
    %2598 = vmatprep.subr.bf16.mxu0 0
    %2599 = vmatpush1.bf16.msra.mxu0 0
    %2600 = vmatprep.subr.bf16.mxu0 0
    %2601 = vmatpush1.bf16.msra.mxu0 0
    %2602 = vmatprep.subr.bf16.mxu0 0
    %2603 = vmatpush1.bf16.msra.mxu0 %v2580
    %2604 = vmatprep.subr.bf16.mxu0 0
    %2605 = vmatpush1.bf16.msra.mxu0 %v2579
    %2606 = vmatprep.subr.bf16.mxu0 0
    %2607 = vmatpush2.bf16.msra.mxu0 0
    %2608 = vmatprep.subr.bf16.mxu0 0
    %2609 = vmatpush2.bf16.msra.mxu0 0
    %2610 = vmatprep.subr.bf16.mxu0 0
    %2611 = vmatpush2.bf16.msra.mxu0 0
    %2612 = vmatprep.subr.bf16.mxu0 0
    %2613 = vmatpush2.bf16.msra.mxu0 0
    %2614 = vmatprep.subr.bf16.mxu0 0
    %2615 = vmatpush2.bf16.msra.mxu0 0
    %2616 = vmatprep.subr.bf16.mxu0 0
    %2617 = vmatpush2.bf16.msra.mxu0 0
    %2618 = vmatprep.subr.bf16.mxu0 0
    %2619 = vmatpush2.bf16.msra.mxu0 0
    %2620 = vmatprep.subr.bf16.mxu0 0
    %2621 = vmatpush2.bf16.msra.mxu0 0
    %2622 = vmatprep.mubr.bf16.mxu0 0
    %2623 = vmatmul.mubr.bf16.gmra.mxu0 %v2588
    %v2624 = vpop.f32.mrf.mxu0
    %v2625 = vadd.f32 %v2585, %v2624
    %v2626 = vpop.f32.mrf.mxu0
    %v2627 = vpop.f32.mrf.mxu0
    %v2628 = vadd.f32 %v2585, %v2627
    %v2629 = vpop.f32.mrf.mxu0
    %2630 = vdwg.mxu0
    %v2631 = vmul.f32 %v2625, 0.5
    %v2632 = vmul.f32 %v2628, 0.5
    %v2633 = vmul.f32 %v2625, 0.044715
    %v2634 = vmul.f32 %v2628, 0.044715
    %v2635 = vmul.f32 %v2633, %v2625
    %v2636 = vmul.f32 %v2634, %v2628
    %v2637 = vmul.f32 %v2635, %v2625
    %v2638 = vmul.f32 %v2636, %v2628
    %v2639 = vadd.f32 %v2625, %v2637
    %v2640 = vadd.f32 %v2628, %v2638
    %v2641 = vmul.f32 %v2639, 0.7978846
    %v2642 = vmul.f32 %v2640, 0.7978846
    %v2643 = vtanh.pop %v2641
    %v2644 = vtanh.pop %v2642
    %v2645 = vadd.f32 %v2643, 1.0
    %v2646 = vadd.f32 %v2644, 1.0
    %v2647 = vmul.f32 %v2631, %v2645
    %v2648 = vmul.f32 %v2632, %v2646
    %s2649 = scalar_lea.vmem %s11, 128
    %v2650 = vld [vmem:[%s2649] sm:$0xff]
    %v2651 = vld [vmem:[%s2649 + $0x8] sm:$0xff]
    %v2652 = vld [vmem:[%s2649 + $0x10] sm:$0xff]
    %v2653 = vld [vmem:[%s2649 + $0x18] sm:$0xff]
    %v2654 = vld [vmem:[%s2649 + $0x20] sm:$0xff]
    %v2655 = vld [vmem:[%s2649 + $0x28] sm:$0xff]
    %v2656 = vld [vmem:[%s2649 + $0x30] sm:$0xff]
    %v2657 = vld [vmem:[%s2649 + $0x38] sm:$0xff]
    %v2658 = vld [vmem:[%s2649 + $0x40] sm:$0xff]
    %v2659 = vld [vmem:[%s2649 + $0x48] sm:$0xff]
    %v2660 = vld [vmem:[%s2649 + $0x50] sm:$0xff]
    %v2661 = vld [vmem:[%s2649 + $0x58] sm:$0xff]
    %v2662 = vld [vmem:[%s2649 + $0x60] sm:$0xff]
    %v2663 = vld [vmem:[%s2649 + $0x68] sm:$0xff]
    %v2664 = vld [vmem:[%s2649 + $0x70] sm:$0xff]
    %v2665 = vld [vmem:[%s2649 + $0x78] sm:$0xff]
    %s2666 = scalar_lea.vmem %s12, 1
    %v2667 = vld [vmem:[%s2666] sm:$0x1]
    %v2668 = vpack.c.bf16 %v2648, %v2647
    %v2669 = vpack.c.bf16 %v2651, %v2650
    %v2670 = vpack.c.bf16 %v2653, %v2652
    %v2671 = vpack.c.bf16 %v2655, %v2654
    %v2672 = vpack.c.bf16 %v2657, %v2656
    %v2673 = vpack.c.bf16 %v2659, %v2658
    %v2674 = vpack.c.bf16 %v2661, %v2660
    %v2675 = vpack.c.bf16 %v2663, %v2662
    %v2676 = vpack.c.bf16 %v2665, %v2664
    %v2678 = vlaneseq
    %v2679 = vshrl.u32 %v2678, 7
    %v2680 = vsub.s32 0, %v2679
    %v2681 = vrot.slane %v2667, %v2680
    %2683 = vmatprep.subr.bf16.mxu0 0
    %2684 = vmatpush1.bf16.msra.mxu0 %v2676
    %2685 = vmatprep.subr.bf16.mxu0 0
    %2686 = vmatpush1.bf16.msra.mxu0 %v2675
    %2687 = vmatprep.subr.bf16.mxu0 0
    %2688 = vmatpush1.bf16.msra.mxu0 %v2674
    %2689 = vmatprep.subr.bf16.mxu0 0
    %2690 = vmatpush1.bf16.msra.mxu0 %v2673
    %2691 = vmatprep.subr.bf16.mxu0 0
    %2692 = vmatpush1.bf16.msra.mxu0 %v2672
    %2693 = vmatprep.subr.bf16.mxu0 0
    %2694 = vmatpush1.bf16.msra.mxu0 %v2671
    %2695 = vmatprep.subr.bf16.mxu0 0
    %2696 = vmatpush1.bf16.msra.mxu0 %v2670
    %2697 = vmatprep.subr.bf16.mxu0 0
    %2698 = vmatpush1.bf16.msra.mxu0 %v2669
    %2699 = vmatprep.subr.bf16.mxu0 0
    %2700 = vmatpush2.bf16.msra.mxu0 0
    %2701 = vmatprep.subr.bf16.mxu0 0
    %2702 = vmatpush2.bf16.msra.mxu0 0
    %2703 = vmatprep.subr.bf16.mxu0 0
    %2704 = vmatpush2.bf16.msra.mxu0 0
    %2705 = vmatprep.subr.bf16.mxu0 0
    %2706 = vmatpush2.bf16.msra.mxu0 0
    %2707 = vmatprep.subr.bf16.mxu0 0
    %2708 = vmatpush2.bf16.msra.mxu0 0
    %2709 = vmatprep.subr.bf16.mxu0 0
    %2710 = vmatpush2.bf16.msra.mxu0 0
    %2711 = vmatprep.subr.bf16.mxu0 0
    %2712 = vmatpush2.bf16.msra.mxu0 0
    %2713 = vmatprep.subr.bf16.mxu0 0
    %2714 = vmatpush2.bf16.msra.mxu0 0
    %2715 = vmatprep.mubr.bf16.mxu0 0
    %2716 = vmatmul.mubr.bf16.gmra.mxu0 %v2668
    %v2717 = vpop.f32.mrf.mxu0
    %v2718 = vadd.f32 %v2681, %v2717
    %v2719 = vpop.f32.mrf.mxu0
    %v2720 = vpop.f32.mrf.mxu0
    %v2721 = vadd.f32 %v2681, %v2720
    %v2722 = vpop.f32.mrf.mxu0
    %2723 = vdwg.mxu0
    %v2724 = vadd.f32 %v2523, %v2718
    %v2725 = vadd.f32 %v2524, %v2721
    %v2726 = vld [vmem:[%s13] sm:$0x1]
    %v2727 = vld [vmem:[%s14] sm:$0x1]
    %v2728 = vsel %vm68, %v2724, 0.0
    %2729 = vadd.xlane.f32.xlu0 %v2728
    %v2730 = vpop.xlane.xlu0 %2729
    %v2731 = vsel %vm68, %v2725, 0.0
    %2732 = vadd.xlane.f32.xlu0 %v2731
    %v2733 = vpop.xlane.xlu0 %2732
    %v2734 = vmul.f32 %v2730, %v75
    %v2735 = vmul.f32 %v2733, %v75
    %v2736 = vsub.f32 %v2724, %v2734
    %v2737 = vsub.f32 %v2725, %v2735
    %v2738 = vmul.f32 %v2736, %v2736
    %v2739 = vmul.f32 %v2737, %v2737
    %v2740 = vsel %vm68, %v2738, 0.0
    %2741 = vadd.xlane.f32.xlu0 %v2740
    %v2742 = vpop.xlane.xlu0 %2741
    %v2743 = vsel %vm68, %v2739, 0.0
    %2744 = vadd.xlane.f32.xlu0 %v2743
    %v2745 = vpop.xlane.xlu0 %2744
    %v2746 = vmul.f32 %v2742, %v75
    %v2747 = vmul.f32 %v2745, %v75
    %v2748 = vadd.f32 %v2746, 1e-05
    %v2749 = vadd.f32 %v2747, 1e-05
    %v2750 = vrsqrt.pop %v2748
    %v2751 = vrsqrt.pop %v2749
    %v2752 = vmul.f32 %v2736, %v2750
    %v2753 = vmul.f32 %v2737, %v2751
    %v2755 = vlaneseq
    %v2756 = vshrl.u32 %v2755, 7
    %v2757 = vsub.s32 0, %v2756
    %v2758 = vrot.slane %v2726, %v2757
    %v2760 = vmul.f32 %v2752, %v2758
    %v2761 = vmul.f32 %v2753, %v2758
    %v2763 = vlaneseq
    %v2764 = vshrl.u32 %v2763, 7
    %v2765 = vsub.s32 0, %v2764
    %v2766 = vrot.slane %v2727, %v2765
    %v2768 = vadd.f32 %v2760, %v2766
    %v2769 = vadd.f32 %v2761, %v2766
    %v2770 = vpack.c.bf16 %v2769, %v2768
    %v2771 = vld [vmem:[%s15] sm:$0xff]
    %v2772 = vld [vmem:[%s15 + $0x8] sm:$0xff]
    %v2773 = vld [vmem:[%s15 + $0x10] sm:$0xff]
    %v2774 = vld [vmem:[%s15 + $0x18] sm:$0xff]
    %v2775 = vpack.c.bf16 %v2772, %v2771
    %v2776 = vpack.c.bf16 %v2774, %v2773
    %v2778 = vsel %vm68, %v2770, 0
    %2780 = vmatprep.subr.bf16.mxu0 0
    %2781 = vmatpush1.bf16.msra.mxu0 0
    %2782 = vmatprep.subr.bf16.mxu0 0
    %2783 = vmatpush1.bf16.msra.mxu0 0
    %2784 = vmatprep.subr.bf16.mxu0 0
    %2785 = vmatpush1.bf16.msra.mxu0 0
    %2786 = vmatprep.subr.bf16.mxu0 0
    %2787 = vmatpush1.bf16.msra.mxu0 0
    %2788 = vmatprep.subr.bf16.mxu0 0
    %2789 = vmatpush1.bf16.msra.mxu0 0
    %2790 = vmatprep.subr.bf16.mxu0 0
    %2791 = vmatpush1.bf16.msra.mxu0 0
    %2792 = vmatprep.subr.bf16.mxu0 0
    %2793 = vmatpush1.bf16.msra.mxu0 %v2776
    %2794 = vmatprep.subr.bf16.mxu0 0
    %2795 = vmatpush1.bf16.msra.mxu0 %v2775
    %2796 = vmatprep.subr.bf16.mxu0 0
    %2797 = vmatpush2.bf16.msra.mxu0 0
    %2798 = vmatprep.subr.bf16.mxu0 0
    %2799 = vmatpush2.bf16.msra.mxu0 0
    %2800 = vmatprep.subr.bf16.mxu0 0
    %2801 = vmatpush2.bf16.msra.mxu0 0
    %2802 = vmatprep.subr.bf16.mxu0 0
    %2803 = vmatpush2.bf16.msra.mxu0 0
    %2804 = vmatprep.subr.bf16.mxu0 0
    %2805 = vmatpush2.bf16.msra.mxu0 0
    %2806 = vmatprep.subr.bf16.mxu0 0
    %2807 = vmatpush2.bf16.msra.mxu0 0
    %2808 = vmatprep.subr.bf16.mxu0 0
    %2809 = vmatpush2.bf16.msra.mxu0 0
    %2810 = vmatprep.subr.bf16.mxu0 0
    %2811 = vmatpush2.bf16.msra.mxu0 0
    %2812 = vmatprep.mubr.bf16.mxu0 0
    %2813 = vmatmul.mubr.bf16.gmra.mxu0 %v2778
    %v2814 = vpop.f32.mrf.mxu0
    %v2815 = vadd.f32 0.0, %v2814
    %v2816 = vpop.f32.mrf.mxu0
    %v2817 = vpop.f32.mrf.mxu0
    %v2818 = vadd.f32 0.0, %v2817
    %v2819 = vpop.f32.mrf.mxu0
    %2820 = vdwg.mxu0
    %2821 = vst [vmem:[#allocation2] sm:$0xff] %v2815
    %2822 = vst [vmem:[#allocation2 + $0x8] sm:$0xff] %v2818
    // Predicated region
    $region66: #{tpu_custom_call.1} parent=1 // pred_check
      _
    $region67: #{tpu_custom_call.1} parent=1 // pred_check_branch
      %2824 = sbr.rel (0) target = $region69
    $region68: #{tpu_custom_call.1} parent=1 // pred_region
      %s2826 = ssub.s32 256, 256
      %2827 = vsyncadd [#allocation3], %s2826
      %s2828 = sshll.u32 [#allocation2], 4
      %s2829 = int_to_ptr.vmem [resolvable:$true] %s2828
      %2834 = dma.vmem_to_hbm [thread:$0]  %s2829, 256, %s16, [#allocation3], 128, 128, 8
    $region69: #{tpu_custom_call.1} parent=1 // pred_fallthru
      _
    // Predicated region
    $region70: #{tpu_custom_call.1} parent=1 // pred_check
      _
    $region71: #{tpu_custom_call.1} parent=1 // pred_check_branch
      %2836 = sbr.rel (0) target = $region73
    $region72: #{tpu_custom_call.1} parent=1 // pred_region
      %s2838 = ssub.s32 512, 512
      %2839 = vsyncadd [#allocation5], %s2838
      %s2840 = sshll.u32 [#allocation4], 4
      %s2841 = int_to_ptr.vmem [resolvable:$true] %s2840
      %2846 = dma.vmem_to_hbm [thread:$0]  %s2841, 512, %s17, [#allocation5], 128, 128, 8
    $region73: #{tpu_custom_call.1} parent=1 // pred_fallthru
      _
    // Predicated region
    $region74: #{tpu_custom_call.1} parent=1 // pred_check
      _
    $region75: #{tpu_custom_call.1} parent=1 // pred_check_branch
      %2848 = sbr.rel (0) target = $region77
    $region76: #{tpu_custom_call.1} parent=1 // pred_region
      %s2850 = ssub.s32 512, 512
      %2851 = vsyncadd [#allocation5], %s2850
      %s2852 = sshll.u32 [#allocation6], 4
      %s2853 = int_to_ptr.vmem [resolvable:$true] %s2852
      %2858 = dma.vmem_to_hbm [thread:$0]  %s2853, 512, %s18, [#allocation5], 128, 128, 8
    $region77: #{tpu_custom_call.1} parent=1 // pred_fallthru
      _
    // Predicated region
    $region78: #{tpu_custom_call.1} parent=1 // pred_check
      _
    $region79: #{tpu_custom_call.1} parent=1 // pred_check_branch
      %2860 = sbr.rel (0) target = $region81
    $region80: #{tpu_custom_call.1} parent=1 // pred_region
      %2861 = dma.done [#allocation3], 256
    $region81: #{tpu_custom_call.1} parent=1 // pred_fallthru
      _
    // Predicated region
    $region82: #{tpu_custom_call.1} parent=1 // pred_check
      _
    $region83: #{tpu_custom_call.1} parent=1 // pred_check_branch
      %2863 = sbr.rel (0) target = $region85
    $region84: #{tpu_custom_call.1} parent=1 // pred_region
      %2864 = dma.done [#allocation5], 512
    $region85: #{tpu_custom_call.1} parent=1 // pred_fallthru
      _
    // Predicated region
    $region86: #{tpu_custom_call.1} parent=1 // pred_check
      _
    $region87: #{tpu_custom_call.1} parent=1 // pred_check_branch
      %2866 = sbr.rel (0) target = $region89
    $region88: #{tpu_custom_call.1} parent=1 // pred_region
      %2867 = dma.done [#allocation5], 512
    $region89: #{tpu_custom_call.1} parent=1 // pred_fallthru
      _
    %2868 = vsyncpa [#allocation3], 1
    %2869 = vsyncpa [#allocation5], 1

</llo_original>
